<compile_context>
chip_gen: v6e
topology: v6e:2x2x1
jax: 0.10.0
libtpu: 0.0.40
codegen_flags: <defaults>
</compile_context>

<pallas_src>
import functools

import jax
import jax.numpy as jnp
from jax import lax
from jax.experimental import pallas as pl
from jax.experimental.pallas import tpu as pltpu


def _round_up(v, m):
    return (v + m - 1) // m * m


def _pick_tile_m(m_total):
    # Prefer >=2 grid steps (v7x has 2 TensorCores) with multiple-of-128 tiles.
    for t in (1024, 512, 256, 128):
        if m_total % t == 0 and m_total // t >= 2:
            return t
    return m_total  # fall back to a single full-extent block


def _sigmoid(x):
    return 1.0 / (1.0 + jnp.exp(-x))


# ----------------------------- Pallas kernel -------------------------------


def _convlstm_cell_kernel(p_ref, w_ref, b_ref, c_ref, h_out_ref, c_out_ref):
    """Fused conv-as-matmul + gates + LSTM update for one M-tile.

    p_ref: (tile_m, Kpad)  bf16  im2col patches of cat(x, h_cur)
    w_ref: (Kpad, 4*hid)   bf16  conv weight as a matmul matrix (zero-padded K)
    b_ref: (1, 4*hid)      f32   conv bias
    c_ref: (hid, tile_m)   f32   current cell state (transposed, lane-dense)
    h_out_ref / c_out_ref: (hid, tile_m) f32
    """
    hid = c_ref.shape[0]

    # Conv as one MXU matmul: bf16 inputs, f32 accumulation. Bias fused.
    y = jnp.dot(p_ref[...], w_ref[...], preferred_element_type=jnp.float32)
    y = y + b_ref[...]                       # (tile_m, 4*hid)

    # One XLU transpose -> gates become sublane slices and all elementwise
    # work + stores are lane-dense (last dim = tile_m, multiple of 128).
    yt = y.T                                 # (4*hid, tile_m)
    i_g = _sigmoid(yt[0 * hid:1 * hid, :])
    f_g = _sigmoid(yt[1 * hid:2 * hid, :])
    o_g = _sigmoid(yt[2 * hid:3 * hid, :])
    g_g = jnp.tanh(yt[3 * hid:4 * hid, :])

    c_next = f_g * c_ref[...] + i_g * g_g
    h_out_ref[...] = o_g * jnp.tanh(c_next)
    c_out_ref[...] = c_next


# ----------------------------- Wrapper (per cell) ---------------------------


def _im2col(x_nhwc, kh, kw):
    """(N,H,W,C) -> (N*H*W, kh*kw*C); 'same' padding, stride 1; K ordered (ky,kx,c)."""
    n, h, w, c = x_nhwc.shape
    ph, pw = kh // 2, kw // 2
    xp = jnp.pad(x_nhwc, ((0, 0), (ph, ph), (pw, pw), (0, 0)))
    cols = []
    for ky in range(kh):
        for kx in range(kw):
            cols.append(xp[:, ky:ky + h, kx:kx + w, :])
    patches = jnp.concatenate(cols, axis=-1)
    return patches.reshape(n * h * w, kh * kw * c)


def _prep_cell_params(weight, bias, kh, kw):
    """OIHW conv weight -> (Kpad, 4*hid) bf16 matmul weight + f32 bias row."""
    cout, cin_total = weight.shape[0], weight.shape[1]
    k = kh * kw * cin_total
    kpad = _round_up(k, 128)
    w_mat = jnp.transpose(weight, (2, 3, 1, 0)).reshape(k, cout)   # (ky,kx,cin,cout)
    w_mat = jnp.pad(w_mat, ((0, kpad - k), (0, 0))).astype(jnp.bfloat16)
    b_row = bias.reshape(1, cout).astype(jnp.float32)
    return w_mat, b_row


def convlstm_cell_step(x_nhwc, h_cm, c_cm, w_mat, b_row, hidden_dim, kernel_size):
    """One ConvLSTM_Cell forward.

    x_nhwc: (N, H, W, Cin) f32 layer input
    h_cm, c_cm: (hid, N*H*W) f32 recurrent state (transposed layout)
    Returns (h_next_cm, c_next_cm) in the same (hid, N*H*W) layout.
    """
    n, h, w, _ = x_nhwc.shape
    kh, kw = kernel_size
    m_total = n * h * w
    cout = 4 * hidden_dim
    kpad = w_mat.shape[0]

    # combined = torch.cat([x, h_cur], dim=1), channels-last; bf16 before
    # im2col so the materialized patches intermediate is half the bytes.
    h_nhwc = jnp.transpose(h_cm.reshape(hidden_dim, n, h, w), (1, 2, 3, 0))
    combined = jnp.concatenate([x_nhwc, h_nhwc], axis=-1).astype(jnp.bfloat16)
    patches = _im2col(combined, kh, kw)                               # (M, K) bf16
    patches = jnp.pad(patches, ((0, 0), (0, kpad - patches.shape[1])))

    tile_m = _pick_tile_m(m_total)
    assert m_total % tile_m == 0
    grid = (m_total // tile_m,)

    cost = pl.CostEstimate(
        flops=2 * m_total * kpad * cout,
        transcendentals=5 * m_total * hidden_dim,
        bytes_accessed=(patches.size * 2 + w_mat.size * 2 + b_row.size * 4
                        + 3 * hidden_dim * m_total * 4),
    )

    h_next, c_next = pl.pallas_call(
        _convlstm_cell_kernel,
        out_shape=(jax.ShapeDtypeStruct((hidden_dim, m_total), jnp.float32),
                   jax.ShapeDtypeStruct((hidden_dim, m_total), jnp.float32)),
        grid_spec=pltpu.PrefetchScalarGridSpec(
            num_scalar_prefetch=0,
            grid=grid,
            in_specs=[
                pl.BlockSpec((tile_m, kpad), lambda i: (i, 0)),          # patches
                pl.BlockSpec((kpad, cout), lambda i: (0, 0)),            # weights (resident)
                pl.BlockSpec((1, cout), lambda i: (0, 0)),               # bias (resident)
                pl.BlockSpec((hidden_dim, tile_m), lambda i: (0, i)),    # c_cur
            ],
            out_specs=[
                pl.BlockSpec((hidden_dim, tile_m), lambda i: (0, i)),    # h_next
                pl.BlockSpec((hidden_dim, tile_m), lambda i: (0, i)),    # c_next
            ],
        ),
        compiler_params=pltpu.CompilerParams(
            dimension_semantics=("parallel",)),
        cost_estimate=cost,
    )(patches, w_mat, b_row, c_cm)
    return h_next, c_next


# ----------------------------- ConvLSTM driver ------------------------------


def init_convlstm_params(key, input_dim, hidden_dims, kernel_size):
    """Mimics nn.Conv2d default init for each cell's conv."""
    kh, kw = kernel_size
    params = []
    cur_in = input_dim
    for hid in hidden_dims:
        key, k1, k2 = jax.random.split(key, 3)
        cin_total = cur_in + hid
        bound = (cin_total * kh * kw) ** -0.5
        weight = jax.random.uniform(k1, (4 * hid, cin_total, kh, kw),
                                    minval=-bound, maxval=bound, dtype=jnp.float32)
        bias = jax.random.uniform(k2, (4 * hid,), minval=-bound, maxval=bound,
                                  dtype=jnp.float32)
        params.append((weight, bias))
        cur_in = hid
    return params


def init_hidden(batch, spatial_hw, hidden_dims):
    h, w = spatial_hw
    m_total = batch * h * w
    return [(jnp.zeros((hid, m_total), jnp.float32),
             jnp.zeros((hid, m_total), jnp.float32)) for hid in hidden_dims]


def convlstm_forward(x_nchw, state, prepped_params, hidden_dims, kernel_size):
    """One timestep through the layer stack (mirrors ConvLSTM.forward).

    Returns (new_state, h_list)  ~  PyTorch's ((H, C), H).
    """
    n, _, h, w = x_nchw.shape
    layer_in = jnp.transpose(x_nchw, (0, 2, 3, 1)).astype(jnp.float32)  # NHWC
    new_state, h_list = [], []
    for j, hid in enumerate(hidden_dims):
        w_mat, b_row = prepped_params[j]
        h_cm, c_cm = state[j]
        h_cm, c_cm = convlstm_cell_step(layer_in, h_cm, c_cm, w_mat, b_row,
                                        hid, kernel_size)
        new_state.append((h_cm, c_cm))
        h_list.append(h_cm)
        layer_in = jnp.transpose(h_cm.reshape(hid, n, h, w), (1, 2, 3, 0))  # NHWC
    return new_state, h_list


def _cm_to_nchw(x_cm, batch, h, w):
    hid = x_cm.shape[0]
    return jnp.transpose(x_cm.reshape(hid, batch, h, w), (1, 0, 2, 3))


# ----------------------------- Pure-JAX reference ---------------------------


def _reference_cell(x, h, c, weight, bias, kernel_size):
    kh, kw = kernel_size
    combined = jnp.concatenate([x, h], axis=1)
    # Emulate the kernel's bf16 MXU inputs (f32 accumulation).
    combined = combined.astype(jnp.bfloat16).astype(jnp.float32)
    w = weight.astype(jnp.bfloat16).astype(jnp.float32)
    y = lax.conv_general_dilated(
        combined, w, window_strides=(1, 1),
        padding=((kh // 2, kh // 2), (kw // 2, kw // 2)),
        dimension_numbers=("NCHW", "OIHW", "NCHW"))
    y = y + bias.reshape(1, -1, 1, 1).astype(jnp.float32)
    hid = h.shape[1]
    i = _sigmoid(y[:, 0 * hid:1 * hid])
    f = _sigmoid(y[:, 1 * hid:2 * hid])
    o = _sigmoid(y[:, 2 * hid:3 * hid])
    g = jnp.tanh(y[:, 3 * hid:4 * hid])
    c_next = f * c + i * g
    h_next = o * jnp.tanh(c_next)
    return h_next, c_next


def _reference_forward(x, state, params, hidden_dims, kernel_size):
    new_state = []
    layer_in = x.astype(jnp.float32)
    for j, _ in enumerate(hidden_dims):
        weight, bias = params[j]
        h, c = state[j]
        h, c = _reference_cell(layer_in, h, c, weight, bias, kernel_size)
        new_state.append((h, c))
        layer_in = h
    return new_state


# ----------------------------------- main -----------------------------------

if __name__ == "__main__":
    batch, in_ch, spatial, seq = 2, 4, 16, 8
    hidden_dims = [32, 32]
    kernel_size = (3, 3)

    key = jax.random.PRNGKey(0)
    key, kx = jax.random.split(key)
    xs = jax.random.normal(kx, (seq, batch, in_ch, spatial, spatial),
                           dtype=jnp.float32)
    params = init_convlstm_params(key, in_ch, hidden_dims, kernel_size)
    prepped = [_prep_cell_params(wt, b, *kernel_size) for (wt, b) in params]

    # Jit the per-timestep driver: fuses all host-side layout/im2col ops around
    # the two pallas_calls and removes per-op dispatch overhead.
    step_fn = jax.jit(functools.partial(convlstm_forward,
                                        hidden_dims=tuple(hidden_dims),
                                        kernel_size=kernel_size))

    # first_timestep=True -> zero-initialized hidden state
    state = init_hidden(batch, (spatial, spatial), hidden_dims)
    ref_state = [(jnp.zeros((batch, hid, spatial, spatial), jnp.float32),
                  jnp.zeros((batch, hid, spatial, spatial), jnp.float32))
                 for hid in hidden_dims]

    for t in range(seq):
        state, h_list = step_fn(xs[t], state, prepped)
        ref_state = _reference_forward(xs[t], ref_state, params,
                                       hidden_dims, kernel_size)

    jax.block_until_ready([arr for hc in state for arr in hc])

    for j, hid in enumerate(hidden_dims):
        h_k = _cm_to_nchw(state[j][0], batch, spatial, spatial)
        c_k = _cm_to_nchw(state[j][1], batch, spatial, spatial)
        h_r, c_r = ref_state[j]
        assert h_k.shape == h_r.shape and c_k.shape == c_r.shape
        h_err = float(jnp.abs(h_k - h_r).max())
        c_err = float(jnp.abs(c_k - c_r).max())
        assert jnp.allclose(h_k, h_r, atol=2e-3, rtol=2e-3), (j, h_err)
        assert jnp.allclose(c_k, c_r, atol=2e-3, rtol=2e-3), (j, c_err)

    print("KERNEL_OK")
</pallas_src>

<mosaic_0001>
module attributes {stable_mosaic.version = 11 : i64} {
  func.func @_convlstm_cell_kernel(%arg0: i32, %arg1: memref<256x384xbf16, #tpu.memory_space<vmem>>, %arg2: memref<384x128xbf16, #tpu.memory_space<vmem>>, %arg3: memref<1x128xf32, #tpu.memory_space<vmem>>, %arg4: memref<32x256xf32, #tpu.memory_space<vmem>>, %arg5: memref<32x256xf32, #tpu.memory_space<vmem>>, %arg6: memref<32x256xf32, #tpu.memory_space<vmem>>) attributes {dimension_semantics = [#tpu.dimension_semantics<parallel>], iteration_bounds = array<i64: 2>, scalar_prefetch = 0 : i64, scratch_operands = 0 : i64, tpu.core_type = #tpu.core_type<tc>, window_params = [{transform_indices = @transform_0, window_bounds = array<i64: 256, 384>}, {pipeline_mode = #tpu.pipeline_mode<synchronous>, transform_indices = @transform_1, window_bounds = array<i64: 384, 128>}, {pipeline_mode = #tpu.pipeline_mode<synchronous>, transform_indices = @transform_2, window_bounds = array<i64: 1, 128>}, {transform_indices = @transform_3, window_bounds = array<i64: 32, 256>}, {transform_indices = @transform_4, window_bounds = array<i64: 32, 256>}, {transform_indices = @transform_5, window_bounds = array<i64: 32, 256>}]} {
    %c0 = arith.constant 0 : index
    %c0_0 = arith.constant 0 : index
    %0 = vector.load %arg1[%c0, %c0_0] : memref<256x384xbf16, #tpu.memory_space<vmem>>, vector<256x384xbf16>
    %c0_1 = arith.constant 0 : index
    %c0_2 = arith.constant 0 : index
    %1 = vector.load %arg2[%c0_1, %c0_2] : memref<384x128xbf16, #tpu.memory_space<vmem>>, vector<384x128xbf16>
    %cst = arith.constant dense<0.000000e+00> : vector<256x128xf32>
    %2 = tpu.matmul %0, %1, %cst {dimension_numbers = #tpu.dot_dimension_numbers<[1], [0], [0], [1], [0, 0, 1, 1], [], []>} : vector<256x384xbf16>, vector<384x128xbf16>, vector<256x128xf32> -> vector<256x128xf32>
    %c0_3 = arith.constant 0 : index
    %c0_4 = arith.constant 0 : index
    %3 = vector.load %arg3[%c0_3, %c0_4] : memref<1x128xf32, #tpu.memory_space<vmem>>, vector<1x128xf32>
    %4 = vector.broadcast %3 : vector<1x128xf32> to vector<256x128xf32>
    %5 = arith.addf %2, %4 : vector<256x128xf32>
    %6 = tpu.transpose %5, [1, 0] : vector<256x128xf32> -> vector<128x256xf32>
    %7 = vector.extract_strided_slice %6 {offsets = [0, 0], sizes = [32, 256], strides = [1, 1]} : vector<128x256xf32> to vector<32x256xf32>
    %cst_5 = arith.constant 0.000000e+00 : f32
    %8 = vector.broadcast %cst_5 : f32 to vector<32x256xf32>
    %9 = arith.subf %8, %7 : vector<32x256xf32>
    %10 = math.exp %9 : vector<32x256xf32>
    %cst_6 = arith.constant 1.000000e+00 : f32
    %11 = vector.broadcast %cst_6 : f32 to vector<32x256xf32>
    %12 = arith.addf %11, %10 : vector<32x256xf32>
    %cst_7 = arith.constant 1.000000e+00 : f32
    %13 = vector.broadcast %cst_7 : f32 to vector<32x256xf32>
    %14 = arith.divf %13, %12 : vector<32x256xf32>
    %15 = vector.extract_strided_slice %6 {offsets = [32, 0], sizes = [32, 256], strides = [1, 1]} : vector<128x256xf32> to vector<32x256xf32>
    %cst_8 = arith.constant 0.000000e+00 : f32
    %16 = vector.broadcast %cst_8 : f32 to vector<32x256xf32>
    %17 = arith.subf %16, %15 : vector<32x256xf32>
    %18 = math.exp %17 : vector<32x256xf32>
    %cst_9 = arith.constant 1.000000e+00 : f32
    %19 = vector.broadcast %cst_9 : f32 to vector<32x256xf32>
    %20 = arith.addf %19, %18 : vector<32x256xf32>
    %cst_10 = arith.constant 1.000000e+00 : f32
    %21 = vector.broadcast %cst_10 : f32 to vector<32x256xf32>
    %22 = arith.divf %21, %20 : vector<32x256xf32>
    %23 = vector.extract_strided_slice %6 {offsets = [64, 0], sizes = [32, 256], strides = [1, 1]} : vector<128x256xf32> to vector<32x256xf32>
    %cst_11 = arith.constant 0.000000e+00 : f32
    %24 = vector.broadcast %cst_11 : f32 to vector<32x256xf32>
    %25 = arith.subf %24, %23 : vector<32x256xf32>
    %26 = math.exp %25 : vector<32x256xf32>
    %cst_12 = arith.constant 1.000000e+00 : f32
    %27 = vector.broadcast %cst_12 : f32 to vector<32x256xf32>
    %28 = arith.addf %27, %26 : vector<32x256xf32>
    %cst_13 = arith.constant 1.000000e+00 : f32
    %29 = vector.broadcast %cst_13 : f32 to vector<32x256xf32>
    %30 = arith.divf %29, %28 : vector<32x256xf32>
    %31 = vector.extract_strided_slice %6 {offsets = [96, 0], sizes = [32, 256], strides = [1, 1]} : vector<128x256xf32> to vector<32x256xf32>
    %32 = math.tanh %31 : vector<32x256xf32>
    %c0_14 = arith.constant 0 : index
    %c0_15 = arith.constant 0 : index
    %33 = vector.load %arg4[%c0_14, %c0_15] : memref<32x256xf32, #tpu.memory_space<vmem>>, vector<32x256xf32>
    %34 = arith.mulf %22, %33 : vector<32x256xf32>
    %35 = arith.mulf %14, %32 : vector<32x256xf32>
    %36 = arith.addf %34, %35 : vector<32x256xf32>
    %37 = math.tanh %36 : vector<32x256xf32>
    %38 = arith.mulf %30, %37 : vector<32x256xf32>
    %c0_16 = arith.constant 0 : index
    %c0_17 = arith.constant 0 : index
    %39 = vector.load %arg5[%c0_16, %c0_17] : memref<32x256xf32, #tpu.memory_space<vmem>>, vector<32x256xf32>
    tpu.vector_store %arg5[%c0_16, %c0_17], %38 {strides = array<i32>} : memref<32x256xf32, #tpu.memory_space<vmem>>, vector<32x256xf32>,
    %c0_18 = arith.constant 0 : index
    %c0_19 = arith.constant 0 : index
    %40 = vector.load %arg6[%c0_18, %c0_19] : memref<32x256xf32, #tpu.memory_space<vmem>>, vector<32x256xf32>
    tpu.vector_store %arg6[%c0_18, %c0_19], %36 {strides = array<i32>} : memref<32x256xf32, #tpu.memory_space<vmem>>, vector<32x256xf32>,
    return
  }
  func.func @transform_0(%arg0: i32) -> (i32, i32) {
    %c0_i32 = arith.constant 0 : i32
    %c0_i32_0 = arith.constant 0 : i32
    return %arg0, %c0_i32 : i32, i32
  }
  func.func @transform_1(%arg0: i32) -> (i32, i32) {
    %c0_i32 = arith.constant 0 : i32
    %c0_i32_0 = arith.constant 0 : i32
    %c0_i32_1 = arith.constant 0 : i32
    return %c0_i32, %c0_i32_0 : i32, i32
  }
  func.func @transform_2(%arg0: i32) -> (i32, i32) {
    %c0_i32 = arith.constant 0 : i32
    %c0_i32_0 = arith.constant 0 : i32
    %c0_i32_1 = arith.constant 0 : i32
    return %c0_i32, %c0_i32_0 : i32, i32
  }
  func.func @transform_3(%arg0: i32) -> (i32, i32) {
    %c0_i32 = arith.constant 0 : i32
    %c0_i32_0 = arith.constant 0 : i32
    return %c0_i32, %arg0 : i32, i32
  }
  func.func @transform_4(%arg0: i32) -> (i32, i32) {
    %c0_i32 = arith.constant 0 : i32
    %c0_i32_0 = arith.constant 0 : i32
    return %c0_i32, %arg0 : i32, i32
  }
  func.func @transform_5(%arg0: i32) -> (i32, i32) {
    %c0_i32 = arith.constant 0 : i32
    %c0_i32_0 = arith.constant 0 : i32
    return %c0_i32, %arg0 : i32, i32
  }
}

module attributes {stable_mosaic.version = 11 : i64} {
  func.func @_convlstm_cell_kernel(%arg0: i32, %arg1: memref<256x640xbf16, #tpu.memory_space<vmem>>, %arg2: memref<640x128xbf16, #tpu.memory_space<vmem>>, %arg3: memref<1x128xf32, #tpu.memory_space<vmem>>, %arg4: memref<32x256xf32, #tpu.memory_space<vmem>>, %arg5: memref<32x256xf32, #tpu.memory_space<vmem>>, %arg6: memref<32x256xf32, #tpu.memory_space<vmem>>) attributes {dimension_semantics = [#tpu.dimension_semantics<parallel>], iteration_bounds = array<i64: 2>, scalar_prefetch = 0 : i64, scratch_operands = 0 : i64, tpu.core_type = #tpu.core_type<tc>, window_params = [{transform_indices = @transform_0, window_bounds = array<i64: 256, 640>}, {pipeline_mode = #tpu.pipeline_mode<synchronous>, transform_indices = @transform_1, window_bounds = array<i64: 640, 128>}, {pipeline_mode = #tpu.pipeline_mode<synchronous>, transform_indices = @transform_2, window_bounds = array<i64: 1, 128>}, {transform_indices = @transform_3, window_bounds = array<i64: 32, 256>}, {transform_indices = @transform_4, window_bounds = array<i64: 32, 256>}, {transform_indices = @transform_5, window_bounds = array<i64: 32, 256>}]} {
    %c0 = arith.constant 0 : index
    %c0_0 = arith.constant 0 : index
    %0 = vector.load %arg1[%c0, %c0_0] : memref<256x640xbf16, #tpu.memory_space<vmem>>, vector<256x640xbf16>
    %c0_1 = arith.constant 0 : index
    %c0_2 = arith.constant 0 : index
    %1 = vector.load %arg2[%c0_1, %c0_2] : memref<640x128xbf16, #tpu.memory_space<vmem>>, vector<640x128xbf16>
    %cst = arith.constant dense<0.000000e+00> : vector<256x128xf32>
    %2 = tpu.matmul %0, %1, %cst {dimension_numbers = #tpu.dot_dimension_numbers<[1], [0], [0], [1], [0, 0, 1, 1], [], []>} : vector<256x640xbf16>, vector<640x128xbf16>, vector<256x128xf32> -> vector<256x128xf32>
    %c0_3 = arith.constant 0 : index
    %c0_4 = arith.constant 0 : index
    %3 = vector.load %arg3[%c0_3, %c0_4] : memref<1x128xf32, #tpu.memory_space<vmem>>, vector<1x128xf32>
    %4 = vector.broadcast %3 : vector<1x128xf32> to vector<256x128xf32>
    %5 = arith.addf %2, %4 : vector<256x128xf32>
    %6 = tpu.transpose %5, [1, 0] : vector<256x128xf32> -> vector<128x256xf32>
    %7 = vector.extract_strided_slice %6 {offsets = [0, 0], sizes = [32, 256], strides = [1, 1]} : vector<128x256xf32> to vector<32x256xf32>
    %cst_5 = arith.constant 0.000000e+00 : f32
    %8 = vector.broadcast %cst_5 : f32 to vector<32x256xf32>
    %9 = arith.subf %8, %7 : vector<32x256xf32>
    %10 = math.exp %9 : vector<32x256xf32>
    %cst_6 = arith.constant 1.000000e+00 : f32
    %11 = vector.broadcast %cst_6 : f32 to vector<32x256xf32>
    %12 = arith.addf %11, %10 : vector<32x256xf32>
    %cst_7 = arith.constant 1.000000e+00 : f32
    %13 = vector.broadcast %cst_7 : f32 to vector<32x256xf32>
    %14 = arith.divf %13, %12 : vector<32x256xf32>
    %15 = vector.extract_strided_slice %6 {offsets = [32, 0], sizes = [32, 256], strides = [1, 1]} : vector<128x256xf32> to vector<32x256xf32>
    %cst_8 = arith.constant 0.000000e+00 : f32
    %16 = vector.broadcast %cst_8 : f32 to vector<32x256xf32>
    %17 = arith.subf %16, %15 : vector<32x256xf32>
    %18 = math.exp %17 : vector<32x256xf32>
    %cst_9 = arith.constant 1.000000e+00 : f32
    %19 = vector.broadcast %cst_9 : f32 to vector<32x256xf32>
    %20 = arith.addf %19, %18 : vector<32x256xf32>
    %cst_10 = arith.constant 1.000000e+00 : f32
    %21 = vector.broadcast %cst_10 : f32 to vector<32x256xf32>
    %22 = arith.divf %21, %20 : vector<32x256xf32>
    %23 = vector.extract_strided_slice %6 {offsets = [64, 0], sizes = [32, 256], strides = [1, 1]} : vector<128x256xf32> to vector<32x256xf32>
    %cst_11 = arith.constant 0.000000e+00 : f32
    %24 = vector.broadcast %cst_11 : f32 to vector<32x256xf32>
    %25 = arith.subf %24, %23 : vector<32x256xf32>
    %26 = math.exp %25 : vector<32x256xf32>
    %cst_12 = arith.constant 1.000000e+00 : f32
    %27 = vector.broadcast %cst_12 : f32 to vector<32x256xf32>
    %28 = arith.addf %27, %26 : vector<32x256xf32>
    %cst_13 = arith.constant 1.000000e+00 : f32
    %29 = vector.broadcast %cst_13 : f32 to vector<32x256xf32>
    %30 = arith.divf %29, %28 : vector<32x256xf32>
    %31 = vector.extract_strided_slice %6 {offsets = [96, 0], sizes = [32, 256], strides = [1, 1]} : vector<128x256xf32> to vector<32x256xf32>
    %32 = math.tanh %31 : vector<32x256xf32>
    %c0_14 = arith.constant 0 : index
    %c0_15 = arith.constant 0 : index
    %33 = vector.load %arg4[%c0_14, %c0_15] : memref<32x256xf32, #tpu.memory_space<vmem>>, vector<32x256xf32>
    %34 = arith.mulf %22, %33 : vector<32x256xf32>
    %35 = arith.mulf %14, %32 : vector<32x256xf32>
    %36 = arith.addf %34, %35 : vector<32x256xf32>
    %37 = math.tanh %36 : vector<32x256xf32>
    %38 = arith.mulf %30, %37 : vector<32x256xf32>
    %c0_16 = arith.constant 0 : index
    %c0_17 = arith.constant 0 : index
    %39 = vector.load %arg5[%c0_16, %c0_17] : memref<32x256xf32, #tpu.memory_space<vmem>>, vector<32x256xf32>
    tpu.vector_store %arg5[%c0_16, %c0_17], %38 {strides = array<i32>} : memref<32x256xf32, #tpu.memory_space<vmem>>, vector<32x256xf32>,
    %c0_18 = arith.constant 0 : index
    %c0_19 = arith.constant 0 : index
    %40 = vector.load %arg6[%c0_18, %c0_19] : memref<32x256xf32, #tpu.memory_space<vmem>>, vector<32x256xf32>
    tpu.vector_store %arg6[%c0_18, %c0_19], %36 {strides = array<i32>} : memref<32x256xf32, #tpu.memory_space<vmem>>, vector<32x256xf32>,
    return
  }
  func.func @transform_0(%arg0: i32) -> (i32, i32) {
    %c0_i32 = arith.constant 0 : i32
    %c0_i32_0 = arith.constant 0 : i32
    return %arg0, %c0_i32 : i32, i32
  }
  func.func @transform_1(%arg0: i32) -> (i32, i32) {
    %c0_i32 = arith.constant 0 : i32
    %c0_i32_0 = arith.constant 0 : i32
    %c0_i32_1 = arith.constant 0 : i32
    return %c0_i32, %c0_i32_0 : i32, i32
  }
  func.func @transform_2(%arg0: i32) -> (i32, i32) {
    %c0_i32 = arith.constant 0 : i32
    %c0_i32_0 = arith.constant 0 : i32
    %c0_i32_1 = arith.constant 0 : i32
    return %c0_i32, %c0_i32_0 : i32, i32
  }
  func.func @transform_3(%arg0: i32) -> (i32, i32) {
    %c0_i32 = arith.constant 0 : i32
    %c0_i32_0 = arith.constant 0 : i32
    return %c0_i32, %arg0 : i32, i32
  }
  func.func @transform_4(%arg0: i32) -> (i32, i32) {
    %c0_i32 = arith.constant 0 : i32
    %c0_i32_0 = arith.constant 0 : i32
    return %c0_i32, %arg0 : i32, i32
  }
  func.func @transform_5(%arg0: i32) -> (i32, i32) {
    %c0_i32 = arith.constant 0 : i32
    %c0_i32_0 = arith.constant 0 : i32
    return %c0_i32, %arg0 : i32, i32
  }
}

</mosaic_0001>

<llo_original>
// kernel: convlstm_forward.2
$region0: #{convlstm_forward.2}
  #allocation0 [shape = 'u32[]', space=smem, size = 0x4, offset = 0x4, fixed_abs, tag = 'smem constant byte address 0x4 - core index']
  #allocation1 [shape = 'u32[144,128]{1,0:T(1,128)}', space=vmem, size = 0x12000, scoped, tag = 'internal scratch']
  %s0 = inlined_call_operand.vmem [shape: bf16[512,384], index: 0, kind: input, shape index: {}]
  %s1 = inlined_call_operand.vmem [shape: bf16[384,128], index: 1, kind: input, shape index: {}]
  %s2 = inlined_call_operand.vmem [shape: f32[1,128], index: 2, kind: input, shape index: {}]
  %s3 = inlined_call_operand.vmem [shape: f32[32,512], index: 3, kind: input, shape index: {}]
  %s4 = inlined_call_operand.vmem [shape: f32[32,512], index: 4, kind: output, shape index: {0}]
  %s5 = inlined_call_operand.hbm [shape: f32[32,512], index: 5, kind: output, shape index: {1}]
  %6 = xla_tuple %s4, %s5
  %s7 = sld [smem:[#allocation0]]
  $region99: #{convlstm_forward.2} parent=0
    _
  %s9 = ssub.s32 1, %s7
  %s10 = scalar_select 0, %s9, %s7
  $region1: #{convlstm_forward.2} parent=0
    #allocation2 [shape = 'u8[65536]{0}', space=vmem, size = 0x10000, scoped, tag = 'input window, operand 3']
    #allocation3 [shape = 'u8[65536]{0}', space=vmem, size = 0x10000, scoped, tag = 'output window, operand 0']
    #allocation4 [shape = 'u8[65536]{0}', space=vmem, size = 0x10000, scoped, tag = 'output window, operand 1']
    #allocation5 [shape = 's32[2]{0}', space=sflag, size = 0x8, scoped, tag = 'scoped memory for convlstm_forward.2']
    %11 = vsyncpa [#allocation5], 0
    %s12 = scalar_lea.sflag [#allocation5], 1
    %13 = vsyncpa %s12, 0
    loop: start=0, step=1, limit=4
    $region2: #{convlstm_forward.2} parent=1 // loop_pre_header
      _
    $region3: #{convlstm_forward.2} parent=1 // loop_header
      %s15 = sphi 0, %s19
      %p16 = scmp.ge.s32.totalorder %s15, 4
      %s25 = sphi 0, %s27
      %s28 = sphi 0, %s25
      %s29 = sphi 0, %s28
      %s45 = sphi 0, %s29
      %s49 = sphi 0, %s49
      %s51 = sphi 0, %s49
      %s52 = sphi 0, %s51
      %s66 = sphi 0, %s52
      %s70 = sphi 0, %s70
      %s72 = sphi 0, %s70
      %s73 = sphi 0, %s72
      %s87 = sphi 0, %s73
      %s93 = sphi 0, %s95
      %s96 = sphi 0, %s93
      %s97 = sphi 0, %s96
      %s113 = sphi 0, %s97
      %s119 = sphi 0, %s121
      %s122 = sphi 0, %s119
      %s123 = sphi 0, %s122
      %s139 = sphi 0, %s123
      %s145 = sphi 0, %s147
      %s148 = sphi 0, %s145
      %s149 = sphi 0, %s148
      %s165 = sphi 0, %s149
    $region4: #{convlstm_forward.2} parent=1 // loop_header_branch
      %18 = sbr.rel (%p16) target = $region8
    $region5: #{convlstm_forward.2} parent=1 // loop_body
      %s20 = ssub.s32 %s15, 1
      %s21 = ssub.s32 %s15, 2
      %s22 = sadd.s32 %s15, 1
      %s23 = ssub.s32 %s15, %s22
      %p24 = scmp.eq.s32.totalorder %s23, 0
      %s26 = sadd.s32 %s25, 1
      %s27 = scalar_select %p24, %s25, %s26
      %p30 = pneg %p24
      %p31 = scmp.eq.s32.totalorder %s15, 1
      %p32 = por %p30, %p31
      %p33 = scmp.ne.s32.totalorder %s25, %s28
      %p34 = scmp.eq.s32.totalorder %s15, 0
      %p35 = por %p33, %p34
      %p36 = scmp.ne.s32.totalorder %s25, %s28
      %p37 = scmp.eq.s32.totalorder %s20, 1
      %p38 = por %p36, %p37
      %p39 = scmp.ne.s32.totalorder %s28, %s29
      %p40 = scmp.eq.s32.totalorder %s20, 0
      %p41 = por %p39, %p40
      %p42 = scmp.ne.s32.totalorder %s28, %s29
      %p43 = scmp.eq.s32.totalorder %s21, 1
      %p44 = por %p42, %p43
      %p46 = scmp.ne.s32.totalorder %s29, %s45
      %p47 = scmp.eq.s32.totalorder %s21, 0
      %p48 = por %p46, %p47
      %s50 = sadd.s32 %s49, 1
      %p53 = scmp.eq.s32.totalorder %s15, 1
      %p54 = scmp.ne.s32.totalorder %s49, %s51
      %p55 = scmp.eq.s32.totalorder %s15, 0
      %p56 = por %p54, %p55
      %p57 = scmp.ne.s32.totalorder %s49, %s51
      %p58 = scmp.eq.s32.totalorder %s20, 1
      %p59 = por %p57, %p58
      %p60 = scmp.ne.s32.totalorder %s51, %s52
      %p61 = scmp.eq.s32.totalorder %s20, 0
      %p62 = por %p60, %p61
      %p63 = scmp.ne.s32.totalorder %s51, %s52
      %p64 = scmp.eq.s32.totalorder %s21, 1
      %p65 = por %p63, %p64
      %p67 = scmp.ne.s32.totalorder %s52, %s66
      %p68 = scmp.eq.s32.totalorder %s21, 0
      %p69 = por %p67, %p68
      %s71 = sadd.s32 %s70, 1
      %p74 = scmp.eq.s32.totalorder %s15, 1
      %p75 = scmp.ne.s32.totalorder %s70, %s72
      %p76 = scmp.eq.s32.totalorder %s15, 0
      %p77 = por %p75, %p76
      %p78 = scmp.ne.s32.totalorder %s70, %s72
      %p79 = scmp.eq.s32.totalorder %s20, 1
      %p80 = por %p78, %p79
      %p81 = scmp.ne.s32.totalorder %s72, %s73
      %p82 = scmp.eq.s32.totalorder %s20, 0
      %p83 = por %p81, %p82
      %p84 = scmp.ne.s32.totalorder %s72, %s73
      %p85 = scmp.eq.s32.totalorder %s21, 1
      %p86 = por %p84, %p85
      %p88 = scmp.ne.s32.totalorder %s73, %s87
      %p89 = scmp.eq.s32.totalorder %s21, 0
      %p90 = por %p88, %p89
      %s91 = ssub.s32 %s15, %s22
      %p92 = scmp.eq.s32.totalorder %s91, 0
      %s94 = sadd.s32 %s93, 1
      %s95 = scalar_select %p92, %s93, %s94
      %p98 = pneg %p92
      %p99 = scmp.eq.s32.totalorder %s15, 1
      %p100 = por %p98, %p99
      %p101 = scmp.ne.s32.totalorder %s93, %s96
      %p102 = scmp.eq.s32.totalorder %s15, 0
      %p103 = por %p101, %p102
      %p104 = scmp.ne.s32.totalorder %s93, %s96
      %p105 = scmp.eq.s32.totalorder %s20, 1
      %p106 = por %p104, %p105
      %p107 = scmp.ne.s32.totalorder %s96, %s97
      %p108 = scmp.eq.s32.totalorder %s20, 0
      %p109 = por %p107, %p108
      %p110 = scmp.ne.s32.totalorder %s96, %s97
      %p111 = scmp.eq.s32.totalorder %s21, 1
      %p112 = por %p110, %p111
      %p114 = scmp.ne.s32.totalorder %s97, %s113
      %p115 = scmp.eq.s32.totalorder %s21, 0
      %p116 = por %p114, %p115
      %s117 = ssub.s32 %s15, %s22
      %p118 = scmp.eq.s32.totalorder %s117, 0
      %s120 = sadd.s32 %s119, 1
      %s121 = scalar_select %p118, %s119, %s120
      %p124 = pneg %p118
      %p125 = scmp.eq.s32.totalorder %s15, 1
      %p126 = por %p124, %p125
      %p127 = scmp.ne.s32.totalorder %s119, %s122
      %p128 = scmp.eq.s32.totalorder %s15, 0
      %p129 = por %p127, %p128
      %p130 = scmp.ne.s32.totalorder %s119, %s122
      %p131 = scmp.eq.s32.totalorder %s20, 1
      %p132 = por %p130, %p131
      %p133 = scmp.ne.s32.totalorder %s122, %s123
      %p134 = scmp.eq.s32.totalorder %s20, 0
      %p135 = por %p133, %p134
      %p136 = scmp.ne.s32.totalorder %s122, %s123
      %p137 = scmp.eq.s32.totalorder %s21, 1
      %p138 = por %p136, %p137
      %p140 = scmp.ne.s32.totalorder %s123, %s139
      %p141 = scmp.eq.s32.totalorder %s21, 0
      %p142 = por %p140, %p141
      %s143 = ssub.s32 %s15, %s22
      %p144 = scmp.eq.s32.totalorder %s143, 0
      %s146 = sadd.s32 %s145, 1
      %s147 = scalar_select %p144, %s145, %s146
      %p150 = pneg %p144
      %p151 = scmp.eq.s32.totalorder %s15, 1
      %p152 = por %p150, %p151
      %p153 = scmp.ne.s32.totalorder %s145, %s148
      %p154 = scmp.eq.s32.totalorder %s15, 0
      %p155 = por %p153, %p154
      %p156 = scmp.ne.s32.totalorder %s145, %s148
      %p157 = scmp.eq.s32.totalorder %s20, 1
      %p158 = por %p156, %p157
      %p159 = scmp.ne.s32.totalorder %s148, %s149
      %p160 = scmp.eq.s32.totalorder %s20, 0
      %p161 = por %p159, %p160
      %p162 = scmp.ne.s32.totalorder %s148, %s149
      %p163 = scmp.eq.s32.totalorder %s21, 1
      %p164 = por %p162, %p163
      %p166 = scmp.ne.s32.totalorder %s149, %s165
      %p167 = scmp.eq.s32.totalorder %s21, 0
      %p168 = por %p166, %p167
      %p169 = scmp.le.s32.totalorder 1, %s15
      %p170 = scmp.lt.s32.totalorder %s15, 3
      %p171 = pnand %p169, %p170
      %p172 = pneg %p171
      // Predicated region
      $region9: #{convlstm_forward.2} parent=5 // pred_check
        _
      $region10: #{convlstm_forward.2} parent=5 // pred_check_branch
        %174 = sbr.rel (%p171) target = $region12
      $region11: #{convlstm_forward.2} parent=5 // pred_region
        %s175 = ssub.s32 %s15, 1
        // Predicated region
        $region13: #{convlstm_forward.2} parent=11 // pred_check
          %p176 = pneg %p62
        $region14: #{convlstm_forward.2} parent=11 // pred_check_branch
          %178 = sbr.rel (%p176) target = $region16
        $region15: #{convlstm_forward.2} parent=11 // pred_region
          _
        $region16: #{convlstm_forward.2} parent=11 // pred_fallthru
          _
        // Predicated region
        $region17: #{convlstm_forward.2} parent=11 // pred_check
          %p179 = pneg %p83
        $region18: #{convlstm_forward.2} parent=11 // pred_check_branch
          %181 = sbr.rel (%p179) target = $region20
        $region19: #{convlstm_forward.2} parent=11 // pred_region
          _
        $region20: #{convlstm_forward.2} parent=11 // pred_fallthru
          _
      $region12: #{convlstm_forward.2} parent=5 // pred_fallthru
        _
      %p182 = scmp.lt.s32.totalorder %s15, 2
      // Predicated region
      $region21: #{convlstm_forward.2} parent=5 // pred_check
        %p183 = pneg %p182
      $region22: #{convlstm_forward.2} parent=5 // pred_check_branch
        %185 = sbr.rel (%p183) target = $region24
      $region23: #{convlstm_forward.2} parent=5 // pred_region
        // Predicated region
        $region25: #{convlstm_forward.2} parent=23 // pred_check
          %p186 = pneg %p35
        $region26: #{convlstm_forward.2} parent=23 // pred_check_branch
          %188 = sbr.rel (%p186) target = $region28
        $region27: #{convlstm_forward.2} parent=23 // pred_region
          %s189 = smul.u32 32, %s15
          %p190 = scmp.lt.s32.totalorder %s189, 63
          %s191 = scalar_select %p190, %s189, 63
          %s192 = smul.addr %s191, 3
          %s193 = smul.addr %s192, 4
          %s194 = scalar_lea.vmem %s0, %s193
          %s195 = smul.u32 32, %s15
        $region28: #{convlstm_forward.2} parent=23 // pred_fallthru
          _
        // Predicated region
        $region29: #{convlstm_forward.2} parent=23 // pred_check
          %p196 = pneg %p103
        $region30: #{convlstm_forward.2} parent=23 // pred_check_branch
          %198 = sbr.rel (%p196) target = $region32
        $region31: #{convlstm_forward.2} parent=23 // pred_region
          %s199 = sand.u32 %s93, 1
          %s200 = sand.u32 %s93, 1
          %s201 = smul.addr %s200, 64
          %s202 = scalar_lea.vmem [#allocation2], %s201
          %s203 = smul.u32 2, %s15
          %s204 = smul.addr %s203, 8
          %s205 = scalar_lea.vmem %s3, %s204
          // Predicated region
          $region33: #{convlstm_forward.2} parent=31 // pred_check
            _
          $region34: #{convlstm_forward.2} parent=31 // pred_check_branch
            %207 = sbr.rel (0) target = $region36
          $region35: #{convlstm_forward.2} parent=31 // pred_region
            // Predicated region
            $region37: #{convlstm_forward.2} parent=35 // pred_check
              _
            $region38: #{convlstm_forward.2} parent=35 // pred_check_branch
              %209 = sbr.rel (0) target = $region40
            $region39: #{convlstm_forward.2} parent=35 // pred_region
              loop: start=0, step=1, limit=1
              $region41: #{convlstm_forward.2} parent=39 // loop_pre_header
                _
              $region42: #{convlstm_forward.2} parent=39 // loop_header
                %s211 = sphi 0, %s215
                %p212 = scmp.ge.s32.totalorder %s211, 1
                %s216 = sphi %s205, %s205
                %s217 = sphi %s202, %s202
              $region43: #{convlstm_forward.2} parent=39 // loop_header_branch
                %214 = sbr.rel (%p212) target = $region47
              $region44: #{convlstm_forward.2} parent=39 // loop_body
                %v218 = vld [vmem:[%s216] sm:$0xff]
                %219 = vst [vmem:[%s217] sm:$0xff] %v218
                %v220 = vld [vmem:[%s216 + $0x8] sm:$0xff]
                %221 = vst [vmem:[%s217 + $0x8] sm:$0xff] %v220
                %v222 = vld [vmem:[%s216 + $0x20] sm:$0xff]
                %223 = vst [vmem:[%s217 + $0x10] sm:$0xff] %v222
                %v224 = vld [vmem:[%s216 + $0x28] sm:$0xff]
                %225 = vst [vmem:[%s217 + $0x18] sm:$0xff] %v224
                %v226 = vld [vmem:[%s216 + $0x40] sm:$0xff]
                %227 = vst [vmem:[%s217 + $0x20] sm:$0xff] %v226
                %v228 = vld [vmem:[%s216 + $0x48] sm:$0xff]
                %229 = vst [vmem:[%s217 + $0x28] sm:$0xff] %v228
                %v230 = vld [vmem:[%s216 + $0x60] sm:$0xff]
                %231 = vst [vmem:[%s217 + $0x30] sm:$0xff] %v230
                %v232 = vld [vmem:[%s216 + $0x68] sm:$0xff]
                %233 = vst [vmem:[%s217 + $0x38] sm:$0xff] %v232
              $region45: #{convlstm_forward.2} parent=39 // loop_footer
                %s215 = sadd.s32 1, %s211
              $region46: #{convlstm_forward.2} parent=39 // loop_footer_branch
                %210 = sbr.rel target = $region42
              $region47: #{convlstm_forward.2} parent=39 // loop_exit
                _
            $region40: #{convlstm_forward.2} parent=35 // pred_fallthru
              _
            // Predicated region
            $region48: #{convlstm_forward.2} parent=35 // pred_check
              _
            $region49: #{convlstm_forward.2} parent=35 // pred_check_branch
              %235 = sbr.rel target = $region51
            $region50: #{convlstm_forward.2} parent=35 // pred_region
              _
            $region51: #{convlstm_forward.2} parent=35 // pred_fallthru
              _
          $region36: #{convlstm_forward.2} parent=31 // pred_fallthru
            _
          %236 = vnop
        $region32: #{convlstm_forward.2} parent=23 // pred_fallthru
          _
      $region24: #{convlstm_forward.2} parent=5 // pred_fallthru
        _
      %p237 = scmp.le.s32.totalorder 1, %s15
      %p238 = scmp.lt.s32.totalorder %s15, 3
      %p239 = pnand %p237, %p238
      %p240 = pneg %p239
      // Predicated region
      $region52: #{convlstm_forward.2} parent=5 // pred_check
        _
      $region53: #{convlstm_forward.2} parent=5 // pred_check_branch
        %242 = sbr.rel (%p239) target = $region55
      $region54: #{convlstm_forward.2} parent=5 // pred_region
        %s243 = ssub.s32 %s15, 1
        %s244 = sand.u32 %s96, 1
        %s245 = sand.u32 %s96, 1
        %s246 = smul.addr %s245, 64
        %s247 = scalar_lea.vmem [#allocation2], %s246
        // Predicated region
        $region56: #{convlstm_forward.2} parent=54 // pred_check
          %p248 = pneg %p109
        $region57: #{convlstm_forward.2} parent=54 // pred_check_branch
          %250 = sbr.rel (%p248) target = $region59
        $region58: #{convlstm_forward.2} parent=54 // pred_region
          _
        $region59: #{convlstm_forward.2} parent=54 // pred_fallthru
          _
        %s251 = smul.u32 32, %s20
        %p252 = scmp.lt.s32.totalorder %s251, 63
        %s253 = scalar_select %p252, %s251, 63
        %s254 = smul.addr %s253, 3
        %s255 = smul.addr %s254, 4
        %s256 = scalar_lea.vmem %s0, %s255
        %p257 = pneg %p41
        %p258 = pneg %p38
        %p259 = pneg %p62
        %p260 = pneg %p59
        %p261 = pneg %p83
        %p262 = pneg %p80
        %s263 = sand.u32 %s96, 1
        %s264 = sand.u32 %s96, 1
        %s265 = smul.addr %s264, 64
        %s266 = scalar_lea.vmem [#allocation2], %s265
        %p267 = pneg %p109
        %p268 = pneg %p106
        %p269 = pneg %p135
        %p270 = pneg %p132
        %s271 = sand.u32 %s122, 1
        %s272 = sand.u32 %s122, 1
        %s273 = smul.addr %s272, 64
        %s274 = scalar_lea.vmem [#allocation3], %s273
        %p275 = pneg %p161
        %p276 = pneg %p158
        %s277 = sand.u32 %s148, 1
        %s278 = scalar_lea.sflag [#allocation5], %s277
        %s279 = sand.u32 %s148, 1
        %s280 = smul.addr %s279, 64
        %s281 = scalar_lea.vmem [#allocation4], %s280
        %s282 = smul.u32 32, %s20
        %p283 = scmp.lt.s32.totalorder %s282, 63
        %s284 = scalar_select %p283, %s282, 63
        %s285 = smul.addr %s284, 3
        %s286 = smul.addr %s285, 4
        %s287 = scalar_lea.vmem %s0, %s286
        %s288 = smul.u32 32, %s20
        %s289 = smul.u32 2, %s20
        %s290 = smul.u32 2, %s20
        %s291 = smul.u32 2, %s20
        %v293 = vld [vmem:[%s287] sm:$0xff]
        %v294 = vld [vmem:[%s287 + $0x8] sm:$0xf]
        %v295 = vld [vmem:[%s287 + $0xc] sm:$0xff]
        %v296 = vld [vmem:[%s287 + $0x14] sm:$0xf]
        %v297 = vld [vmem:[%s287 + $0x18] sm:$0xff]
        %v298 = vld [vmem:[%s287 + $0x20] sm:$0xf]
        %v299 = vld [vmem:[%s287 + $0x24] sm:$0xff]
        %v300 = vld [vmem:[%s287 + $0x2c] sm:$0xf]
        %v301 = vld [vmem:[%s287 + $0x30] sm:$0xff]
        %v302 = vld [vmem:[%s287 + $0x38] sm:$0xf]
        %v303 = vld [vmem:[%s287 + $0x3c] sm:$0xff]
        %v304 = vld [vmem:[%s287 + $0x44] sm:$0xf]
        %v305 = vld [vmem:[%s287 + $0x48] sm:$0xff]
        %v306 = vld [vmem:[%s287 + $0x50] sm:$0xf]
        %v307 = vld [vmem:[%s287 + $0x54] sm:$0xff]
        %v308 = vld [vmem:[%s287 + $0x5c] sm:$0xf]
        %v309 = vld [vmem:[%s287 + $0x60] sm:$0xff]
        %v310 = vld [vmem:[%s287 + $0x68] sm:$0xf]
        %v311 = vld [vmem:[%s287 + $0x6c] sm:$0xff]
        %v312 = vld [vmem:[%s287 + $0x74] sm:$0xf]
        %v313 = vld [vmem:[%s287 + $0x78] sm:$0xff]
        %v314 = vld [vmem:[%s287 + $0x80] sm:$0xf]
        %v315 = vld [vmem:[%s287 + $0x84] sm:$0xff]
        %v316 = vld [vmem:[%s287 + $0x8c] sm:$0xf]
        %v317 = vld [vmem:[%s287 + $0x90] sm:$0xff]
        %v318 = vld [vmem:[%s287 + $0x98] sm:$0xf]
        %v319 = vld [vmem:[%s287 + $0x9c] sm:$0xff]
        %v320 = vld [vmem:[%s287 + $0xa4] sm:$0xf]
        %v321 = vld [vmem:[%s287 + $0xa8] sm:$0xff]
        %v322 = vld [vmem:[%s287 + $0xb0] sm:$0xf]
        %v323 = vld [vmem:[%s287 + $0xb4] sm:$0xff]
        %v324 = vld [vmem:[%s287 + $0xbc] sm:$0xf]
        %v325 = vld [vmem:[%s287 + $0xc0] sm:$0xff]
        %v326 = vld [vmem:[%s287 + $0xc8] sm:$0xf]
        %v327 = vld [vmem:[%s287 + $0xcc] sm:$0xff]
        %v328 = vld [vmem:[%s287 + $0xd4] sm:$0xf]
        %v329 = vld [vmem:[%s287 + $0xd8] sm:$0xff]
        %v330 = vld [vmem:[%s287 + $0xe0] sm:$0xf]
        %v331 = vld [vmem:[%s287 + $0xe4] sm:$0xff]
        %v332 = vld [vmem:[%s287 + $0xec] sm:$0xf]
        %v333 = vld [vmem:[%s287 + $0xf0] sm:$0xff]
        %v334 = vld [vmem:[%s287 + $0xf8] sm:$0xf]
        %v335 = vld [vmem:[%s287 + $0xfc] sm:$0xff]
        %v336 = vld [vmem:[%s287 + $0x104] sm:$0xf]
        %v337 = vld [vmem:[%s287 + $0x108] sm:$0xff]
        %v338 = vld [vmem:[%s287 + $0x110] sm:$0xf]
        %v339 = vld [vmem:[%s287 + $0x114] sm:$0xff]
        %v340 = vld [vmem:[%s287 + $0x11c] sm:$0xf]
        %v341 = vld [vmem:[%s287 + $0x120] sm:$0xff]
        %v342 = vld [vmem:[%s287 + $0x128] sm:$0xf]
        %v343 = vld [vmem:[%s287 + $0x12c] sm:$0xff]
        %v344 = vld [vmem:[%s287 + $0x134] sm:$0xf]
        %v345 = vld [vmem:[%s287 + $0x138] sm:$0xff]
        %v346 = vld [vmem:[%s287 + $0x140] sm:$0xf]
        %v347 = vld [vmem:[%s287 + $0x144] sm:$0xff]
        %v348 = vld [vmem:[%s287 + $0x14c] sm:$0xf]
        %v349 = vld [vmem:[%s287 + $0x150] sm:$0xff]
        %v350 = vld [vmem:[%s287 + $0x158] sm:$0xf]
        %v351 = vld [vmem:[%s287 + $0x15c] sm:$0xff]
        %v352 = vld [vmem:[%s287 + $0x164] sm:$0xf]
        %v353 = vld [vmem:[%s287 + $0x168] sm:$0xff]
        %v354 = vld [vmem:[%s287 + $0x170] sm:$0xf]
        %v355 = vld [vmem:[%s287 + $0x174] sm:$0xff]
        %v356 = vld [vmem:[%s287 + $0x17c] sm:$0xf]
        %v357 = vld [vmem:[%s1] sm:$0xf]
        %v358 = vld [vmem:[%s1 + $0x4] sm:$0xf]
        %v359 = vld [vmem:[%s1 + $0x8] sm:$0xf]
        %v360 = vld [vmem:[%s1 + $0xc] sm:$0xf]
        %v361 = vld [vmem:[%s1 + $0x10] sm:$0xf]
        %v362 = vld [vmem:[%s1 + $0x14] sm:$0xf]
        %v363 = vld [vmem:[%s1 + $0x18] sm:$0xf]
        %v364 = vld [vmem:[%s1 + $0x1c] sm:$0xf]
        %v365 = vld [vmem:[%s1 + $0x20] sm:$0xf]
        %v366 = vld [vmem:[%s1 + $0x24] sm:$0xf]
        %v367 = vld [vmem:[%s1 + $0x28] sm:$0xf]
        %v368 = vld [vmem:[%s1 + $0x2c] sm:$0xf]
        %v369 = vld [vmem:[%s1 + $0x30] sm:$0xf]
        %v370 = vld [vmem:[%s1 + $0x34] sm:$0xf]
        %v371 = vld [vmem:[%s1 + $0x38] sm:$0xf]
        %v372 = vld [vmem:[%s1 + $0x3c] sm:$0xf]
        %v373 = vld [vmem:[%s1 + $0x40] sm:$0xf]
        %v374 = vld [vmem:[%s1 + $0x44] sm:$0xf]
        %v375 = vld [vmem:[%s1 + $0x48] sm:$0xf]
        %v376 = vld [vmem:[%s1 + $0x4c] sm:$0xf]
        %v377 = vld [vmem:[%s1 + $0x50] sm:$0xf]
        %v378 = vld [vmem:[%s1 + $0x54] sm:$0xf]
        %v379 = vld [vmem:[%s1 + $0x58] sm:$0xf]
        %v380 = vld [vmem:[%s1 + $0x5c] sm:$0xf]
        %v381 = vld [vmem:[%s1 + $0x60] sm:$0xf]
        %v382 = vld [vmem:[%s1 + $0x64] sm:$0xf]
        %v383 = vld [vmem:[%s1 + $0x68] sm:$0xf]
        %v384 = vld [vmem:[%s1 + $0x6c] sm:$0xf]
        %v385 = vld [vmem:[%s1 + $0x70] sm:$0xf]
        %v386 = vld [vmem:[%s1 + $0x74] sm:$0xf]
        %v387 = vld [vmem:[%s1 + $0x78] sm:$0xf]
        %v388 = vld [vmem:[%s1 + $0x7c] sm:$0xf]
        %v389 = vld [vmem:[%s1 + $0x80] sm:$0xf]
        %v390 = vld [vmem:[%s1 + $0x84] sm:$0xf]
        %v391 = vld [vmem:[%s1 + $0x88] sm:$0xf]
        %v392 = vld [vmem:[%s1 + $0x8c] sm:$0xf]
        %v393 = vld [vmem:[%s1 + $0x90] sm:$0xf]
        %v394 = vld [vmem:[%s1 + $0x94] sm:$0xf]
        %v395 = vld [vmem:[%s1 + $0x98] sm:$0xf]
        %v396 = vld [vmem:[%s1 + $0x9c] sm:$0xf]
        %v397 = vld [vmem:[%s1 + $0xa0] sm:$0xf]
        %v398 = vld [vmem:[%s1 + $0xa4] sm:$0xf]
        %v399 = vld [vmem:[%s1 + $0xa8] sm:$0xf]
        %v400 = vld [vmem:[%s1 + $0xac] sm:$0xf]
        %v401 = vld [vmem:[%s1 + $0xb0] sm:$0xf]
        %v402 = vld [vmem:[%s1 + $0xb4] sm:$0xf]
        %v403 = vld [vmem:[%s1 + $0xb8] sm:$0xf]
        %v404 = vld [vmem:[%s1 + $0xbc] sm:$0xf]
        %v405 = vld [vmem:[%s2] sm:$0x1]
        %v407 = vlaneseq
        %v408 = vshrl.u32 %v407, 7
        %v409 = vsub.s32 0, %v408
        %v410 = vrot.slane %v405, %v409
        %v476 = vunpack.c.l.b16 %v293
        %v477 = vunpack.c.h.b16 %v293
        %v478 = vunpack.c.l.b16 %v294
        %v479 = vunpack.c.l.b16 %v295
        %v480 = vunpack.c.h.b16 %v295
        %v481 = vunpack.c.l.b16 %v296
        %v482 = vunpack.c.l.b16 %v297
        %v483 = vunpack.c.h.b16 %v297
        %v484 = vunpack.c.l.b16 %v298
        %v485 = vunpack.c.l.b16 %v299
        %v486 = vunpack.c.h.b16 %v299
        %v487 = vunpack.c.l.b16 %v300
        %v488 = vunpack.c.l.b16 %v301
        %v489 = vunpack.c.h.b16 %v301
        %v490 = vunpack.c.l.b16 %v302
        %v491 = vunpack.c.l.b16 %v303
        %v492 = vunpack.c.h.b16 %v303
        %v493 = vunpack.c.l.b16 %v304
        %v494 = vunpack.c.l.b16 %v305
        %v495 = vunpack.c.h.b16 %v305
        %v496 = vunpack.c.l.b16 %v306
        %v497 = vunpack.c.l.b16 %v307
        %v498 = vunpack.c.h.b16 %v307
        %v499 = vunpack.c.l.b16 %v308
        %v500 = vunpack.c.l.b16 %v309
        %v501 = vunpack.c.h.b16 %v309
        %v502 = vunpack.c.l.b16 %v310
        %v503 = vunpack.c.l.b16 %v311
        %v504 = vunpack.c.h.b16 %v311
        %v505 = vunpack.c.l.b16 %v312
        %v506 = vunpack.c.l.b16 %v313
        %v507 = vunpack.c.h.b16 %v313
        %v508 = vunpack.c.l.b16 %v314
        %v509 = vunpack.c.l.b16 %v315
        %v510 = vunpack.c.h.b16 %v315
        %v511 = vunpack.c.l.b16 %v316
        %v512 = vunpack.c.l.b16 %v317
        %v513 = vunpack.c.h.b16 %v317
        %v514 = vunpack.c.l.b16 %v318
        %v515 = vunpack.c.l.b16 %v319
        %v516 = vunpack.c.h.b16 %v319
        %v517 = vunpack.c.l.b16 %v320
        %v518 = vunpack.c.l.b16 %v321
        %v519 = vunpack.c.h.b16 %v321
        %v520 = vunpack.c.l.b16 %v322
        %v521 = vunpack.c.l.b16 %v323
        %v522 = vunpack.c.h.b16 %v323
        %v523 = vunpack.c.l.b16 %v324
        %v524 = vunpack.c.l.b16 %v325
        %v525 = vunpack.c.h.b16 %v325
        %v526 = vunpack.c.l.b16 %v326
        %v527 = vunpack.c.l.b16 %v327
        %v528 = vunpack.c.h.b16 %v327
        %v529 = vunpack.c.l.b16 %v328
        %v530 = vunpack.c.l.b16 %v329
        %v531 = vunpack.c.h.b16 %v329
        %v532 = vunpack.c.l.b16 %v330
        %v533 = vunpack.c.l.b16 %v331
        %v534 = vunpack.c.h.b16 %v331
        %v535 = vunpack.c.l.b16 %v332
        %v536 = vunpack.c.l.b16 %v333
        %v537 = vunpack.c.h.b16 %v333
        %v538 = vunpack.c.l.b16 %v334
        %v539 = vunpack.c.l.b16 %v335
        %v540 = vunpack.c.h.b16 %v335
        %v541 = vunpack.c.l.b16 %v336
        %v542 = vunpack.c.l.b16 %v337
        %v543 = vunpack.c.h.b16 %v337
        %v544 = vunpack.c.l.b16 %v338
        %v545 = vunpack.c.l.b16 %v339
        %v546 = vunpack.c.h.b16 %v339
        %v547 = vunpack.c.l.b16 %v340
        %v548 = vunpack.c.l.b16 %v341
        %v549 = vunpack.c.h.b16 %v341
        %v550 = vunpack.c.l.b16 %v342
        %v551 = vunpack.c.l.b16 %v343
        %v552 = vunpack.c.h.b16 %v343
        %v553 = vunpack.c.l.b16 %v344
        %v554 = vunpack.c.l.b16 %v345
        %v555 = vunpack.c.h.b16 %v345
        %v556 = vunpack.c.l.b16 %v346
        %v557 = vunpack.c.l.b16 %v347
        %v558 = vunpack.c.h.b16 %v347
        %v559 = vunpack.c.l.b16 %v348
        %v560 = vunpack.c.l.b16 %v349
        %v561 = vunpack.c.h.b16 %v349
        %v562 = vunpack.c.l.b16 %v350
        %v563 = vunpack.c.l.b16 %v351
        %v564 = vunpack.c.h.b16 %v351
        %v565 = vunpack.c.l.b16 %v352
        %v566 = vunpack.c.l.b16 %v353
        %v567 = vunpack.c.h.b16 %v353
        %v568 = vunpack.c.l.b16 %v354
        %v569 = vunpack.c.l.b16 %v355
        %v570 = vunpack.c.h.b16 %v355
        %v571 = vunpack.c.l.b16 %v356
        %v572 = vpack.c.b16 %v479, %v476
        %v573 = vpack.c.b16 %v480, %v477
        %v574 = vpack.c.b16 %v481, %v478
        %v575 = vpack.c.b16 %v485, %v482
        %v576 = vpack.c.b16 %v486, %v483
        %v577 = vpack.c.b16 %v487, %v484
        %v578 = vpack.c.b16 %v491, %v488
        %v579 = vpack.c.b16 %v492, %v489
        %v580 = vpack.c.b16 %v493, %v490
        %v581 = vpack.c.b16 %v497, %v494
        %v582 = vpack.c.b16 %v498, %v495
        %v583 = vpack.c.b16 %v499, %v496
        %v584 = vpack.c.b16 %v503, %v500
        %v585 = vpack.c.b16 %v504, %v501
        %v586 = vpack.c.b16 %v505, %v502
        %v587 = vpack.c.b16 %v509, %v506
        %v588 = vpack.c.b16 %v510, %v507
        %v589 = vpack.c.b16 %v511, %v508
        %v590 = vpack.c.b16 %v515, %v512
        %v591 = vpack.c.b16 %v516, %v513
        %v592 = vpack.c.b16 %v517, %v514
        %v593 = vpack.c.b16 %v521, %v518
        %v594 = vpack.c.b16 %v522, %v519
        %v595 = vpack.c.b16 %v523, %v520
        %v596 = vpack.c.b16 %v527, %v524
        %v597 = vpack.c.b16 %v528, %v525
        %v598 = vpack.c.b16 %v529, %v526
        %v599 = vpack.c.b16 %v533, %v530
        %v600 = vpack.c.b16 %v534, %v531
        %v601 = vpack.c.b16 %v535, %v532
        %v602 = vpack.c.b16 %v539, %v536
        %v603 = vpack.c.b16 %v540, %v537
        %v604 = vpack.c.b16 %v541, %v538
        %v605 = vpack.c.b16 %v545, %v542
        %v606 = vpack.c.b16 %v546, %v543
        %v607 = vpack.c.b16 %v547, %v544
        %v608 = vpack.c.b16 %v551, %v548
        %v609 = vpack.c.b16 %v552, %v549
        %v610 = vpack.c.b16 %v553, %v550
        %v611 = vpack.c.b16 %v557, %v554
        %v612 = vpack.c.b16 %v558, %v555
        %v613 = vpack.c.b16 %v559, %v556
        %v614 = vpack.c.b16 %v563, %v560
        %v615 = vpack.c.b16 %v564, %v561
        %v616 = vpack.c.b16 %v565, %v562
        %v617 = vpack.c.b16 %v569, %v566
        %v618 = vpack.c.b16 %v570, %v567
        %v619 = vpack.c.b16 %v571, %v568
        %v716 = vunpack.c.l.b16 %v357
        %v717 = vunpack.c.l.b16 %v358
        %v718 = vunpack.c.l.b16 %v359
        %v719 = vunpack.c.l.b16 %v360
        %v720 = vunpack.c.l.b16 %v361
        %v721 = vunpack.c.l.b16 %v362
        %v722 = vunpack.c.l.b16 %v363
        %v723 = vunpack.c.l.b16 %v364
        %v724 = vunpack.c.l.b16 %v365
        %v725 = vunpack.c.l.b16 %v366
        %v726 = vunpack.c.l.b16 %v367
        %v727 = vunpack.c.l.b16 %v368
        %v728 = vunpack.c.l.b16 %v369
        %v729 = vunpack.c.l.b16 %v370
        %v730 = vunpack.c.l.b16 %v371
        %v731 = vunpack.c.l.b16 %v372
        %v732 = vunpack.c.l.b16 %v373
        %v733 = vunpack.c.l.b16 %v374
        %v734 = vunpack.c.l.b16 %v375
        %v735 = vunpack.c.l.b16 %v376
        %v736 = vunpack.c.l.b16 %v377
        %v737 = vunpack.c.l.b16 %v378
        %v738 = vunpack.c.l.b16 %v379
        %v739 = vunpack.c.l.b16 %v380
        %v740 = vunpack.c.l.b16 %v381
        %v741 = vunpack.c.l.b16 %v382
        %v742 = vunpack.c.l.b16 %v383
        %v743 = vunpack.c.l.b16 %v384
        %v744 = vunpack.c.l.b16 %v385
        %v745 = vunpack.c.l.b16 %v386
        %v746 = vunpack.c.l.b16 %v387
        %v747 = vunpack.c.l.b16 %v388
        %v748 = vunpack.c.l.b16 %v389
        %v749 = vunpack.c.l.b16 %v390
        %v750 = vunpack.c.l.b16 %v391
        %v751 = vunpack.c.l.b16 %v392
        %v752 = vunpack.c.l.b16 %v393
        %v753 = vunpack.c.l.b16 %v394
        %v754 = vunpack.c.l.b16 %v395
        %v755 = vunpack.c.l.b16 %v396
        %v756 = vunpack.c.l.b16 %v397
        %v757 = vunpack.c.l.b16 %v398
        %v758 = vunpack.c.l.b16 %v399
        %v759 = vunpack.c.l.b16 %v400
        %v760 = vunpack.c.l.b16 %v401
        %v761 = vunpack.c.l.b16 %v402
        %v762 = vunpack.c.l.b16 %v403
        %v763 = vunpack.c.l.b16 %v404
        %v764 = vpack.c.b16 %v717, %v716
        %v765 = vpack.c.b16 %v719, %v718
        %v766 = vpack.c.b16 %v721, %v720
        %v767 = vpack.c.b16 %v723, %v722
        %v768 = vpack.c.b16 %v725, %v724
        %v769 = vpack.c.b16 %v727, %v726
        %v770 = vpack.c.b16 %v729, %v728
        %v771 = vpack.c.b16 %v731, %v730
        %v772 = vpack.c.b16 %v733, %v732
        %v773 = vpack.c.b16 %v735, %v734
        %v774 = vpack.c.b16 %v737, %v736
        %v775 = vpack.c.b16 %v739, %v738
        %v776 = vpack.c.b16 %v741, %v740
        %v777 = vpack.c.b16 %v743, %v742
        %v778 = vpack.c.b16 %v745, %v744
        %v779 = vpack.c.b16 %v747, %v746
        %v780 = vpack.c.b16 %v749, %v748
        %v781 = vpack.c.b16 %v751, %v750
        %v782 = vpack.c.b16 %v753, %v752
        %v783 = vpack.c.b16 %v755, %v754
        %v784 = vpack.c.b16 %v757, %v756
        %v785 = vpack.c.b16 %v759, %v758
        %v786 = vpack.c.b16 %v761, %v760
        %v787 = vpack.c.b16 %v763, %v762
        %812 = vmatprep.subr.bf16.mxu0 0
        %813 = vmatpush1.bf16.msra.mxu0 %v771
        %814 = vmatprep.subr.bf16.mxu0 0
        %815 = vmatpush1.bf16.msra.mxu0 %v770
        %816 = vmatprep.subr.bf16.mxu0 0
        %817 = vmatpush1.bf16.msra.mxu0 %v769
        %818 = vmatprep.subr.bf16.mxu0 0
        %819 = vmatpush1.bf16.msra.mxu0 %v768
        %820 = vmatprep.subr.bf16.mxu0 0
        %821 = vmatpush1.bf16.msra.mxu0 %v767
        %822 = vmatprep.subr.bf16.mxu0 0
        %823 = vmatpush1.bf16.msra.mxu0 %v766
        %824 = vmatprep.subr.bf16.mxu0 0
        %825 = vmatpush1.bf16.msra.mxu0 %v765
        %826 = vmatprep.subr.bf16.mxu0 0
        %827 = vmatpush1.bf16.msra.mxu0 %v764
        %828 = vmatprep.subr.bf16.mxu0 0
        %829 = vmatpush2.bf16.msra.mxu0 %v779
        %830 = vmatprep.subr.bf16.mxu0 0
        %831 = vmatpush2.bf16.msra.mxu0 %v778
        %832 = vmatprep.subr.bf16.mxu0 0
        %833 = vmatpush2.bf16.msra.mxu0 %v777
        %834 = vmatprep.subr.bf16.mxu0 0
        %835 = vmatpush2.bf16.msra.mxu0 %v776
        %836 = vmatprep.subr.bf16.mxu0 0
        %837 = vmatpush2.bf16.msra.mxu0 %v775
        %838 = vmatprep.subr.bf16.mxu0 0
        %839 = vmatpush2.bf16.msra.mxu0 %v774
        %840 = vmatprep.subr.bf16.mxu0 0
        %841 = vmatpush2.bf16.msra.mxu0 %v773
        %842 = vmatprep.subr.bf16.mxu0 0
        %843 = vmatpush2.bf16.msra.mxu0 %v772
        %844 = vmatprep.mubr.bf16.mxu0 %v573
        %845 = vmatmul.mubr.bf16.gmra.mxu0 %v572
        %v846 = vpop.f32.mrf.mxu0
        %v847 = vadd.f32 %v410, %v846
        %v848 = vpop.f32.mrf.mxu0
        %v849 = vpop.f32.mrf.mxu0
        %v850 = vadd.f32 %v410, %v849
        %v851 = vpop.f32.mrf.mxu0
        %852 = vmatprep.mubr.bf16.mxu0 %v576
        %853 = vmatmul.mubr.bf16.gmra.mxu0 %v575
        %v854 = vpop.f32.mrf.mxu0
        %v855 = vadd.f32 %v410, %v854
        %v856 = vpop.f32.mrf.mxu0
        %v857 = vpop.f32.mrf.mxu0
        %v858 = vadd.f32 %v410, %v857
        %v859 = vpop.f32.mrf.mxu0
        %860 = vmatprep.mubr.bf16.mxu0 %v579
        %861 = vmatmul.mubr.bf16.gmra.mxu0 %v578
        %v862 = vpop.f32.mrf.mxu0
        %v863 = vadd.f32 %v410, %v862
        %v864 = vpop.f32.mrf.mxu0
        %v865 = vpop.f32.mrf.mxu0
        %v866 = vadd.f32 %v410, %v865
        %v867 = vpop.f32.mrf.mxu0
        %868 = vmatprep.mubr.bf16.mxu0 %v582
        %869 = vmatmul.mubr.bf16.gmra.mxu0 %v581
        %v870 = vpop.f32.mrf.mxu0
        %v871 = vadd.f32 %v410, %v870
        %v872 = vpop.f32.mrf.mxu0
        %v873 = vpop.f32.mrf.mxu0
        %v874 = vadd.f32 %v410, %v873
        %v875 = vpop.f32.mrf.mxu0
        %876 = vmatprep.mubr.bf16.mxu0 %v585
        %877 = vmatmul.mubr.bf16.gmra.mxu0 %v584
        %v878 = vpop.f32.mrf.mxu0
        %v879 = vadd.f32 %v410, %v878
        %v880 = vpop.f32.mrf.mxu0
        %v881 = vpop.f32.mrf.mxu0
        %v882 = vadd.f32 %v410, %v881
        %v883 = vpop.f32.mrf.mxu0
        %884 = vmatprep.mubr.bf16.mxu0 %v588
        %885 = vmatmul.mubr.bf16.gmra.mxu0 %v587
        %v886 = vpop.f32.mrf.mxu0
        %v887 = vadd.f32 %v410, %v886
        %v888 = vpop.f32.mrf.mxu0
        %v889 = vpop.f32.mrf.mxu0
        %v890 = vadd.f32 %v410, %v889
        %v891 = vpop.f32.mrf.mxu0
        %892 = vmatprep.mubr.bf16.mxu0 %v591
        %893 = vmatmul.mubr.bf16.gmra.mxu0 %v590
        %v894 = vpop.f32.mrf.mxu0
        %v895 = vadd.f32 %v410, %v894
        %v896 = vpop.f32.mrf.mxu0
        %v897 = vpop.f32.mrf.mxu0
        %v898 = vadd.f32 %v410, %v897
        %v899 = vpop.f32.mrf.mxu0
        %900 = vmatprep.mubr.bf16.mxu0 %v594
        %901 = vmatmul.mubr.bf16.gmra.mxu0 %v593
        %v902 = vpop.f32.mrf.mxu0
        %v903 = vadd.f32 %v410, %v902
        %v904 = vpop.f32.mrf.mxu0
        %v905 = vpop.f32.mrf.mxu0
        %v906 = vadd.f32 %v410, %v905
        %v907 = vpop.f32.mrf.mxu0
        %908 = vmatprep.mubr.bf16.mxu0 %v597
        %909 = vmatmul.mubr.bf16.gmra.mxu0 %v596
        %v910 = vpop.f32.mrf.mxu0
        %v911 = vadd.f32 %v410, %v910
        %v912 = vpop.f32.mrf.mxu0
        %v913 = vpop.f32.mrf.mxu0
        %v914 = vadd.f32 %v410, %v913
        %v915 = vpop.f32.mrf.mxu0
        %916 = vmatprep.mubr.bf16.mxu0 %v600
        %917 = vmatmul.mubr.bf16.gmra.mxu0 %v599
        %v918 = vpop.f32.mrf.mxu0
        %v919 = vadd.f32 %v410, %v918
        %v920 = vpop.f32.mrf.mxu0
        %v921 = vpop.f32.mrf.mxu0
        %v922 = vadd.f32 %v410, %v921
        %v923 = vpop.f32.mrf.mxu0
        %924 = vmatprep.mubr.bf16.mxu0 %v603
        %925 = vmatmul.mubr.bf16.gmra.mxu0 %v602
        %v926 = vpop.f32.mrf.mxu0
        %v927 = vadd.f32 %v410, %v926
        %v928 = vpop.f32.mrf.mxu0
        %v929 = vpop.f32.mrf.mxu0
        %v930 = vadd.f32 %v410, %v929
        %v931 = vpop.f32.mrf.mxu0
        %932 = vmatprep.mubr.bf16.mxu0 %v606
        %933 = vmatmul.mubr.bf16.gmra.mxu0 %v605
        %v934 = vpop.f32.mrf.mxu0
        %v935 = vadd.f32 %v410, %v934
        %v936 = vpop.f32.mrf.mxu0
        %v937 = vpop.f32.mrf.mxu0
        %v938 = vadd.f32 %v410, %v937
        %v939 = vpop.f32.mrf.mxu0
        %940 = vmatprep.mubr.bf16.mxu0 %v609
        %941 = vmatmul.mubr.bf16.gmra.mxu0 %v608
        %v942 = vpop.f32.mrf.mxu0
        %v943 = vadd.f32 %v410, %v942
        %v944 = vpop.f32.mrf.mxu0
        %v945 = vpop.f32.mrf.mxu0
        %v946 = vadd.f32 %v410, %v945
        %v947 = vpop.f32.mrf.mxu0
        %948 = vmatprep.mubr.bf16.mxu0 %v612
        %949 = vmatmul.mubr.bf16.gmra.mxu0 %v611
        %v950 = vpop.f32.mrf.mxu0
        %v951 = vadd.f32 %v410, %v950
        %v952 = vpop.f32.mrf.mxu0
        %v953 = vpop.f32.mrf.mxu0
        %v954 = vadd.f32 %v410, %v953
        %v955 = vpop.f32.mrf.mxu0
        %956 = vmatprep.mubr.bf16.mxu0 %v615
        %957 = vmatmul.mubr.bf16.gmra.mxu0 %v614
        %v958 = vpop.f32.mrf.mxu0
        %v959 = vadd.f32 %v410, %v958
        %v960 = vpop.f32.mrf.mxu0
        %v961 = vpop.f32.mrf.mxu0
        %v962 = vadd.f32 %v410, %v961
        %v963 = vpop.f32.mrf.mxu0
        %964 = vmatprep.mubr.bf16.mxu0 %v618
        %965 = vmatmul.mubr.bf16.gmra.mxu0 %v617
        %v966 = vpop.f32.mrf.mxu0
        %v967 = vadd.f32 %v410, %v966
        %v968 = vpop.f32.mrf.mxu0
        %v969 = vpop.f32.mrf.mxu0
        %v970 = vadd.f32 %v410, %v969
        %v971 = vpop.f32.mrf.mxu0
        %972 = vdwg.mxu0
        %973 = vmatprep.subr.bf16.mxu0 0
        %974 = vmatpush1.bf16.msra.mxu0 %v787
        %975 = vmatprep.subr.bf16.mxu0 0
        %976 = vmatpush1.bf16.msra.mxu0 %v786
        %977 = vmatprep.subr.bf16.mxu0 0
        %978 = vmatpush1.bf16.msra.mxu0 %v785
        %979 = vmatprep.subr.bf16.mxu0 0
        %980 = vmatpush1.bf16.msra.mxu0 %v784
        %981 = vmatprep.subr.bf16.mxu0 0
        %982 = vmatpush1.bf16.msra.mxu0 %v783
        %983 = vmatprep.subr.bf16.mxu0 0
        %984 = vmatpush1.bf16.msra.mxu0 %v782
        %985 = vmatprep.subr.bf16.mxu0 0
        %986 = vmatpush1.bf16.msra.mxu0 %v781
        %987 = vmatprep.subr.bf16.mxu0 0
        %988 = vmatpush1.bf16.msra.mxu0 %v780
        %989 = vmatprep.subr.bf16.mxu0 0
        %990 = vmatpush2.bf16.msra.mxu0 0
        %991 = vmatprep.subr.bf16.mxu0 0
        %992 = vmatpush2.bf16.msra.mxu0 0
        %993 = vmatprep.subr.bf16.mxu0 0
        %994 = vmatpush2.bf16.msra.mxu0 0
        %995 = vmatprep.subr.bf16.mxu0 0
        %996 = vmatpush2.bf16.msra.mxu0 0
        %997 = vmatprep.subr.bf16.mxu0 0
        %998 = vmatpush2.bf16.msra.mxu0 0
        %999 = vmatprep.subr.bf16.mxu0 0
        %1000 = vmatpush2.bf16.msra.mxu0 0
        %1001 = vmatprep.subr.bf16.mxu0 0
        %1002 = vmatpush2.bf16.msra.mxu0 0
        %1003 = vmatprep.subr.bf16.mxu0 0
        %1004 = vmatpush2.bf16.msra.mxu0 0
        %1005 = vmatprep.mubr.bf16.mxu0 0
        %1006 = vmatmul.mubr.bf16.gmra.mxu0 %v574
        %v1007 = vpop.f32.mrf.mxu0
        %v1008 = vadd.f32 %v847, %v1007
        %v1009 = vpop.f32.mrf.mxu0
        %v1010 = vpop.f32.mrf.mxu0
        %v1011 = vadd.f32 %v850, %v1010
        %v1012 = vpop.f32.mrf.mxu0
        %1013 = vmatprep.mubr.bf16.mxu0 0
        %1014 = vmatmul.mubr.bf16.gmra.mxu0 %v577
        %v1015 = vpop.f32.mrf.mxu0
        %v1016 = vadd.f32 %v855, %v1015
        %v1017 = vpop.f32.mrf.mxu0
        %v1018 = vpop.f32.mrf.mxu0
        %v1019 = vadd.f32 %v858, %v1018
        %v1020 = vpop.f32.mrf.mxu0
        %1021 = vmatprep.mubr.bf16.mxu0 0
        %1022 = vmatmul.mubr.bf16.gmra.mxu0 %v580
        %v1023 = vpop.f32.mrf.mxu0
        %v1024 = vadd.f32 %v863, %v1023
        %v1025 = vpop.f32.mrf.mxu0
        %v1026 = vpop.f32.mrf.mxu0
        %v1027 = vadd.f32 %v866, %v1026
        %v1028 = vpop.f32.mrf.mxu0
        %1029 = vmatprep.mubr.bf16.mxu0 0
        %1030 = vmatmul.mubr.bf16.gmra.mxu0 %v583
        %v1031 = vpop.f32.mrf.mxu0
        %v1032 = vadd.f32 %v871, %v1031
        %v1033 = vpop.f32.mrf.mxu0
        %v1034 = vpop.f32.mrf.mxu0
        %v1035 = vadd.f32 %v874, %v1034
        %v1036 = vpop.f32.mrf.mxu0
        %1037 = vmatprep.mubr.bf16.mxu0 0
        %1038 = vmatmul.mubr.bf16.gmra.mxu0 %v586
        %v1039 = vpop.f32.mrf.mxu0
        %v1040 = vadd.f32 %v879, %v1039
        %v1041 = vpop.f32.mrf.mxu0
        %v1042 = vpop.f32.mrf.mxu0
        %v1043 = vadd.f32 %v882, %v1042
        %v1044 = vpop.f32.mrf.mxu0
        %1045 = vmatprep.mubr.bf16.mxu0 0
        %1046 = vmatmul.mubr.bf16.gmra.mxu0 %v589
        %v1047 = vpop.f32.mrf.mxu0
        %v1048 = vadd.f32 %v887, %v1047
        %v1049 = vpop.f32.mrf.mxu0
        %v1050 = vpop.f32.mrf.mxu0
        %v1051 = vadd.f32 %v890, %v1050
        %v1052 = vpop.f32.mrf.mxu0
        %1053 = vmatprep.mubr.bf16.mxu0 0
        %1054 = vmatmul.mubr.bf16.gmra.mxu0 %v592
        %v1055 = vpop.f32.mrf.mxu0
        %v1056 = vadd.f32 %v895, %v1055
        %v1057 = vpop.f32.mrf.mxu0
        %v1058 = vpop.f32.mrf.mxu0
        %v1059 = vadd.f32 %v898, %v1058
        %v1060 = vpop.f32.mrf.mxu0
        %1061 = vmatprep.mubr.bf16.mxu0 0
        %1062 = vmatmul.mubr.bf16.gmra.mxu0 %v595
        %v1063 = vpop.f32.mrf.mxu0
        %v1064 = vadd.f32 %v903, %v1063
        %v1065 = vpop.f32.mrf.mxu0
        %v1066 = vpop.f32.mrf.mxu0
        %v1067 = vadd.f32 %v906, %v1066
        %v1068 = vpop.f32.mrf.mxu0
        %1069 = vmatprep.mubr.bf16.mxu0 0
        %1070 = vmatmul.mubr.bf16.gmra.mxu0 %v598
        %v1071 = vpop.f32.mrf.mxu0
        %v1072 = vadd.f32 %v911, %v1071
        %v1073 = vpop.f32.mrf.mxu0
        %v1074 = vpop.f32.mrf.mxu0
        %v1075 = vadd.f32 %v914, %v1074
        %v1076 = vpop.f32.mrf.mxu0
        %1077 = vmatprep.mubr.bf16.mxu0 0
        %1078 = vmatmul.mubr.bf16.gmra.mxu0 %v601
        %v1079 = vpop.f32.mrf.mxu0
        %v1080 = vadd.f32 %v919, %v1079
        %v1081 = vpop.f32.mrf.mxu0
        %v1082 = vpop.f32.mrf.mxu0
        %v1083 = vadd.f32 %v922, %v1082
        %v1084 = vpop.f32.mrf.mxu0
        %1085 = vmatprep.mubr.bf16.mxu0 0
        %1086 = vmatmul.mubr.bf16.gmra.mxu0 %v604
        %v1087 = vpop.f32.mrf.mxu0
        %v1088 = vadd.f32 %v927, %v1087
        %v1089 = vpop.f32.mrf.mxu0
        %v1090 = vpop.f32.mrf.mxu0
        %v1091 = vadd.f32 %v930, %v1090
        %v1092 = vpop.f32.mrf.mxu0
        %1093 = vmatprep.mubr.bf16.mxu0 0
        %1094 = vmatmul.mubr.bf16.gmra.mxu0 %v607
        %v1095 = vpop.f32.mrf.mxu0
        %v1096 = vadd.f32 %v935, %v1095
        %v1097 = vpop.f32.mrf.mxu0
        %v1098 = vpop.f32.mrf.mxu0
        %v1099 = vadd.f32 %v938, %v1098
        %v1100 = vpop.f32.mrf.mxu0
        %1101 = vmatprep.mubr.bf16.mxu0 0
        %1102 = vmatmul.mubr.bf16.gmra.mxu0 %v610
        %v1103 = vpop.f32.mrf.mxu0
        %v1104 = vadd.f32 %v943, %v1103
        %v1105 = vpop.f32.mrf.mxu0
        %v1106 = vpop.f32.mrf.mxu0
        %v1107 = vadd.f32 %v946, %v1106
        %v1108 = vpop.f32.mrf.mxu0
        %1109 = vmatprep.mubr.bf16.mxu0 0
        %1110 = vmatmul.mubr.bf16.gmra.mxu0 %v613
        %v1111 = vpop.f32.mrf.mxu0
        %v1112 = vadd.f32 %v951, %v1111
        %v1113 = vpop.f32.mrf.mxu0
        %v1114 = vpop.f32.mrf.mxu0
        %v1115 = vadd.f32 %v954, %v1114
        %v1116 = vpop.f32.mrf.mxu0
        %1117 = vmatprep.mubr.bf16.mxu0 0
        %1118 = vmatmul.mubr.bf16.gmra.mxu0 %v616
        %v1119 = vpop.f32.mrf.mxu0
        %v1120 = vadd.f32 %v959, %v1119
        %v1121 = vpop.f32.mrf.mxu0
        %v1122 = vpop.f32.mrf.mxu0
        %v1123 = vadd.f32 %v962, %v1122
        %v1124 = vpop.f32.mrf.mxu0
        %1125 = vmatprep.mubr.bf16.mxu0 0
        %1126 = vmatmul.mubr.bf16.gmra.mxu0 %v619
        %v1127 = vpop.f32.mrf.mxu0
        %v1128 = vadd.f32 %v967, %v1127
        %v1129 = vpop.f32.mrf.mxu0
        %v1130 = vpop.f32.mrf.mxu0
        %v1131 = vadd.f32 %v970, %v1130
        %v1132 = vpop.f32.mrf.mxu0
        %1133 = vdwg.mxu0
        %1134 = vxpose.xlu0.b32.start [1/16] %v1008, 128
        %1135 = vxpose.xlu0.b32.cont [2/16] %v1011, 128
        %1136 = vxpose.xlu0.b32.cont [3/16] %v1016, 128
        %1137 = vxpose.xlu0.b32.cont [4/16] %v1019, 128
        %1138 = vxpose.xlu0.b32.cont [5/16] %v1024, 128
        %1139 = vxpose.xlu0.b32.cont [6/16] %v1027, 128
        %1140 = vxpose.xlu0.b32.cont [7/16] %v1032, 128
        %1141 = vxpose.xlu0.b32.cont [8/16] %v1035, 128
        %1142 = vxpose.xlu0.b32.cont [9/16] %v1040, 128
        %1143 = vxpose.xlu0.b32.cont [10/16] %v1043, 128
        %1144 = vxpose.xlu0.b32.cont [11/16] %v1048, 128
        %1145 = vxpose.xlu0.b32.cont [12/16] %v1051, 128
        %1146 = vxpose.xlu0.b32.cont [13/16] %v1056, 128
        %1147 = vxpose.xlu0.b32.cont [14/16] %v1059, 128
        %1148 = vxpose.xlu0.b32.cont [15/16] %v1064, 128
        %1149 = vxpose.xlu0.b32.end [16/16] %v1067, 128
        %v1150 = vpop.trf.xlu0
        %v1151 = vpop.trf.xlu0
        %v1152 = vpop.trf.xlu0
        %v1153 = vpop.trf.xlu0
        %v1154 = vpop.trf.xlu0
        %v1155 = vpop.trf.xlu0
        %v1156 = vpop.trf.xlu0
        %v1157 = vpop.trf.xlu0
        %v1158 = vpop.trf.xlu0
        %v1159 = vpop.trf.xlu0
        %v1160 = vpop.trf.xlu0
        %v1161 = vpop.trf.xlu0
        %v1162 = vpop.trf.xlu0
        %v1163 = vpop.trf.xlu0
        %v1164 = vpop.trf.xlu0
        %v1165 = vpop.trf.xlu0
        %1166 = vxpose.xlu0.b32.start [1/16] %v1072, 128
        %1167 = vxpose.xlu0.b32.cont [2/16] %v1075, 128
        %1168 = vxpose.xlu0.b32.cont [3/16] %v1080, 128
        %1169 = vxpose.xlu0.b32.cont [4/16] %v1083, 128
        %1170 = vxpose.xlu0.b32.cont [5/16] %v1088, 128
        %1171 = vxpose.xlu0.b32.cont [6/16] %v1091, 128
        %1172 = vxpose.xlu0.b32.cont [7/16] %v1096, 128
        %1173 = vxpose.xlu0.b32.cont [8/16] %v1099, 128
        %1174 = vxpose.xlu0.b32.cont [9/16] %v1104, 128
        %1175 = vxpose.xlu0.b32.cont [10/16] %v1107, 128
        %1176 = vxpose.xlu0.b32.cont [11/16] %v1112, 128
        %1177 = vxpose.xlu0.b32.cont [12/16] %v1115, 128
        %1178 = vxpose.xlu0.b32.cont [13/16] %v1120, 128
        %1179 = vxpose.xlu0.b32.cont [14/16] %v1123, 128
        %1180 = vxpose.xlu0.b32.cont [15/16] %v1128, 128
        %1181 = vxpose.xlu0.b32.end [16/16] %v1131, 128
        %v1182 = vpop.trf.xlu0
        %v1183 = vpop.trf.xlu0
        %v1184 = vpop.trf.xlu0
        %v1185 = vpop.trf.xlu0
        %v1186 = vpop.trf.xlu0
        %v1187 = vpop.trf.xlu0
        %v1188 = vpop.trf.xlu0
        %v1189 = vpop.trf.xlu0
        %v1190 = vpop.trf.xlu0
        %v1191 = vpop.trf.xlu0
        %v1192 = vpop.trf.xlu0
        %v1193 = vpop.trf.xlu0
        %v1194 = vpop.trf.xlu0
        %v1195 = vpop.trf.xlu0
        %v1196 = vpop.trf.xlu0
        %v1197 = vpop.trf.xlu0
        %v1198 = vsub.f32 0.0, %v1150
        %v1199 = vsub.f32 0.0, %v1182
        %v1200 = vsub.f32 0.0, %v1151
        %v1201 = vsub.f32 0.0, %v1183
        %v1202 = vsub.f32 0.0, %v1152
        %v1203 = vsub.f32 0.0, %v1184
        %v1204 = vsub.f32 0.0, %v1153
        %v1205 = vsub.f32 0.0, %v1185
        %v1206 = vmul.f32 %v1198, 1.442695
        %v1207 = vpow.pop %v1206
        %v1208 = vmul.f32 %v1199, 1.442695
        %v1209 = vpow.pop %v1208
        %v1210 = vmul.f32 %v1200, 1.442695
        %v1211 = vpow.pop %v1210
        %v1212 = vmul.f32 %v1201, 1.442695
        %v1213 = vpow.pop %v1212
        %v1214 = vmul.f32 %v1202, 1.442695
        %v1215 = vpow.pop %v1214
        %v1216 = vmul.f32 %v1203, 1.442695
        %v1217 = vpow.pop %v1216
        %v1218 = vmul.f32 %v1204, 1.442695
        %v1219 = vpow.pop %v1218
        %v1220 = vmul.f32 %v1205, 1.442695
        %v1221 = vpow.pop %v1220
        %v1222 = vadd.f32 %v1207, 1.0
        %v1223 = vadd.f32 %v1209, 1.0
        %v1224 = vadd.f32 %v1211, 1.0
        %v1225 = vadd.f32 %v1213, 1.0
        %v1226 = vadd.f32 %v1215, 1.0
        %v1227 = vadd.f32 %v1217, 1.0
        %v1228 = vadd.f32 %v1219, 1.0
        %v1229 = vadd.f32 %v1221, 1.0
        %v1230 = vrcp.pop %v1222
        %v1231 = vmul.f32 1.0, %v1230
        %v1232 = vrcp.pop %v1223
        %v1233 = vmul.f32 1.0, %v1232
        %v1234 = vrcp.pop %v1224
        %v1235 = vmul.f32 1.0, %v1234
        %v1236 = vrcp.pop %v1225
        %v1237 = vmul.f32 1.0, %v1236
        %v1238 = vrcp.pop %v1226
        %v1239 = vmul.f32 1.0, %v1238
        %v1240 = vrcp.pop %v1227
        %v1241 = vmul.f32 1.0, %v1240
        %v1242 = vrcp.pop %v1228
        %v1243 = vmul.f32 1.0, %v1242
        %v1244 = vrcp.pop %v1229
        %v1245 = vmul.f32 1.0, %v1244
        %v1246 = vsub.f32 0.0, %v1154
        %v1247 = vsub.f32 0.0, %v1186
        %v1248 = vsub.f32 0.0, %v1155
        %v1249 = vsub.f32 0.0, %v1187
        %v1250 = vsub.f32 0.0, %v1156
        %v1251 = vsub.f32 0.0, %v1188
        %v1252 = vsub.f32 0.0, %v1157
        %v1253 = vsub.f32 0.0, %v1189
        %v1254 = vmul.f32 %v1246, 1.442695
        %v1255 = vpow.pop %v1254
        %v1256 = vmul.f32 %v1247, 1.442695
        %v1257 = vpow.pop %v1256
        %v1258 = vmul.f32 %v1248, 1.442695
        %v1259 = vpow.pop %v1258
        %v1260 = vmul.f32 %v1249, 1.442695
        %v1261 = vpow.pop %v1260
        %v1262 = vmul.f32 %v1250, 1.442695
        %v1263 = vpow.pop %v1262
        %v1264 = vmul.f32 %v1251, 1.442695
        %v1265 = vpow.pop %v1264
        %v1266 = vmul.f32 %v1252, 1.442695
        %v1267 = vpow.pop %v1266
        %v1268 = vmul.f32 %v1253, 1.442695
        %v1269 = vpow.pop %v1268
        %v1270 = vadd.f32 %v1255, 1.0
        %v1271 = vadd.f32 %v1257, 1.0
        %v1272 = vadd.f32 %v1259, 1.0
        %v1273 = vadd.f32 %v1261, 1.0
        %v1274 = vadd.f32 %v1263, 1.0
        %v1275 = vadd.f32 %v1265, 1.0
        %v1276 = vadd.f32 %v1267, 1.0
        %v1277 = vadd.f32 %v1269, 1.0
        %v1278 = vrcp.pop %v1270
        %v1279 = vmul.f32 1.0, %v1278
        %v1280 = vrcp.pop %v1271
        %v1281 = vmul.f32 1.0, %v1280
        %v1282 = vrcp.pop %v1272
        %v1283 = vmul.f32 1.0, %v1282
        %v1284 = vrcp.pop %v1273
        %v1285 = vmul.f32 1.0, %v1284
        %v1286 = vrcp.pop %v1274
        %v1287 = vmul.f32 1.0, %v1286
        %v1288 = vrcp.pop %v1275
        %v1289 = vmul.f32 1.0, %v1288
        %v1290 = vrcp.pop %v1276
        %v1291 = vmul.f32 1.0, %v1290
        %v1292 = vrcp.pop %v1277
        %v1293 = vmul.f32 1.0, %v1292
        %v1294 = vsub.f32 0.0, %v1158
        %v1295 = vsub.f32 0.0, %v1190
        %v1296 = vsub.f32 0.0, %v1159
        %v1297 = vsub.f32 0.0, %v1191
        %v1298 = vsub.f32 0.0, %v1160
        %v1299 = vsub.f32 0.0, %v1192
        %v1300 = vsub.f32 0.0, %v1161
        %v1301 = vsub.f32 0.0, %v1193
        %v1302 = vmul.f32 %v1294, 1.442695
        %v1303 = vpow.pop %v1302
        %v1304 = vmul.f32 %v1295, 1.442695
        %v1305 = vpow.pop %v1304
        %v1306 = vmul.f32 %v1296, 1.442695
        %v1307 = vpow.pop %v1306
        %v1308 = vmul.f32 %v1297, 1.442695
        %v1309 = vpow.pop %v1308
        %v1310 = vmul.f32 %v1298, 1.442695
        %v1311 = vpow.pop %v1310
        %v1312 = vmul.f32 %v1299, 1.442695
        %v1313 = vpow.pop %v1312
        %v1314 = vmul.f32 %v1300, 1.442695
        %v1315 = vpow.pop %v1314
        %v1316 = vmul.f32 %v1301, 1.442695
        %v1317 = vpow.pop %v1316
        %v1318 = vadd.f32 %v1303, 1.0
        %v1319 = vadd.f32 %v1305, 1.0
        %v1320 = vadd.f32 %v1307, 1.0
        %v1321 = vadd.f32 %v1309, 1.0
        %v1322 = vadd.f32 %v1311, 1.0
        %v1323 = vadd.f32 %v1313, 1.0
        %v1324 = vadd.f32 %v1315, 1.0
        %v1325 = vadd.f32 %v1317, 1.0
        %v1326 = vrcp.pop %v1318
        %v1327 = vmul.f32 1.0, %v1326
        %v1328 = vrcp.pop %v1319
        %v1329 = vmul.f32 1.0, %v1328
        %v1330 = vrcp.pop %v1320
        %v1331 = vmul.f32 1.0, %v1330
        %v1332 = vrcp.pop %v1321
        %v1333 = vmul.f32 1.0, %v1332
        %v1334 = vrcp.pop %v1322
        %v1335 = vmul.f32 1.0, %v1334
        %v1336 = vrcp.pop %v1323
        %v1337 = vmul.f32 1.0, %v1336
        %v1338 = vrcp.pop %v1324
        %v1339 = vmul.f32 1.0, %v1338
        %v1340 = vrcp.pop %v1325
        %v1341 = vmul.f32 1.0, %v1340
        %v1342 = vtanh.pop %v1162
        %v1343 = vtanh.pop %v1194
        %v1344 = vtanh.pop %v1163
        %v1345 = vtanh.pop %v1195
        %v1346 = vtanh.pop %v1164
        %v1347 = vtanh.pop %v1196
        %v1348 = vtanh.pop %v1165
        %v1349 = vtanh.pop %v1197
        %v1350 = vld [vmem:[%s247] sm:$0xff]
        %v1351 = vld [vmem:[%s247 + $0x8] sm:$0xff]
        %v1352 = vld [vmem:[%s247 + $0x10] sm:$0xff]
        %v1353 = vld [vmem:[%s247 + $0x18] sm:$0xff]
        %v1354 = vld [vmem:[%s247 + $0x20] sm:$0xff]
        %v1355 = vld [vmem:[%s247 + $0x28] sm:$0xff]
        %v1356 = vld [vmem:[%s247 + $0x30] sm:$0xff]
        %v1357 = vld [vmem:[%s247 + $0x38] sm:$0xff]
        %v1358 = vmul.f32 %v1279, %v1350
        %v1359 = vmul.f32 %v1281, %v1351
        %v1360 = vmul.f32 %v1283, %v1352
        %v1361 = vmul.f32 %v1285, %v1353
        %v1362 = vmul.f32 %v1287, %v1354
        %v1363 = vmul.f32 %v1289, %v1355
        %v1364 = vmul.f32 %v1291, %v1356
        %v1365 = vmul.f32 %v1293, %v1357
        %v1366 = vmul.f32 %v1231, %v1342
        %v1367 = vmul.f32 %v1233, %v1343
        %v1368 = vmul.f32 %v1235, %v1344
        %v1369 = vmul.f32 %v1237, %v1345
        %v1370 = vmul.f32 %v1239, %v1346
        %v1371 = vmul.f32 %v1241, %v1347
        %v1372 = vmul.f32 %v1243, %v1348
        %v1373 = vmul.f32 %v1245, %v1349
        %v1374 = vadd.f32 %v1358, %v1366
        %v1375 = vadd.f32 %v1359, %v1367
        %v1376 = vadd.f32 %v1360, %v1368
        %v1377 = vadd.f32 %v1361, %v1369
        %v1378 = vadd.f32 %v1362, %v1370
        %v1379 = vadd.f32 %v1363, %v1371
        %v1380 = vadd.f32 %v1364, %v1372
        %v1381 = vadd.f32 %v1365, %v1373
        %v1382 = vtanh.pop %v1374
        %v1383 = vtanh.pop %v1375
        %v1384 = vtanh.pop %v1376
        %v1385 = vtanh.pop %v1377
        %v1386 = vtanh.pop %v1378
        %v1387 = vtanh.pop %v1379
        %v1388 = vtanh.pop %v1380
        %v1389 = vtanh.pop %v1381
        %v1390 = vmul.f32 %v1327, %v1382
        %v1391 = vmul.f32 %v1329, %v1383
        %v1392 = vmul.f32 %v1331, %v1384
        %v1393 = vmul.f32 %v1333, %v1385
        %v1394 = vmul.f32 %v1335, %v1386
        %v1395 = vmul.f32 %v1337, %v1387
        %v1396 = vmul.f32 %v1339, %v1388
        %v1397 = vmul.f32 %v1341, %v1389
        %1398 = vst [vmem:[%s274] sm:$0xff] %v1390
        %1399 = vst [vmem:[%s274 + $0x8] sm:$0xff] %v1391
        %1400 = vst [vmem:[%s274 + $0x10] sm:$0xff] %v1392
        %1401 = vst [vmem:[%s274 + $0x18] sm:$0xff] %v1393
        %1402 = vst [vmem:[%s274 + $0x20] sm:$0xff] %v1394
        %1403 = vst [vmem:[%s274 + $0x28] sm:$0xff] %v1395
        %1404 = vst [vmem:[%s274 + $0x30] sm:$0xff] %v1396
        %1405 = vst [vmem:[%s274 + $0x38] sm:$0xff] %v1397
        %1406 = vst [vmem:[%s281] sm:$0xff] %v1374
        %1407 = vst [vmem:[%s281 + $0x8] sm:$0xff] %v1375
        %1408 = vst [vmem:[%s281 + $0x10] sm:$0xff] %v1376
        %1409 = vst [vmem:[%s281 + $0x18] sm:$0xff] %v1377
        %1410 = vst [vmem:[%s281 + $0x20] sm:$0xff] %v1378
        %1411 = vst [vmem:[%s281 + $0x28] sm:$0xff] %v1379
        %1412 = vst [vmem:[%s281 + $0x30] sm:$0xff] %v1380
        %1413 = vst [vmem:[%s281 + $0x38] sm:$0xff] %v1381
        %s1414 = sand.u32 %s122, 1
        %s1415 = sand.u32 %s122, 1
        %s1416 = smul.addr %s1415, 64
        %s1417 = scalar_lea.vmem [#allocation3], %s1416
        %s1418 = sand.u32 %s148, 1
        %s1419 = scalar_lea.sflag [#allocation5], %s1418
        %s1420 = sand.u32 %s148, 1
        %s1421 = smul.addr %s1420, 64
        %s1422 = scalar_lea.vmem [#allocation4], %s1421
        // Predicated region
        $region60: #{convlstm_forward.2} parent=54 // pred_check
          %p1423 = pneg %p132
        $region61: #{convlstm_forward.2} parent=54 // pred_check_branch
          %1425 = sbr.rel (%p1423) target = $region63
        $region62: #{convlstm_forward.2} parent=54 // pred_region
          %s1426 = smul.u32 2, %s20
          %s1427 = smul.addr %s1426, 8
          %s1428 = scalar_lea.vmem %s4, %s1427
          // Predicated region
          $region64: #{convlstm_forward.2} parent=62 // pred_check
            _
          $region65: #{convlstm_forward.2} parent=62 // pred_check_branch
            %1430 = sbr.rel (0) target = $region67
          $region66: #{convlstm_forward.2} parent=62 // pred_region
            // Predicated region
            $region68: #{convlstm_forward.2} parent=66 // pred_check
              _
            $region69: #{convlstm_forward.2} parent=66 // pred_check_branch
              %1432 = sbr.rel (0) target = $region71
            $region70: #{convlstm_forward.2} parent=66 // pred_region
              loop: start=0, step=1, limit=1
              $region72: #{convlstm_forward.2} parent=70 // loop_pre_header
                _
              $region73: #{convlstm_forward.2} parent=70 // loop_header
                %s1434 = sphi 0, %s1438
                %p1435 = scmp.ge.s32.totalorder %s1434, 1
                %s1439 = sphi %s1417, %s1417
                %s1440 = sphi %s1428, %s1428
              $region74: #{convlstm_forward.2} parent=70 // loop_header_branch
                %1437 = sbr.rel (%p1435) target = $region78
              $region75: #{convlstm_forward.2} parent=70 // loop_body
                %v1441 = vld [vmem:[%s1439] sm:$0xff]
                %1442 = vst [vmem:[%s1440] sm:$0xff] %v1441
                %v1443 = vld [vmem:[%s1439 + $0x8] sm:$0xff]
                %1444 = vst [vmem:[%s1440 + $0x8] sm:$0xff] %v1443
                %v1445 = vld [vmem:[%s1439 + $0x10] sm:$0xff]
                %1446 = vst [vmem:[%s1440 + $0x20] sm:$0xff] %v1445
                %v1447 = vld [vmem:[%s1439 + $0x18] sm:$0xff]
                %1448 = vst [vmem:[%s1440 + $0x28] sm:$0xff] %v1447
                %v1449 = vld [vmem:[%s1439 + $0x20] sm:$0xff]
                %1450 = vst [vmem:[%s1440 + $0x40] sm:$0xff] %v1449
                %v1451 = vld [vmem:[%s1439 + $0x28] sm:$0xff]
                %1452 = vst [vmem:[%s1440 + $0x48] sm:$0xff] %v1451
                %v1453 = vld [vmem:[%s1439 + $0x30] sm:$0xff]
                %1454 = vst [vmem:[%s1440 + $0x60] sm:$0xff] %v1453
                %v1455 = vld [vmem:[%s1439 + $0x38] sm:$0xff]
                %1456 = vst [vmem:[%s1440 + $0x68] sm:$0xff] %v1455
              $region76: #{convlstm_forward.2} parent=70 // loop_footer
                %s1438 = sadd.s32 1, %s1434
              $region77: #{convlstm_forward.2} parent=70 // loop_footer_branch
                %1433 = sbr.rel target = $region73
              $region78: #{convlstm_forward.2} parent=70 // loop_exit
                _
            $region71: #{convlstm_forward.2} parent=66 // pred_fallthru
              _
            // Predicated region
            $region79: #{convlstm_forward.2} parent=66 // pred_check
              _
            $region80: #{convlstm_forward.2} parent=66 // pred_check_branch
              %1458 = sbr.rel target = $region82
            $region81: #{convlstm_forward.2} parent=66 // pred_region
              _
            $region82: #{convlstm_forward.2} parent=66 // pred_fallthru
              _
          $region67: #{convlstm_forward.2} parent=62 // pred_fallthru
            _
          %1459 = vnop
        $region63: #{convlstm_forward.2} parent=54 // pred_fallthru
          _
        // Predicated region
        $region83: #{convlstm_forward.2} parent=54 // pred_check
          %p1460 = pneg %p158
        $region84: #{convlstm_forward.2} parent=54 // pred_check_branch
          %1462 = sbr.rel (%p1460) target = $region86
        $region85: #{convlstm_forward.2} parent=54 // pred_region
          %s1463 = smul.u32 2, %s20
          %s1465 = ssub.s32 1024, 1024
          %1466 = vsyncadd %s1419, %s1465
          %s1467 = smul.addr %s1463, 128
          %s1468 = scalar_lea.hbm %s5, %s1467
          %s1469 = sshll.u32 %s1422, 4
          %s1470 = int_to_ptr.vmem [resolvable:$true] %s1469
          %1475 = dma.vmem_to_hbm [thread:$0]  %s1470, 1024, %s1468, %s1419, 256, 512, 16
        $region86: #{convlstm_forward.2} parent=54 // pred_fallthru
          _
      $region55: #{convlstm_forward.2} parent=5 // pred_fallthru
        _
      %p1476 = scmp.le.s32.totalorder 2, %s15
      // Predicated region
      $region87: #{convlstm_forward.2} parent=5 // pred_check
        %p1477 = pneg %p1476
      $region88: #{convlstm_forward.2} parent=5 // pred_check_branch
        %1479 = sbr.rel (%p1477) target = $region90
      $region89: #{convlstm_forward.2} parent=5 // pred_region
        %s1480 = ssub.s32 %s15, 2
        // Predicated region
        $region91: #{convlstm_forward.2} parent=89 // pred_check
          %p1481 = pneg %p138
        $region92: #{convlstm_forward.2} parent=89 // pred_check_branch
          %1483 = sbr.rel (%p1481) target = $region94
        $region93: #{convlstm_forward.2} parent=89 // pred_region
          %s1484 = sand.u32 %s123, 1
          %s1485 = sand.u32 %s123, 1
          %s1486 = smul.addr %s1485, 64
          %s1487 = scalar_lea.vmem [#allocation3], %s1486
        $region94: #{convlstm_forward.2} parent=89 // pred_fallthru
          _
        // Predicated region
        $region95: #{convlstm_forward.2} parent=89 // pred_check
          %p1488 = pneg %p164
        $region96: #{convlstm_forward.2} parent=89 // pred_check_branch
          %1490 = sbr.rel (%p1488) target = $region98
        $region97: #{convlstm_forward.2} parent=89 // pred_region
          %s1491 = sand.u32 %s149, 1
          %s1492 = scalar_lea.sflag [#allocation5], %s1491
          %s1493 = sand.u32 %s149, 1
          %s1494 = smul.addr %s1493, 64
          %s1495 = scalar_lea.vmem [#allocation4], %s1494
          %1496 = dma.done %s1492, 1024
        $region98: #{convlstm_forward.2} parent=89 // pred_fallthru
          _
      $region90: #{convlstm_forward.2} parent=5 // pred_fallthru
        _
    $region6: #{convlstm_forward.2} parent=1 // loop_footer
      %s19 = sadd.s32 1, %s15
    $region7: #{convlstm_forward.2} parent=1 // loop_footer_branch
      %14 = sbr.rel target = $region3
    $region8: #{convlstm_forward.2} parent=1 // loop_exit
      _
    %1497 = vsyncpa [#allocation5], 1
    %s1498 = scalar_lea.sflag [#allocation5], 1
    %1499 = vsyncpa %s1498, 1

// kernel: convlstm_forward.3
$region0: #{convlstm_forward.3}
  #allocation0 [shape = 'u32[]', space=smem, size = 0x4, offset = 0x4, fixed_abs, tag = 'smem constant byte address 0x4 - core index']
  #allocation1 [shape = 'u32[144,128]{1,0:T(1,128)}', space=vmem, size = 0x12000, scoped, tag = 'internal scratch']
  %s0 = inlined_call_operand.vmem [shape: bf16[512,640], index: 0, kind: input, shape index: {}]
  %s1 = inlined_call_operand.vmem [shape: bf16[640,128], index: 1, kind: input, shape index: {}]
  %s2 = inlined_call_operand.vmem [shape: f32[1,128], index: 2, kind: input, shape index: {}]
  %s3 = inlined_call_operand.vmem [shape: f32[32,512], index: 3, kind: input, shape index: {}]
  %s4 = inlined_call_operand.vmem [shape: f32[32,512], index: 4, kind: output, shape index: {0}]
  %s5 = inlined_call_operand.hbm [shape: f32[32,512], index: 5, kind: output, shape index: {1}]
  %6 = xla_tuple %s4, %s5
  %s7 = sld [smem:[#allocation0]]
  $region99: #{convlstm_forward.3} parent=0
    _
  %s9 = ssub.s32 1, %s7
  %s10 = scalar_select 0, %s9, %s7
  $region1: #{convlstm_forward.3} parent=0
    #allocation2 [shape = 'u8[65536]{0}', space=vmem, size = 0x10000, scoped, tag = 'input window, operand 3']
    #allocation3 [shape = 'u8[65536]{0}', space=vmem, size = 0x10000, scoped, tag = 'output window, operand 0']
    #allocation4 [shape = 'u8[65536]{0}', space=vmem, size = 0x10000, scoped, tag = 'output window, operand 1']
    #allocation5 [shape = 's32[2]{0}', space=sflag, size = 0x8, scoped, tag = 'scoped memory for convlstm_forward.3']
    %11 = vsyncpa [#allocation5], 0
    %s12 = scalar_lea.sflag [#allocation5], 1
    %13 = vsyncpa %s12, 0
    loop: start=0, step=1, limit=4
    $region2: #{convlstm_forward.3} parent=1 // loop_pre_header
      _
    $region3: #{convlstm_forward.3} parent=1 // loop_header
      %s15 = sphi 0, %s19
      %p16 = scmp.ge.s32.totalorder %s15, 4
      %s25 = sphi 0, %s27
      %s28 = sphi 0, %s25
      %s29 = sphi 0, %s28
      %s45 = sphi 0, %s29
      %s49 = sphi 0, %s49
      %s51 = sphi 0, %s49
      %s52 = sphi 0, %s51
      %s66 = sphi 0, %s52
      %s70 = sphi 0, %s70
      %s72 = sphi 0, %s70
      %s73 = sphi 0, %s72
      %s87 = sphi 0, %s73
      %s93 = sphi 0, %s95
      %s96 = sphi 0, %s93
      %s97 = sphi 0, %s96
      %s113 = sphi 0, %s97
      %s119 = sphi 0, %s121
      %s122 = sphi 0, %s119
      %s123 = sphi 0, %s122
      %s139 = sphi 0, %s123
      %s145 = sphi 0, %s147
      %s148 = sphi 0, %s145
      %s149 = sphi 0, %s148
      %s165 = sphi 0, %s149
    $region4: #{convlstm_forward.3} parent=1 // loop_header_branch
      %18 = sbr.rel (%p16) target = $region8
    $region5: #{convlstm_forward.3} parent=1 // loop_body
      %s20 = ssub.s32 %s15, 1
      %s21 = ssub.s32 %s15, 2
      %s22 = sadd.s32 %s15, 1
      %s23 = ssub.s32 %s15, %s22
      %p24 = scmp.eq.s32.totalorder %s23, 0
      %s26 = sadd.s32 %s25, 1
      %s27 = scalar_select %p24, %s25, %s26
      %p30 = pneg %p24
      %p31 = scmp.eq.s32.totalorder %s15, 1
      %p32 = por %p30, %p31
      %p33 = scmp.ne.s32.totalorder %s25, %s28
      %p34 = scmp.eq.s32.totalorder %s15, 0
      %p35 = por %p33, %p34
      %p36 = scmp.ne.s32.totalorder %s25, %s28
      %p37 = scmp.eq.s32.totalorder %s20, 1
      %p38 = por %p36, %p37
      %p39 = scmp.ne.s32.totalorder %s28, %s29
      %p40 = scmp.eq.s32.totalorder %s20, 0
      %p41 = por %p39, %p40
      %p42 = scmp.ne.s32.totalorder %s28, %s29
      %p43 = scmp.eq.s32.totalorder %s21, 1
      %p44 = por %p42, %p43
      %p46 = scmp.ne.s32.totalorder %s29, %s45
      %p47 = scmp.eq.s32.totalorder %s21, 0
      %p48 = por %p46, %p47
      %s50 = sadd.s32 %s49, 1
      %p53 = scmp.eq.s32.totalorder %s15, 1
      %p54 = scmp.ne.s32.totalorder %s49, %s51
      %p55 = scmp.eq.s32.totalorder %s15, 0
      %p56 = por %p54, %p55
      %p57 = scmp.ne.s32.totalorder %s49, %s51
      %p58 = scmp.eq.s32.totalorder %s20, 1
      %p59 = por %p57, %p58
      %p60 = scmp.ne.s32.totalorder %s51, %s52
      %p61 = scmp.eq.s32.totalorder %s20, 0
      %p62 = por %p60, %p61
      %p63 = scmp.ne.s32.totalorder %s51, %s52
      %p64 = scmp.eq.s32.totalorder %s21, 1
      %p65 = por %p63, %p64
      %p67 = scmp.ne.s32.totalorder %s52, %s66
      %p68 = scmp.eq.s32.totalorder %s21, 0
      %p69 = por %p67, %p68
      %s71 = sadd.s32 %s70, 1
      %p74 = scmp.eq.s32.totalorder %s15, 1
      %p75 = scmp.ne.s32.totalorder %s70, %s72
      %p76 = scmp.eq.s32.totalorder %s15, 0
      %p77 = por %p75, %p76
      %p78 = scmp.ne.s32.totalorder %s70, %s72
      %p79 = scmp.eq.s32.totalorder %s20, 1
      %p80 = por %p78, %p79
      %p81 = scmp.ne.s32.totalorder %s72, %s73
      %p82 = scmp.eq.s32.totalorder %s20, 0
      %p83 = por %p81, %p82
      %p84 = scmp.ne.s32.totalorder %s72, %s73
      %p85 = scmp.eq.s32.totalorder %s21, 1
      %p86 = por %p84, %p85
      %p88 = scmp.ne.s32.totalorder %s73, %s87
      %p89 = scmp.eq.s32.totalorder %s21, 0
      %p90 = por %p88, %p89
      %s91 = ssub.s32 %s15, %s22
      %p92 = scmp.eq.s32.totalorder %s91, 0
      %s94 = sadd.s32 %s93, 1
      %s95 = scalar_select %p92, %s93, %s94
      %p98 = pneg %p92
      %p99 = scmp.eq.s32.totalorder %s15, 1
      %p100 = por %p98, %p99
      %p101 = scmp.ne.s32.totalorder %s93, %s96
      %p102 = scmp.eq.s32.totalorder %s15, 0
      %p103 = por %p101, %p102
      %p104 = scmp.ne.s32.totalorder %s93, %s96
      %p105 = scmp.eq.s32.totalorder %s20, 1
      %p106 = por %p104, %p105
      %p107 = scmp.ne.s32.totalorder %s96, %s97
      %p108 = scmp.eq.s32.totalorder %s20, 0
      %p109 = por %p107, %p108
      %p110 = scmp.ne.s32.totalorder %s96, %s97
      %p111 = scmp.eq.s32.totalorder %s21, 1
      %p112 = por %p110, %p111
      %p114 = scmp.ne.s32.totalorder %s97, %s113
      %p115 = scmp.eq.s32.totalorder %s21, 0
      %p116 = por %p114, %p115
      %s117 = ssub.s32 %s15, %s22
      %p118 = scmp.eq.s32.totalorder %s117, 0
      %s120 = sadd.s32 %s119, 1
      %s121 = scalar_select %p118, %s119, %s120
      %p124 = pneg %p118
      %p125 = scmp.eq.s32.totalorder %s15, 1
      %p126 = por %p124, %p125
      %p127 = scmp.ne.s32.totalorder %s119, %s122
      %p128 = scmp.eq.s32.totalorder %s15, 0
      %p129 = por %p127, %p128
      %p130 = scmp.ne.s32.totalorder %s119, %s122
      %p131 = scmp.eq.s32.totalorder %s20, 1
      %p132 = por %p130, %p131
      %p133 = scmp.ne.s32.totalorder %s122, %s123
      %p134 = scmp.eq.s32.totalorder %s20, 0
      %p135 = por %p133, %p134
      %p136 = scmp.ne.s32.totalorder %s122, %s123
      %p137 = scmp.eq.s32.totalorder %s21, 1
      %p138 = por %p136, %p137
      %p140 = scmp.ne.s32.totalorder %s123, %s139
      %p141 = scmp.eq.s32.totalorder %s21, 0
      %p142 = por %p140, %p141
      %s143 = ssub.s32 %s15, %s22
      %p144 = scmp.eq.s32.totalorder %s143, 0
      %s146 = sadd.s32 %s145, 1
      %s147 = scalar_select %p144, %s145, %s146
      %p150 = pneg %p144
      %p151 = scmp.eq.s32.totalorder %s15, 1
      %p152 = por %p150, %p151
      %p153 = scmp.ne.s32.totalorder %s145, %s148
      %p154 = scmp.eq.s32.totalorder %s15, 0
      %p155 = por %p153, %p154
      %p156 = scmp.ne.s32.totalorder %s145, %s148
      %p157 = scmp.eq.s32.totalorder %s20, 1
      %p158 = por %p156, %p157
      %p159 = scmp.ne.s32.totalorder %s148, %s149
      %p160 = scmp.eq.s32.totalorder %s20, 0
      %p161 = por %p159, %p160
      %p162 = scmp.ne.s32.totalorder %s148, %s149
      %p163 = scmp.eq.s32.totalorder %s21, 1
      %p164 = por %p162, %p163
      %p166 = scmp.ne.s32.totalorder %s149, %s165
      %p167 = scmp.eq.s32.totalorder %s21, 0
      %p168 = por %p166, %p167
      %p169 = scmp.le.s32.totalorder 1, %s15
      %p170 = scmp.lt.s32.totalorder %s15, 3
      %p171 = pnand %p169, %p170
      %p172 = pneg %p171
      // Predicated region
      $region9: #{convlstm_forward.3} parent=5 // pred_check
        _
      $region10: #{convlstm_forward.3} parent=5 // pred_check_branch
        %174 = sbr.rel (%p171) target = $region12
      $region11: #{convlstm_forward.3} parent=5 // pred_region
        %s175 = ssub.s32 %s15, 1
        // Predicated region
        $region13: #{convlstm_forward.3} parent=11 // pred_check
          %p176 = pneg %p62
        $region14: #{convlstm_forward.3} parent=11 // pred_check_branch
          %178 = sbr.rel (%p176) target = $region16
        $region15: #{convlstm_forward.3} parent=11 // pred_region
          _
        $region16: #{convlstm_forward.3} parent=11 // pred_fallthru
          _
        // Predicated region
        $region17: #{convlstm_forward.3} parent=11 // pred_check
          %p179 = pneg %p83
        $region18: #{convlstm_forward.3} parent=11 // pred_check_branch
          %181 = sbr.rel (%p179) target = $region20
        $region19: #{convlstm_forward.3} parent=11 // pred_region
          _
        $region20: #{convlstm_forward.3} parent=11 // pred_fallthru
          _
      $region12: #{convlstm_forward.3} parent=5 // pred_fallthru
        _
      %p182 = scmp.lt.s32.totalorder %s15, 2
      // Predicated region
      $region21: #{convlstm_forward.3} parent=5 // pred_check
        %p183 = pneg %p182
      $region22: #{convlstm_forward.3} parent=5 // pred_check_branch
        %185 = sbr.rel (%p183) target = $region24
      $region23: #{convlstm_forward.3} parent=5 // pred_region
        // Predicated region
        $region25: #{convlstm_forward.3} parent=23 // pred_check
          %p186 = pneg %p35
        $region26: #{convlstm_forward.3} parent=23 // pred_check_branch
          %188 = sbr.rel (%p186) target = $region28
        $region27: #{convlstm_forward.3} parent=23 // pred_region
          %s189 = smul.u32 32, %s15
          %p190 = scmp.lt.s32.totalorder %s189, 63
          %s191 = scalar_select %p190, %s189, 63
          %s192 = smul.addr %s191, 5
          %s193 = smul.addr %s192, 4
          %s194 = scalar_lea.vmem %s0, %s193
          %s195 = smul.u32 32, %s15
        $region28: #{convlstm_forward.3} parent=23 // pred_fallthru
          _
        // Predicated region
        $region29: #{convlstm_forward.3} parent=23 // pred_check
          %p196 = pneg %p103
        $region30: #{convlstm_forward.3} parent=23 // pred_check_branch
          %198 = sbr.rel (%p196) target = $region32
        $region31: #{convlstm_forward.3} parent=23 // pred_region
          %s199 = sand.u32 %s93, 1
          %s200 = sand.u32 %s93, 1
          %s201 = smul.addr %s200, 64
          %s202 = scalar_lea.vmem [#allocation2], %s201
          %s203 = smul.u32 2, %s15
          %s204 = smul.addr %s203, 8
          %s205 = scalar_lea.vmem %s3, %s204
          // Predicated region
          $region33: #{convlstm_forward.3} parent=31 // pred_check
            _
          $region34: #{convlstm_forward.3} parent=31 // pred_check_branch
            %207 = sbr.rel (0) target = $region36
          $region35: #{convlstm_forward.3} parent=31 // pred_region
            // Predicated region
            $region37: #{convlstm_forward.3} parent=35 // pred_check
              _
            $region38: #{convlstm_forward.3} parent=35 // pred_check_branch
              %209 = sbr.rel (0) target = $region40
            $region39: #{convlstm_forward.3} parent=35 // pred_region
              loop: start=0, step=1, limit=1
              $region41: #{convlstm_forward.3} parent=39 // loop_pre_header
                _
              $region42: #{convlstm_forward.3} parent=39 // loop_header
                %s211 = sphi 0, %s215
                %p212 = scmp.ge.s32.totalorder %s211, 1
                %s216 = sphi %s205, %s205
                %s217 = sphi %s202, %s202
              $region43: #{convlstm_forward.3} parent=39 // loop_header_branch
                %214 = sbr.rel (%p212) target = $region47
              $region44: #{convlstm_forward.3} parent=39 // loop_body
                %v218 = vld [vmem:[%s216] sm:$0xff]
                %219 = vst [vmem:[%s217] sm:$0xff] %v218
                %v220 = vld [vmem:[%s216 + $0x8] sm:$0xff]
                %221 = vst [vmem:[%s217 + $0x8] sm:$0xff] %v220
                %v222 = vld [vmem:[%s216 + $0x20] sm:$0xff]
                %223 = vst [vmem:[%s217 + $0x10] sm:$0xff] %v222
                %v224 = vld [vmem:[%s216 + $0x28] sm:$0xff]
                %225 = vst [vmem:[%s217 + $0x18] sm:$0xff] %v224
                %v226 = vld [vmem:[%s216 + $0x40] sm:$0xff]
                %227 = vst [vmem:[%s217 + $0x20] sm:$0xff] %v226
                %v228 = vld [vmem:[%s216 + $0x48] sm:$0xff]
                %229 = vst [vmem:[%s217 + $0x28] sm:$0xff] %v228
                %v230 = vld [vmem:[%s216 + $0x60] sm:$0xff]
                %231 = vst [vmem:[%s217 + $0x30] sm:$0xff] %v230
                %v232 = vld [vmem:[%s216 + $0x68] sm:$0xff]
                %233 = vst [vmem:[%s217 + $0x38] sm:$0xff] %v232
              $region45: #{convlstm_forward.3} parent=39 // loop_footer
                %s215 = sadd.s32 1, %s211
              $region46: #{convlstm_forward.3} parent=39 // loop_footer_branch
                %210 = sbr.rel target = $region42
              $region47: #{convlstm_forward.3} parent=39 // loop_exit
                _
            $region40: #{convlstm_forward.3} parent=35 // pred_fallthru
              _
            // Predicated region
            $region48: #{convlstm_forward.3} parent=35 // pred_check
              _
            $region49: #{convlstm_forward.3} parent=35 // pred_check_branch
              %235 = sbr.rel target = $region51
            $region50: #{convlstm_forward.3} parent=35 // pred_region
              _
            $region51: #{convlstm_forward.3} parent=35 // pred_fallthru
              _
          $region36: #{convlstm_forward.3} parent=31 // pred_fallthru
            _
          %236 = vnop
        $region32: #{convlstm_forward.3} parent=23 // pred_fallthru
          _
      $region24: #{convlstm_forward.3} parent=5 // pred_fallthru
        _
      %p237 = scmp.le.s32.totalorder 1, %s15
      %p238 = scmp.lt.s32.totalorder %s15, 3
      %p239 = pnand %p237, %p238
      %p240 = pneg %p239
      // Predicated region
      $region52: #{convlstm_forward.3} parent=5 // pred_check
        _
      $region53: #{convlstm_forward.3} parent=5 // pred_check_branch
        %242 = sbr.rel (%p239) target = $region55
      $region54: #{convlstm_forward.3} parent=5 // pred_region
        %s243 = ssub.s32 %s15, 1
        %s244 = sand.u32 %s96, 1
        %s245 = sand.u32 %s96, 1
        %s246 = smul.addr %s245, 64
        %s247 = scalar_lea.vmem [#allocation2], %s246
        // Predicated region
        $region56: #{convlstm_forward.3} parent=54 // pred_check
          %p248 = pneg %p109
        $region57: #{convlstm_forward.3} parent=54 // pred_check_branch
          %250 = sbr.rel (%p248) target = $region59
        $region58: #{convlstm_forward.3} parent=54 // pred_region
          _
        $region59: #{convlstm_forward.3} parent=54 // pred_fallthru
          _
        %s251 = smul.u32 32, %s20
        %p252 = scmp.lt.s32.totalorder %s251, 63
        %s253 = scalar_select %p252, %s251, 63
        %s254 = smul.addr %s253, 5
        %s255 = smul.addr %s254, 4
        %s256 = scalar_lea.vmem %s0, %s255
        %p257 = pneg %p41
        %p258 = pneg %p38
        %p259 = pneg %p62
        %p260 = pneg %p59
        %p261 = pneg %p83
        %p262 = pneg %p80
        %s263 = sand.u32 %s96, 1
        %s264 = sand.u32 %s96, 1
        %s265 = smul.addr %s264, 64
        %s266 = scalar_lea.vmem [#allocation2], %s265
        %p267 = pneg %p109
        %p268 = pneg %p106
        %p269 = pneg %p135
        %p270 = pneg %p132
        %s271 = sand.u32 %s122, 1
        %s272 = sand.u32 %s122, 1
        %s273 = smul.addr %s272, 64
        %s274 = scalar_lea.vmem [#allocation3], %s273
        %p275 = pneg %p161
        %p276 = pneg %p158
        %s277 = sand.u32 %s148, 1
        %s278 = scalar_lea.sflag [#allocation5], %s277
        %s279 = sand.u32 %s148, 1
        %s280 = smul.addr %s279, 64
        %s281 = scalar_lea.vmem [#allocation4], %s280
        %s282 = smul.u32 32, %s20
        %p283 = scmp.lt.s32.totalorder %s282, 63
        %s284 = scalar_select %p283, %s282, 63
        %s285 = smul.addr %s284, 5
        %s286 = smul.addr %s285, 4
        %s287 = scalar_lea.vmem %s0, %s286
        %s288 = smul.u32 32, %s20
        %s289 = smul.u32 2, %s20
        %s290 = smul.u32 2, %s20
        %s291 = smul.u32 2, %s20
        %v293 = vld [vmem:[%s287] sm:$0xff]
        %v294 = vld [vmem:[%s287 + $0x8] sm:$0xff]
        %v295 = vld [vmem:[%s287 + $0x10] sm:$0xf]
        %v296 = vld [vmem:[%s287 + $0x14] sm:$0xff]
        %v297 = vld [vmem:[%s287 + $0x1c] sm:$0xff]
        %v298 = vld [vmem:[%s287 + $0x24] sm:$0xf]
        %v299 = vld [vmem:[%s287 + $0x28] sm:$0xff]
        %v300 = vld [vmem:[%s287 + $0x30] sm:$0xff]
        %v301 = vld [vmem:[%s287 + $0x38] sm:$0xf]
        %v302 = vld [vmem:[%s287 + $0x3c] sm:$0xff]
        %v303 = vld [vmem:[%s287 + $0x44] sm:$0xff]
        %v304 = vld [vmem:[%s287 + $0x4c] sm:$0xf]
        %v305 = vld [vmem:[%s287 + $0x50] sm:$0xff]
        %v306 = vld [vmem:[%s287 + $0x58] sm:$0xff]
        %v307 = vld [vmem:[%s287 + $0x60] sm:$0xf]
        %v308 = vld [vmem:[%s287 + $0x64] sm:$0xff]
        %v309 = vld [vmem:[%s287 + $0x6c] sm:$0xff]
        %v310 = vld [vmem:[%s287 + $0x74] sm:$0xf]
        %v311 = vld [vmem:[%s287 + $0x78] sm:$0xff]
        %v312 = vld [vmem:[%s287 + $0x80] sm:$0xff]
        %v313 = vld [vmem:[%s287 + $0x88] sm:$0xf]
        %v314 = vld [vmem:[%s287 + $0x8c] sm:$0xff]
        %v315 = vld [vmem:[%s287 + $0x94] sm:$0xff]
        %v316 = vld [vmem:[%s287 + $0x9c] sm:$0xf]
        %v317 = vld [vmem:[%s287 + $0xa0] sm:$0xff]
        %v318 = vld [vmem:[%s287 + $0xa8] sm:$0xff]
        %v319 = vld [vmem:[%s287 + $0xb0] sm:$0xf]
        %v320 = vld [vmem:[%s287 + $0xb4] sm:$0xff]
        %v321 = vld [vmem:[%s287 + $0xbc] sm:$0xff]
        %v322 = vld [vmem:[%s287 + $0xc4] sm:$0xf]
        %v323 = vld [vmem:[%s287 + $0xc8] sm:$0xff]
        %v324 = vld [vmem:[%s287 + $0xd0] sm:$0xff]
        %v325 = vld [vmem:[%s287 + $0xd8] sm:$0xf]
        %v326 = vld [vmem:[%s287 + $0xdc] sm:$0xff]
        %v327 = vld [vmem:[%s287 + $0xe4] sm:$0xff]
        %v328 = vld [vmem:[%s287 + $0xec] sm:$0xf]
        %v329 = vld [vmem:[%s287 + $0xf0] sm:$0xff]
        %v330 = vld [vmem:[%s287 + $0xf8] sm:$0xff]
        %v331 = vld [vmem:[%s287 + $0x100] sm:$0xf]
        %v332 = vld [vmem:[%s287 + $0x104] sm:$0xff]
        %v333 = vld [vmem:[%s287 + $0x10c] sm:$0xff]
        %v334 = vld [vmem:[%s287 + $0x114] sm:$0xf]
        %v335 = vld [vmem:[%s287 + $0x118] sm:$0xff]
        %v336 = vld [vmem:[%s287 + $0x120] sm:$0xff]
        %v337 = vld [vmem:[%s287 + $0x128] sm:$0xf]
        %v338 = vld [vmem:[%s287 + $0x12c] sm:$0xff]
        %v339 = vld [vmem:[%s287 + $0x134] sm:$0xff]
        %v340 = vld [vmem:[%s287 + $0x13c] sm:$0xf]
        %v341 = vld [vmem:[%s287 + $0x140] sm:$0xff]
        %v342 = vld [vmem:[%s287 + $0x148] sm:$0xff]
        %v343 = vld [vmem:[%s287 + $0x150] sm:$0xf]
        %v344 = vld [vmem:[%s287 + $0x154] sm:$0xff]
        %v345 = vld [vmem:[%s287 + $0x15c] sm:$0xff]
        %v346 = vld [vmem:[%s287 + $0x164] sm:$0xf]
        %v347 = vld [vmem:[%s287 + $0x168] sm:$0xff]
        %v348 = vld [vmem:[%s287 + $0x170] sm:$0xff]
        %v349 = vld [vmem:[%s287 + $0x178] sm:$0xf]
        %v350 = vld [vmem:[%s287 + $0x17c] sm:$0xff]
        %v351 = vld [vmem:[%s287 + $0x184] sm:$0xff]
        %v352 = vld [vmem:[%s287 + $0x18c] sm:$0xf]
        %v353 = vld [vmem:[%s287 + $0x190] sm:$0xff]
        %v354 = vld [vmem:[%s287 + $0x198] sm:$0xff]
        %v355 = vld [vmem:[%s287 + $0x1a0] sm:$0xf]
        %v356 = vld [vmem:[%s287 + $0x1a4] sm:$0xff]
        %v357 = vld [vmem:[%s287 + $0x1ac] sm:$0xff]
        %v358 = vld [vmem:[%s287 + $0x1b4] sm:$0xf]
        %v359 = vld [vmem:[%s287 + $0x1b8] sm:$0xff]
        %v360 = vld [vmem:[%s287 + $0x1c0] sm:$0xff]
        %v361 = vld [vmem:[%s287 + $0x1c8] sm:$0xf]
        %v362 = vld [vmem:[%s287 + $0x1cc] sm:$0xff]
        %v363 = vld [vmem:[%s287 + $0x1d4] sm:$0xff]
        %v364 = vld [vmem:[%s287 + $0x1dc] sm:$0xf]
        %v365 = vld [vmem:[%s287 + $0x1e0] sm:$0xff]
        %v366 = vld [vmem:[%s287 + $0x1e8] sm:$0xff]
        %v367 = vld [vmem:[%s287 + $0x1f0] sm:$0xf]
        %v368 = vld [vmem:[%s287 + $0x1f4] sm:$0xff]
        %v369 = vld [vmem:[%s287 + $0x1fc] sm:$0xff]
        %v370 = vld [vmem:[%s287 + $0x204] sm:$0xf]
        %v371 = vld [vmem:[%s287 + $0x208] sm:$0xff]
        %v372 = vld [vmem:[%s287 + $0x210] sm:$0xff]
        %v373 = vld [vmem:[%s287 + $0x218] sm:$0xf]
        %v374 = vld [vmem:[%s287 + $0x21c] sm:$0xff]
        %v375 = vld [vmem:[%s287 + $0x224] sm:$0xff]
        %v376 = vld [vmem:[%s287 + $0x22c] sm:$0xf]
        %v377 = vld [vmem:[%s287 + $0x230] sm:$0xff]
        %v378 = vld [vmem:[%s287 + $0x238] sm:$0xff]
        %v379 = vld [vmem:[%s287 + $0x240] sm:$0xf]
        %v380 = vld [vmem:[%s287 + $0x244] sm:$0xff]
        %v381 = vld [vmem:[%s287 + $0x24c] sm:$0xff]
        %v382 = vld [vmem:[%s287 + $0x254] sm:$0xf]
        %v383 = vld [vmem:[%s287 + $0x258] sm:$0xff]
        %v384 = vld [vmem:[%s287 + $0x260] sm:$0xff]
        %v385 = vld [vmem:[%s287 + $0x268] sm:$0xf]
        %v386 = vld [vmem:[%s287 + $0x26c] sm:$0xff]
        %v387 = vld [vmem:[%s287 + $0x274] sm:$0xff]
        %v388 = vld [vmem:[%s287 + $0x27c] sm:$0xf]
        %v389 = vld [vmem:[%s1] sm:$0xf]
        %v390 = vld [vmem:[%s1 + $0x4] sm:$0xf]
        %v391 = vld [vmem:[%s1 + $0x8] sm:$0xf]
        %v392 = vld [vmem:[%s1 + $0xc] sm:$0xf]
        %v393 = vld [vmem:[%s1 + $0x10] sm:$0xf]
        %v394 = vld [vmem:[%s1 + $0x14] sm:$0xf]
        %v395 = vld [vmem:[%s1 + $0x18] sm:$0xf]
        %v396 = vld [vmem:[%s1 + $0x1c] sm:$0xf]
        %v397 = vld [vmem:[%s1 + $0x20] sm:$0xf]
        %v398 = vld [vmem:[%s1 + $0x24] sm:$0xf]
        %v399 = vld [vmem:[%s1 + $0x28] sm:$0xf]
        %v400 = vld [vmem:[%s1 + $0x2c] sm:$0xf]
        %v401 = vld [vmem:[%s1 + $0x30] sm:$0xf]
        %v402 = vld [vmem:[%s1 + $0x34] sm:$0xf]
        %v403 = vld [vmem:[%s1 + $0x38] sm:$0xf]
        %v404 = vld [vmem:[%s1 + $0x3c] sm:$0xf]
        %v405 = vld [vmem:[%s1 + $0x40] sm:$0xf]
        %v406 = vld [vmem:[%s1 + $0x44] sm:$0xf]
        %v407 = vld [vmem:[%s1 + $0x48] sm:$0xf]
        %v408 = vld [vmem:[%s1 + $0x4c] sm:$0xf]
        %v409 = vld [vmem:[%s1 + $0x50] sm:$0xf]
        %v410 = vld [vmem:[%s1 + $0x54] sm:$0xf]
        %v411 = vld [vmem:[%s1 + $0x58] sm:$0xf]
        %v412 = vld [vmem:[%s1 + $0x5c] sm:$0xf]
        %v413 = vld [vmem:[%s1 + $0x60] sm:$0xf]
        %v414 = vld [vmem:[%s1 + $0x64] sm:$0xf]
        %v415 = vld [vmem:[%s1 + $0x68] sm:$0xf]
        %v416 = vld [vmem:[%s1 + $0x6c] sm:$0xf]
        %v417 = vld [vmem:[%s1 + $0x70] sm:$0xf]
        %v418 = vld [vmem:[%s1 + $0x74] sm:$0xf]
        %v419 = vld [vmem:[%s1 + $0x78] sm:$0xf]
        %v420 = vld [vmem:[%s1 + $0x7c] sm:$0xf]
        %v421 = vld [vmem:[%s1 + $0x80] sm:$0xf]
        %v422 = vld [vmem:[%s1 + $0x84] sm:$0xf]
        %v423 = vld [vmem:[%s1 + $0x88] sm:$0xf]
        %v424 = vld [vmem:[%s1 + $0x8c] sm:$0xf]
        %v425 = vld [vmem:[%s1 + $0x90] sm:$0xf]
        %v426 = vld [vmem:[%s1 + $0x94] sm:$0xf]
        %v427 = vld [vmem:[%s1 + $0x98] sm:$0xf]
        %v428 = vld [vmem:[%s1 + $0x9c] sm:$0xf]
        %v429 = vld [vmem:[%s1 + $0xa0] sm:$0xf]
        %v430 = vld [vmem:[%s1 + $0xa4] sm:$0xf]
        %v431 = vld [vmem:[%s1 + $0xa8] sm:$0xf]
        %v432 = vld [vmem:[%s1 + $0xac] sm:$0xf]
        %v433 = vld [vmem:[%s1 + $0xb0] sm:$0xf]
        %v434 = vld [vmem:[%s1 + $0xb4] sm:$0xf]
        %v435 = vld [vmem:[%s1 + $0xb8] sm:$0xf]
        %v436 = vld [vmem:[%s1 + $0xbc] sm:$0xf]
        %v437 = vld [vmem:[%s1 + $0xc0] sm:$0xf]
        %v438 = vld [vmem:[%s1 + $0xc4] sm:$0xf]
        %v439 = vld [vmem:[%s1 + $0xc8] sm:$0xf]
        %v440 = vld [vmem:[%s1 + $0xcc] sm:$0xf]
        %v441 = vld [vmem:[%s1 + $0xd0] sm:$0xf]
        %v442 = vld [vmem:[%s1 + $0xd4] sm:$0xf]
        %v443 = vld [vmem:[%s1 + $0xd8] sm:$0xf]
        %v444 = vld [vmem:[%s1 + $0xdc] sm:$0xf]
        %v445 = vld [vmem:[%s1 + $0xe0] sm:$0xf]
        %v446 = vld [vmem:[%s1 + $0xe4] sm:$0xf]
        %v447 = vld [vmem:[%s1 + $0xe8] sm:$0xf]
        %v448 = vld [vmem:[%s1 + $0xec] sm:$0xf]
        %v449 = vld [vmem:[%s1 + $0xf0] sm:$0xf]
        %v450 = vld [vmem:[%s1 + $0xf4] sm:$0xf]
        %v451 = vld [vmem:[%s1 + $0xf8] sm:$0xf]
        %v452 = vld [vmem:[%s1 + $0xfc] sm:$0xf]
        %v453 = vld [vmem:[%s1 + $0x100] sm:$0xf]
        %v454 = vld [vmem:[%s1 + $0x104] sm:$0xf]
        %v455 = vld [vmem:[%s1 + $0x108] sm:$0xf]
        %v456 = vld [vmem:[%s1 + $0x10c] sm:$0xf]
        %v457 = vld [vmem:[%s1 + $0x110] sm:$0xf]
        %v458 = vld [vmem:[%s1 + $0x114] sm:$0xf]
        %v459 = vld [vmem:[%s1 + $0x118] sm:$0xf]
        %v460 = vld [vmem:[%s1 + $0x11c] sm:$0xf]
        %v461 = vld [vmem:[%s1 + $0x120] sm:$0xf]
        %v462 = vld [vmem:[%s1 + $0x124] sm:$0xf]
        %v463 = vld [vmem:[%s1 + $0x128] sm:$0xf]
        %v464 = vld [vmem:[%s1 + $0x12c] sm:$0xf]
        %v465 = vld [vmem:[%s1 + $0x130] sm:$0xf]
        %v466 = vld [vmem:[%s1 + $0x134] sm:$0xf]
        %v467 = vld [vmem:[%s1 + $0x138] sm:$0xf]
        %v468 = vld [vmem:[%s1 + $0x13c] sm:$0xf]
        %v469 = vld [vmem:[%s2] sm:$0x1]
        %v471 = vlaneseq
        %v472 = vshrl.u32 %v471, 7
        %v473 = vsub.s32 0, %v472
        %v474 = vrot.slane %v469, %v473
        %v572 = vunpack.c.l.b16 %v293
        %v573 = vunpack.c.h.b16 %v293
        %v574 = vunpack.c.l.b16 %v294
        %v575 = vunpack.c.h.b16 %v294
        %v576 = vunpack.c.l.b16 %v295
        %v577 = vunpack.c.l.b16 %v296
        %v578 = vunpack.c.h.b16 %v296
        %v579 = vunpack.c.l.b16 %v297
        %v580 = vunpack.c.h.b16 %v297
        %v581 = vunpack.c.l.b16 %v298
        %v582 = vunpack.c.l.b16 %v299
        %v583 = vunpack.c.h.b16 %v299
        %v584 = vunpack.c.l.b16 %v300
        %v585 = vunpack.c.h.b16 %v300
        %v586 = vunpack.c.l.b16 %v301
        %v587 = vunpack.c.l.b16 %v302
        %v588 = vunpack.c.h.b16 %v302
        %v589 = vunpack.c.l.b16 %v303
        %v590 = vunpack.c.h.b16 %v303
        %v591 = vunpack.c.l.b16 %v304
        %v592 = vunpack.c.l.b16 %v305
        %v593 = vunpack.c.h.b16 %v305
        %v594 = vunpack.c.l.b16 %v306
        %v595 = vunpack.c.h.b16 %v306
        %v596 = vunpack.c.l.b16 %v307
        %v597 = vunpack.c.l.b16 %v308
        %v598 = vunpack.c.h.b16 %v308
        %v599 = vunpack.c.l.b16 %v309
        %v600 = vunpack.c.h.b16 %v309
        %v601 = vunpack.c.l.b16 %v310
        %v602 = vunpack.c.l.b16 %v311
        %v603 = vunpack.c.h.b16 %v311
        %v604 = vunpack.c.l.b16 %v312
        %v605 = vunpack.c.h.b16 %v312
        %v606 = vunpack.c.l.b16 %v313
        %v607 = vunpack.c.l.b16 %v314
        %v608 = vunpack.c.h.b16 %v314
        %v609 = vunpack.c.l.b16 %v315
        %v610 = vunpack.c.h.b16 %v315
        %v611 = vunpack.c.l.b16 %v316
        %v612 = vunpack.c.l.b16 %v317
        %v613 = vunpack.c.h.b16 %v317
        %v614 = vunpack.c.l.b16 %v318
        %v615 = vunpack.c.h.b16 %v318
        %v616 = vunpack.c.l.b16 %v319
        %v617 = vunpack.c.l.b16 %v320
        %v618 = vunpack.c.h.b16 %v320
        %v619 = vunpack.c.l.b16 %v321
        %v620 = vunpack.c.h.b16 %v321
        %v621 = vunpack.c.l.b16 %v322
        %v622 = vunpack.c.l.b16 %v323
        %v623 = vunpack.c.h.b16 %v323
        %v624 = vunpack.c.l.b16 %v324
        %v625 = vunpack.c.h.b16 %v324
        %v626 = vunpack.c.l.b16 %v325
        %v627 = vunpack.c.l.b16 %v326
        %v628 = vunpack.c.h.b16 %v326
        %v629 = vunpack.c.l.b16 %v327
        %v630 = vunpack.c.h.b16 %v327
        %v631 = vunpack.c.l.b16 %v328
        %v632 = vunpack.c.l.b16 %v329
        %v633 = vunpack.c.h.b16 %v329
        %v634 = vunpack.c.l.b16 %v330
        %v635 = vunpack.c.h.b16 %v330
        %v636 = vunpack.c.l.b16 %v331
        %v637 = vunpack.c.l.b16 %v332
        %v638 = vunpack.c.h.b16 %v332
        %v639 = vunpack.c.l.b16 %v333
        %v640 = vunpack.c.h.b16 %v333
        %v641 = vunpack.c.l.b16 %v334
        %v642 = vunpack.c.l.b16 %v335
        %v643 = vunpack.c.h.b16 %v335
        %v644 = vunpack.c.l.b16 %v336
        %v645 = vunpack.c.h.b16 %v336
        %v646 = vunpack.c.l.b16 %v337
        %v647 = vunpack.c.l.b16 %v338
        %v648 = vunpack.c.h.b16 %v338
        %v649 = vunpack.c.l.b16 %v339
        %v650 = vunpack.c.h.b16 %v339
        %v651 = vunpack.c.l.b16 %v340
        %v652 = vunpack.c.l.b16 %v341
        %v653 = vunpack.c.h.b16 %v341
        %v654 = vunpack.c.l.b16 %v342
        %v655 = vunpack.c.h.b16 %v342
        %v656 = vunpack.c.l.b16 %v343
        %v657 = vunpack.c.l.b16 %v344
        %v658 = vunpack.c.h.b16 %v344
        %v659 = vunpack.c.l.b16 %v345
        %v660 = vunpack.c.h.b16 %v345
        %v661 = vunpack.c.l.b16 %v346
        %v662 = vunpack.c.l.b16 %v347
        %v663 = vunpack.c.h.b16 %v347
        %v664 = vunpack.c.l.b16 %v348
        %v665 = vunpack.c.h.b16 %v348
        %v666 = vunpack.c.l.b16 %v349
        %v667 = vunpack.c.l.b16 %v350
        %v668 = vunpack.c.h.b16 %v350
        %v669 = vunpack.c.l.b16 %v351
        %v670 = vunpack.c.h.b16 %v351
        %v671 = vunpack.c.l.b16 %v352
        %v672 = vunpack.c.l.b16 %v353
        %v673 = vunpack.c.h.b16 %v353
        %v674 = vunpack.c.l.b16 %v354
        %v675 = vunpack.c.h.b16 %v354
        %v676 = vunpack.c.l.b16 %v355
        %v677 = vunpack.c.l.b16 %v356
        %v678 = vunpack.c.h.b16 %v356
        %v679 = vunpack.c.l.b16 %v357
        %v680 = vunpack.c.h.b16 %v357
        %v681 = vunpack.c.l.b16 %v358
        %v682 = vunpack.c.l.b16 %v359
        %v683 = vunpack.c.h.b16 %v359
        %v684 = vunpack.c.l.b16 %v360
        %v685 = vunpack.c.h.b16 %v360
        %v686 = vunpack.c.l.b16 %v361
        %v687 = vunpack.c.l.b16 %v362
        %v688 = vunpack.c.h.b16 %v362
        %v689 = vunpack.c.l.b16 %v363
        %v690 = vunpack.c.h.b16 %v363
        %v691 = vunpack.c.l.b16 %v364
        %v692 = vunpack.c.l.b16 %v365
        %v693 = vunpack.c.h.b16 %v365
        %v694 = vunpack.c.l.b16 %v366
        %v695 = vunpack.c.h.b16 %v366
        %v696 = vunpack.c.l.b16 %v367
        %v697 = vunpack.c.l.b16 %v368
        %v698 = vunpack.c.h.b16 %v368
        %v699 = vunpack.c.l.b16 %v369
        %v700 = vunpack.c.h.b16 %v369
        %v701 = vunpack.c.l.b16 %v370
        %v702 = vunpack.c.l.b16 %v371
        %v703 = vunpack.c.h.b16 %v371
        %v704 = vunpack.c.l.b16 %v372
        %v705 = vunpack.c.h.b16 %v372
        %v706 = vunpack.c.l.b16 %v373
        %v707 = vunpack.c.l.b16 %v374
        %v708 = vunpack.c.h.b16 %v374
        %v709 = vunpack.c.l.b16 %v375
        %v710 = vunpack.c.h.b16 %v375
        %v711 = vunpack.c.l.b16 %v376
        %v712 = vunpack.c.l.b16 %v377
        %v713 = vunpack.c.h.b16 %v377
        %v714 = vunpack.c.l.b16 %v378
        %v715 = vunpack.c.h.b16 %v378
        %v716 = vunpack.c.l.b16 %v379
        %v717 = vunpack.c.l.b16 %v380
        %v718 = vunpack.c.h.b16 %v380
        %v719 = vunpack.c.l.b16 %v381
        %v720 = vunpack.c.h.b16 %v381
        %v721 = vunpack.c.l.b16 %v382
        %v722 = vunpack.c.l.b16 %v383
        %v723 = vunpack.c.h.b16 %v383
        %v724 = vunpack.c.l.b16 %v384
        %v725 = vunpack.c.h.b16 %v384
        %v726 = vunpack.c.l.b16 %v385
        %v727 = vunpack.c.l.b16 %v386
        %v728 = vunpack.c.h.b16 %v386
        %v729 = vunpack.c.l.b16 %v387
        %v730 = vunpack.c.h.b16 %v387
        %v731 = vunpack.c.l.b16 %v388
        %v732 = vpack.c.b16 %v577, %v572
        %v733 = vpack.c.b16 %v578, %v573
        %v734 = vpack.c.b16 %v579, %v574
        %v735 = vpack.c.b16 %v580, %v575
        %v736 = vpack.c.b16 %v581, %v576
        %v737 = vpack.c.b16 %v587, %v582
        %v738 = vpack.c.b16 %v588, %v583
        %v739 = vpack.c.b16 %v589, %v584
        %v740 = vpack.c.b16 %v590, %v585
        %v741 = vpack.c.b16 %v591, %v586
        %v742 = vpack.c.b16 %v597, %v592
        %v743 = vpack.c.b16 %v598, %v593
        %v744 = vpack.c.b16 %v599, %v594
        %v745 = vpack.c.b16 %v600, %v595
        %v746 = vpack.c.b16 %v601, %v596
        %v747 = vpack.c.b16 %v607, %v602
        %v748 = vpack.c.b16 %v608, %v603
        %v749 = vpack.c.b16 %v609, %v604
        %v750 = vpack.c.b16 %v610, %v605
        %v751 = vpack.c.b16 %v611, %v606
        %v752 = vpack.c.b16 %v617, %v612
        %v753 = vpack.c.b16 %v618, %v613
        %v754 = vpack.c.b16 %v619, %v614
        %v755 = vpack.c.b16 %v620, %v615
        %v756 = vpack.c.b16 %v621, %v616
        %v757 = vpack.c.b16 %v627, %v622
        %v758 = vpack.c.b16 %v628, %v623
        %v759 = vpack.c.b16 %v629, %v624
        %v760 = vpack.c.b16 %v630, %v625
        %v761 = vpack.c.b16 %v631, %v626
        %v762 = vpack.c.b16 %v637, %v632
        %v763 = vpack.c.b16 %v638, %v633
        %v764 = vpack.c.b16 %v639, %v634
        %v765 = vpack.c.b16 %v640, %v635
        %v766 = vpack.c.b16 %v641, %v636
        %v767 = vpack.c.b16 %v647, %v642
        %v768 = vpack.c.b16 %v648, %v643
        %v769 = vpack.c.b16 %v649, %v644
        %v770 = vpack.c.b16 %v650, %v645
        %v771 = vpack.c.b16 %v651, %v646
        %v772 = vpack.c.b16 %v657, %v652
        %v773 = vpack.c.b16 %v658, %v653
        %v774 = vpack.c.b16 %v659, %v654
        %v775 = vpack.c.b16 %v660, %v655
        %v776 = vpack.c.b16 %v661, %v656
        %v777 = vpack.c.b16 %v667, %v662
        %v778 = vpack.c.b16 %v668, %v663
        %v779 = vpack.c.b16 %v669, %v664
        %v780 = vpack.c.b16 %v670, %v665
        %v781 = vpack.c.b16 %v671, %v666
        %v782 = vpack.c.b16 %v677, %v672
        %v783 = vpack.c.b16 %v678, %v673
        %v784 = vpack.c.b16 %v679, %v674
        %v785 = vpack.c.b16 %v680, %v675
        %v786 = vpack.c.b16 %v681, %v676
        %v787 = vpack.c.b16 %v687, %v682
        %v788 = vpack.c.b16 %v688, %v683
        %v789 = vpack.c.b16 %v689, %v684
        %v790 = vpack.c.b16 %v690, %v685
        %v791 = vpack.c.b16 %v691, %v686
        %v792 = vpack.c.b16 %v697, %v692
        %v793 = vpack.c.b16 %v698, %v693
        %v794 = vpack.c.b16 %v699, %v694
        %v795 = vpack.c.b16 %v700, %v695
        %v796 = vpack.c.b16 %v701, %v696
        %v797 = vpack.c.b16 %v707, %v702
        %v798 = vpack.c.b16 %v708, %v703
        %v799 = vpack.c.b16 %v709, %v704
        %v800 = vpack.c.b16 %v710, %v705
        %v801 = vpack.c.b16 %v711, %v706
        %v802 = vpack.c.b16 %v717, %v712
        %v803 = vpack.c.b16 %v718, %v713
        %v804 = vpack.c.b16 %v719, %v714
        %v805 = vpack.c.b16 %v720, %v715
        %v806 = vpack.c.b16 %v721, %v716
        %v807 = vpack.c.b16 %v727, %v722
        %v808 = vpack.c.b16 %v728, %v723
        %v809 = vpack.c.b16 %v729, %v724
        %v810 = vpack.c.b16 %v730, %v725
        %v811 = vpack.c.b16 %v731, %v726
        %v972 = vunpack.c.l.b16 %v389
        %v973 = vunpack.c.l.b16 %v390
        %v974 = vunpack.c.l.b16 %v391
        %v975 = vunpack.c.l.b16 %v392
        %v976 = vunpack.c.l.b16 %v393
        %v977 = vunpack.c.l.b16 %v394
        %v978 = vunpack.c.l.b16 %v395
        %v979 = vunpack.c.l.b16 %v396
        %v980 = vunpack.c.l.b16 %v397
        %v981 = vunpack.c.l.b16 %v398
        %v982 = vunpack.c.l.b16 %v399
        %v983 = vunpack.c.l.b16 %v400
        %v984 = vunpack.c.l.b16 %v401
        %v985 = vunpack.c.l.b16 %v402
        %v986 = vunpack.c.l.b16 %v403
        %v987 = vunpack.c.l.b16 %v404
        %v988 = vunpack.c.l.b16 %v405
        %v989 = vunpack.c.l.b16 %v406
        %v990 = vunpack.c.l.b16 %v407
        %v991 = vunpack.c.l.b16 %v408
        %v992 = vunpack.c.l.b16 %v409
        %v993 = vunpack.c.l.b16 %v410
        %v994 = vunpack.c.l.b16 %v411
        %v995 = vunpack.c.l.b16 %v412
        %v996 = vunpack.c.l.b16 %v413
        %v997 = vunpack.c.l.b16 %v414
        %v998 = vunpack.c.l.b16 %v415
        %v999 = vunpack.c.l.b16 %v416
        %v1000 = vunpack.c.l.b16 %v417
        %v1001 = vunpack.c.l.b16 %v418
        %v1002 = vunpack.c.l.b16 %v419
        %v1003 = vunpack.c.l.b16 %v420
        %v1004 = vunpack.c.l.b16 %v421
        %v1005 = vunpack.c.l.b16 %v422
        %v1006 = vunpack.c.l.b16 %v423
        %v1007 = vunpack.c.l.b16 %v424
        %v1008 = vunpack.c.l.b16 %v425
        %v1009 = vunpack.c.l.b16 %v426
        %v1010 = vunpack.c.l.b16 %v427
        %v1011 = vunpack.c.l.b16 %v428
        %v1012 = vunpack.c.l.b16 %v429
        %v1013 = vunpack.c.l.b16 %v430
        %v1014 = vunpack.c.l.b16 %v431
        %v1015 = vunpack.c.l.b16 %v432
        %v1016 = vunpack.c.l.b16 %v433
        %v1017 = vunpack.c.l.b16 %v434
        %v1018 = vunpack.c.l.b16 %v435
        %v1019 = vunpack.c.l.b16 %v436
        %v1020 = vunpack.c.l.b16 %v437
        %v1021 = vunpack.c.l.b16 %v438
        %v1022 = vunpack.c.l.b16 %v439
        %v1023 = vunpack.c.l.b16 %v440
        %v1024 = vunpack.c.l.b16 %v441
        %v1025 = vunpack.c.l.b16 %v442
        %v1026 = vunpack.c.l.b16 %v443
        %v1027 = vunpack.c.l.b16 %v444
        %v1028 = vunpack.c.l.b16 %v445
        %v1029 = vunpack.c.l.b16 %v446
        %v1030 = vunpack.c.l.b16 %v447
        %v1031 = vunpack.c.l.b16 %v448
        %v1032 = vunpack.c.l.b16 %v449
        %v1033 = vunpack.c.l.b16 %v450
        %v1034 = vunpack.c.l.b16 %v451
        %v1035 = vunpack.c.l.b16 %v452
        %v1036 = vunpack.c.l.b16 %v453
        %v1037 = vunpack.c.l.b16 %v454
        %v1038 = vunpack.c.l.b16 %v455
        %v1039 = vunpack.c.l.b16 %v456
        %v1040 = vunpack.c.l.b16 %v457
        %v1041 = vunpack.c.l.b16 %v458
        %v1042 = vunpack.c.l.b16 %v459
        %v1043 = vunpack.c.l.b16 %v460
        %v1044 = vunpack.c.l.b16 %v461
        %v1045 = vunpack.c.l.b16 %v462
        %v1046 = vunpack.c.l.b16 %v463
        %v1047 = vunpack.c.l.b16 %v464
        %v1048 = vunpack.c.l.b16 %v465
        %v1049 = vunpack.c.l.b16 %v466
        %v1050 = vunpack.c.l.b16 %v467
        %v1051 = vunpack.c.l.b16 %v468
        %v1052 = vpack.c.b16 %v973, %v972
        %v1053 = vpack.c.b16 %v975, %v974
        %v1054 = vpack.c.b16 %v977, %v976
        %v1055 = vpack.c.b16 %v979, %v978
        %v1056 = vpack.c.b16 %v981, %v980
        %v1057 = vpack.c.b16 %v983, %v982
        %v1058 = vpack.c.b16 %v985, %v984
        %v1059 = vpack.c.b16 %v987, %v986
        %v1060 = vpack.c.b16 %v989, %v988
        %v1061 = vpack.c.b16 %v991, %v990
        %v1062 = vpack.c.b16 %v993, %v992
        %v1063 = vpack.c.b16 %v995, %v994
        %v1064 = vpack.c.b16 %v997, %v996
        %v1065 = vpack.c.b16 %v999, %v998
        %v1066 = vpack.c.b16 %v1001, %v1000
        %v1067 = vpack.c.b16 %v1003, %v1002
        %v1068 = vpack.c.b16 %v1005, %v1004
        %v1069 = vpack.c.b16 %v1007, %v1006
        %v1070 = vpack.c.b16 %v1009, %v1008
        %v1071 = vpack.c.b16 %v1011, %v1010
        %v1072 = vpack.c.b16 %v1013, %v1012
        %v1073 = vpack.c.b16 %v1015, %v1014
        %v1074 = vpack.c.b16 %v1017, %v1016
        %v1075 = vpack.c.b16 %v1019, %v1018
        %v1076 = vpack.c.b16 %v1021, %v1020
        %v1077 = vpack.c.b16 %v1023, %v1022
        %v1078 = vpack.c.b16 %v1025, %v1024
        %v1079 = vpack.c.b16 %v1027, %v1026
        %v1080 = vpack.c.b16 %v1029, %v1028
        %v1081 = vpack.c.b16 %v1031, %v1030
        %v1082 = vpack.c.b16 %v1033, %v1032
        %v1083 = vpack.c.b16 %v1035, %v1034
        %v1084 = vpack.c.b16 %v1037, %v1036
        %v1085 = vpack.c.b16 %v1039, %v1038
        %v1086 = vpack.c.b16 %v1041, %v1040
        %v1087 = vpack.c.b16 %v1043, %v1042
        %v1088 = vpack.c.b16 %v1045, %v1044
        %v1089 = vpack.c.b16 %v1047, %v1046
        %v1090 = vpack.c.b16 %v1049, %v1048
        %v1091 = vpack.c.b16 %v1051, %v1050
        %1132 = vmatprep.subr.bf16.mxu0 0
        %1133 = vmatpush1.bf16.msra.mxu0 %v1059
        %1134 = vmatprep.subr.bf16.mxu0 0
        %1135 = vmatpush1.bf16.msra.mxu0 %v1058
        %1136 = vmatprep.subr.bf16.mxu0 0
        %1137 = vmatpush1.bf16.msra.mxu0 %v1057
        %1138 = vmatprep.subr.bf16.mxu0 0
        %1139 = vmatpush1.bf16.msra.mxu0 %v1056
        %1140 = vmatprep.subr.bf16.mxu0 0
        %1141 = vmatpush1.bf16.msra.mxu0 %v1055
        %1142 = vmatprep.subr.bf16.mxu0 0
        %1143 = vmatpush1.bf16.msra.mxu0 %v1054
        %1144 = vmatprep.subr.bf16.mxu0 0
        %1145 = vmatpush1.bf16.msra.mxu0 %v1053
        %1146 = vmatprep.subr.bf16.mxu0 0
        %1147 = vmatpush1.bf16.msra.mxu0 %v1052
        %1148 = vmatprep.subr.bf16.mxu0 0
        %1149 = vmatpush2.bf16.msra.mxu0 %v1067
        %1150 = vmatprep.subr.bf16.mxu0 0
        %1151 = vmatpush2.bf16.msra.mxu0 %v1066
        %1152 = vmatprep.subr.bf16.mxu0 0
        %1153 = vmatpush2.bf16.msra.mxu0 %v1065
        %1154 = vmatprep.subr.bf16.mxu0 0
        %1155 = vmatpush2.bf16.msra.mxu0 %v1064
        %1156 = vmatprep.subr.bf16.mxu0 0
        %1157 = vmatpush2.bf16.msra.mxu0 %v1063
        %1158 = vmatprep.subr.bf16.mxu0 0
        %1159 = vmatpush2.bf16.msra.mxu0 %v1062
        %1160 = vmatprep.subr.bf16.mxu0 0
        %1161 = vmatpush2.bf16.msra.mxu0 %v1061
        %1162 = vmatprep.subr.bf16.mxu0 0
        %1163 = vmatpush2.bf16.msra.mxu0 %v1060
        %1164 = vmatprep.mubr.bf16.mxu0 %v733
        %1165 = vmatmul.mubr.bf16.gmra.mxu0 %v732
        %v1166 = vpop.f32.mrf.mxu0
        %v1167 = vadd.f32 %v474, %v1166
        %v1168 = vpop.f32.mrf.mxu0
        %v1169 = vpop.f32.mrf.mxu0
        %v1170 = vadd.f32 %v474, %v1169
        %v1171 = vpop.f32.mrf.mxu0
        %1172 = vmatprep.mubr.bf16.mxu0 %v738
        %1173 = vmatmul.mubr.bf16.gmra.mxu0 %v737
        %v1174 = vpop.f32.mrf.mxu0
        %v1175 = vadd.f32 %v474, %v1174
        %v1176 = vpop.f32.mrf.mxu0
        %v1177 = vpop.f32.mrf.mxu0
        %v1178 = vadd.f32 %v474, %v1177
        %v1179 = vpop.f32.mrf.mxu0
        %1180 = vmatprep.mubr.bf16.mxu0 %v743
        %1181 = vmatmul.mubr.bf16.gmra.mxu0 %v742
        %v1182 = vpop.f32.mrf.mxu0
        %v1183 = vadd.f32 %v474, %v1182
        %v1184 = vpop.f32.mrf.mxu0
        %v1185 = vpop.f32.mrf.mxu0
        %v1186 = vadd.f32 %v474, %v1185
        %v1187 = vpop.f32.mrf.mxu0
        %1188 = vmatprep.mubr.bf16.mxu0 %v748
        %1189 = vmatmul.mubr.bf16.gmra.mxu0 %v747
        %v1190 = vpop.f32.mrf.mxu0
        %v1191 = vadd.f32 %v474, %v1190
        %v1192 = vpop.f32.mrf.mxu0
        %v1193 = vpop.f32.mrf.mxu0
        %v1194 = vadd.f32 %v474, %v1193
        %v1195 = vpop.f32.mrf.mxu0
        %1196 = vmatprep.mubr.bf16.mxu0 %v753
        %1197 = vmatmul.mubr.bf16.gmra.mxu0 %v752
        %v1198 = vpop.f32.mrf.mxu0
        %v1199 = vadd.f32 %v474, %v1198
        %v1200 = vpop.f32.mrf.mxu0
        %v1201 = vpop.f32.mrf.mxu0
        %v1202 = vadd.f32 %v474, %v1201
        %v1203 = vpop.f32.mrf.mxu0
        %1204 = vmatprep.mubr.bf16.mxu0 %v758
        %1205 = vmatmul.mubr.bf16.gmra.mxu0 %v757
        %v1206 = vpop.f32.mrf.mxu0
        %v1207 = vadd.f32 %v474, %v1206
        %v1208 = vpop.f32.mrf.mxu0
        %v1209 = vpop.f32.mrf.mxu0
        %v1210 = vadd.f32 %v474, %v1209
        %v1211 = vpop.f32.mrf.mxu0
        %1212 = vmatprep.mubr.bf16.mxu0 %v763
        %1213 = vmatmul.mubr.bf16.gmra.mxu0 %v762
        %v1214 = vpop.f32.mrf.mxu0
        %v1215 = vadd.f32 %v474, %v1214
        %v1216 = vpop.f32.mrf.mxu0
        %v1217 = vpop.f32.mrf.mxu0
        %v1218 = vadd.f32 %v474, %v1217
        %v1219 = vpop.f32.mrf.mxu0
        %1220 = vmatprep.mubr.bf16.mxu0 %v768
        %1221 = vmatmul.mubr.bf16.gmra.mxu0 %v767
        %v1222 = vpop.f32.mrf.mxu0
        %v1223 = vadd.f32 %v474, %v1222
        %v1224 = vpop.f32.mrf.mxu0
        %v1225 = vpop.f32.mrf.mxu0
        %v1226 = vadd.f32 %v474, %v1225
        %v1227 = vpop.f32.mrf.mxu0
        %1228 = vmatprep.mubr.bf16.mxu0 %v773
        %1229 = vmatmul.mubr.bf16.gmra.mxu0 %v772
        %v1230 = vpop.f32.mrf.mxu0
        %v1231 = vadd.f32 %v474, %v1230
        %v1232 = vpop.f32.mrf.mxu0
        %v1233 = vpop.f32.mrf.mxu0
        %v1234 = vadd.f32 %v474, %v1233
        %v1235 = vpop.f32.mrf.mxu0
        %1236 = vmatprep.mubr.bf16.mxu0 %v778
        %1237 = vmatmul.mubr.bf16.gmra.mxu0 %v777
        %v1238 = vpop.f32.mrf.mxu0
        %v1239 = vadd.f32 %v474, %v1238
        %v1240 = vpop.f32.mrf.mxu0
        %v1241 = vpop.f32.mrf.mxu0
        %v1242 = vadd.f32 %v474, %v1241
        %v1243 = vpop.f32.mrf.mxu0
        %1244 = vmatprep.mubr.bf16.mxu0 %v783
        %1245 = vmatmul.mubr.bf16.gmra.mxu0 %v782
        %v1246 = vpop.f32.mrf.mxu0
        %v1247 = vadd.f32 %v474, %v1246
        %v1248 = vpop.f32.mrf.mxu0
        %v1249 = vpop.f32.mrf.mxu0
        %v1250 = vadd.f32 %v474, %v1249
        %v1251 = vpop.f32.mrf.mxu0
        %1252 = vmatprep.mubr.bf16.mxu0 %v788
        %1253 = vmatmul.mubr.bf16.gmra.mxu0 %v787
        %v1254 = vpop.f32.mrf.mxu0
        %v1255 = vadd.f32 %v474, %v1254
        %v1256 = vpop.f32.mrf.mxu0
        %v1257 = vpop.f32.mrf.mxu0
        %v1258 = vadd.f32 %v474, %v1257
        %v1259 = vpop.f32.mrf.mxu0
        %1260 = vmatprep.mubr.bf16.mxu0 %v793
        %1261 = vmatmul.mubr.bf16.gmra.mxu0 %v792
        %v1262 = vpop.f32.mrf.mxu0
        %v1263 = vadd.f32 %v474, %v1262
        %v1264 = vpop.f32.mrf.mxu0
        %v1265 = vpop.f32.mrf.mxu0
        %v1266 = vadd.f32 %v474, %v1265
        %v1267 = vpop.f32.mrf.mxu0
        %1268 = vmatprep.mubr.bf16.mxu0 %v798
        %1269 = vmatmul.mubr.bf16.gmra.mxu0 %v797
        %v1270 = vpop.f32.mrf.mxu0
        %v1271 = vadd.f32 %v474, %v1270
        %v1272 = vpop.f32.mrf.mxu0
        %v1273 = vpop.f32.mrf.mxu0
        %v1274 = vadd.f32 %v474, %v1273
        %v1275 = vpop.f32.mrf.mxu0
        %1276 = vmatprep.mubr.bf16.mxu0 %v803
        %1277 = vmatmul.mubr.bf16.gmra.mxu0 %v802
        %v1278 = vpop.f32.mrf.mxu0
        %v1279 = vadd.f32 %v474, %v1278
        %v1280 = vpop.f32.mrf.mxu0
        %v1281 = vpop.f32.mrf.mxu0
        %v1282 = vadd.f32 %v474, %v1281
        %v1283 = vpop.f32.mrf.mxu0
        %1284 = vmatprep.mubr.bf16.mxu0 %v808
        %1285 = vmatmul.mubr.bf16.gmra.mxu0 %v807
        %v1286 = vpop.f32.mrf.mxu0
        %v1287 = vadd.f32 %v474, %v1286
        %v1288 = vpop.f32.mrf.mxu0
        %v1289 = vpop.f32.mrf.mxu0
        %v1290 = vadd.f32 %v474, %v1289
        %v1291 = vpop.f32.mrf.mxu0
        %1292 = vdwg.mxu0
        %1293 = vmatprep.subr.bf16.mxu0 0
        %1294 = vmatpush1.bf16.msra.mxu0 %v1075
        %1295 = vmatprep.subr.bf16.mxu0 0
        %1296 = vmatpush1.bf16.msra.mxu0 %v1074
        %1297 = vmatprep.subr.bf16.mxu0 0
        %1298 = vmatpush1.bf16.msra.mxu0 %v1073
        %1299 = vmatprep.subr.bf16.mxu0 0
        %1300 = vmatpush1.bf16.msra.mxu0 %v1072
        %1301 = vmatprep.subr.bf16.mxu0 0
        %1302 = vmatpush1.bf16.msra.mxu0 %v1071
        %1303 = vmatprep.subr.bf16.mxu0 0
        %1304 = vmatpush1.bf16.msra.mxu0 %v1070
        %1305 = vmatprep.subr.bf16.mxu0 0
        %1306 = vmatpush1.bf16.msra.mxu0 %v1069
        %1307 = vmatprep.subr.bf16.mxu0 0
        %1308 = vmatpush1.bf16.msra.mxu0 %v1068
        %1309 = vmatprep.subr.bf16.mxu0 0
        %1310 = vmatpush2.bf16.msra.mxu0 %v1083
        %1311 = vmatprep.subr.bf16.mxu0 0
        %1312 = vmatpush2.bf16.msra.mxu0 %v1082
        %1313 = vmatprep.subr.bf16.mxu0 0
        %1314 = vmatpush2.bf16.msra.mxu0 %v1081
        %1315 = vmatprep.subr.bf16.mxu0 0
        %1316 = vmatpush2.bf16.msra.mxu0 %v1080
        %1317 = vmatprep.subr.bf16.mxu0 0
        %1318 = vmatpush2.bf16.msra.mxu0 %v1079
        %1319 = vmatprep.subr.bf16.mxu0 0
        %1320 = vmatpush2.bf16.msra.mxu0 %v1078
        %1321 = vmatprep.subr.bf16.mxu0 0
        %1322 = vmatpush2.bf16.msra.mxu0 %v1077
        %1323 = vmatprep.subr.bf16.mxu0 0
        %1324 = vmatpush2.bf16.msra.mxu0 %v1076
        %1325 = vmatprep.mubr.bf16.mxu0 %v735
        %1326 = vmatmul.mubr.bf16.gmra.mxu0 %v734
        %v1327 = vpop.f32.mrf.mxu0
        %v1328 = vadd.f32 %v1167, %v1327
        %v1329 = vpop.f32.mrf.mxu0
        %v1330 = vpop.f32.mrf.mxu0
        %v1331 = vadd.f32 %v1170, %v1330
        %v1332 = vpop.f32.mrf.mxu0
        %1333 = vmatprep.mubr.bf16.mxu0 %v740
        %1334 = vmatmul.mubr.bf16.gmra.mxu0 %v739
        %v1335 = vpop.f32.mrf.mxu0
        %v1336 = vadd.f32 %v1175, %v1335
        %v1337 = vpop.f32.mrf.mxu0
        %v1338 = vpop.f32.mrf.mxu0
        %v1339 = vadd.f32 %v1178, %v1338
        %v1340 = vpop.f32.mrf.mxu0
        %1341 = vmatprep.mubr.bf16.mxu0 %v745
        %1342 = vmatmul.mubr.bf16.gmra.mxu0 %v744
        %v1343 = vpop.f32.mrf.mxu0
        %v1344 = vadd.f32 %v1183, %v1343
        %v1345 = vpop.f32.mrf.mxu0
        %v1346 = vpop.f32.mrf.mxu0
        %v1347 = vadd.f32 %v1186, %v1346
        %v1348 = vpop.f32.mrf.mxu0
        %1349 = vmatprep.mubr.bf16.mxu0 %v750
        %1350 = vmatmul.mubr.bf16.gmra.mxu0 %v749
        %v1351 = vpop.f32.mrf.mxu0
        %v1352 = vadd.f32 %v1191, %v1351
        %v1353 = vpop.f32.mrf.mxu0
        %v1354 = vpop.f32.mrf.mxu0
        %v1355 = vadd.f32 %v1194, %v1354
        %v1356 = vpop.f32.mrf.mxu0
        %1357 = vmatprep.mubr.bf16.mxu0 %v755
        %1358 = vmatmul.mubr.bf16.gmra.mxu0 %v754
        %v1359 = vpop.f32.mrf.mxu0
        %v1360 = vadd.f32 %v1199, %v1359
        %v1361 = vpop.f32.mrf.mxu0
        %v1362 = vpop.f32.mrf.mxu0
        %v1363 = vadd.f32 %v1202, %v1362
        %v1364 = vpop.f32.mrf.mxu0
        %1365 = vmatprep.mubr.bf16.mxu0 %v760
        %1366 = vmatmul.mubr.bf16.gmra.mxu0 %v759
        %v1367 = vpop.f32.mrf.mxu0
        %v1368 = vadd.f32 %v1207, %v1367
        %v1369 = vpop.f32.mrf.mxu0
        %v1370 = vpop.f32.mrf.mxu0
        %v1371 = vadd.f32 %v1210, %v1370
        %v1372 = vpop.f32.mrf.mxu0
        %1373 = vmatprep.mubr.bf16.mxu0 %v765
        %1374 = vmatmul.mubr.bf16.gmra.mxu0 %v764
        %v1375 = vpop.f32.mrf.mxu0
        %v1376 = vadd.f32 %v1215, %v1375
        %v1377 = vpop.f32.mrf.mxu0
        %v1378 = vpop.f32.mrf.mxu0
        %v1379 = vadd.f32 %v1218, %v1378
        %v1380 = vpop.f32.mrf.mxu0
        %1381 = vmatprep.mubr.bf16.mxu0 %v770
        %1382 = vmatmul.mubr.bf16.gmra.mxu0 %v769
        %v1383 = vpop.f32.mrf.mxu0
        %v1384 = vadd.f32 %v1223, %v1383
        %v1385 = vpop.f32.mrf.mxu0
        %v1386 = vpop.f32.mrf.mxu0
        %v1387 = vadd.f32 %v1226, %v1386
        %v1388 = vpop.f32.mrf.mxu0
        %1389 = vmatprep.mubr.bf16.mxu0 %v775
        %1390 = vmatmul.mubr.bf16.gmra.mxu0 %v774
        %v1391 = vpop.f32.mrf.mxu0
        %v1392 = vadd.f32 %v1231, %v1391
        %v1393 = vpop.f32.mrf.mxu0
        %v1394 = vpop.f32.mrf.mxu0
        %v1395 = vadd.f32 %v1234, %v1394
        %v1396 = vpop.f32.mrf.mxu0
        %1397 = vmatprep.mubr.bf16.mxu0 %v780
        %1398 = vmatmul.mubr.bf16.gmra.mxu0 %v779
        %v1399 = vpop.f32.mrf.mxu0
        %v1400 = vadd.f32 %v1239, %v1399
        %v1401 = vpop.f32.mrf.mxu0
        %v1402 = vpop.f32.mrf.mxu0
        %v1403 = vadd.f32 %v1242, %v1402
        %v1404 = vpop.f32.mrf.mxu0
        %1405 = vmatprep.mubr.bf16.mxu0 %v785
        %1406 = vmatmul.mubr.bf16.gmra.mxu0 %v784
        %v1407 = vpop.f32.mrf.mxu0
        %v1408 = vadd.f32 %v1247, %v1407
        %v1409 = vpop.f32.mrf.mxu0
        %v1410 = vpop.f32.mrf.mxu0
        %v1411 = vadd.f32 %v1250, %v1410
        %v1412 = vpop.f32.mrf.mxu0
        %1413 = vmatprep.mubr.bf16.mxu0 %v790
        %1414 = vmatmul.mubr.bf16.gmra.mxu0 %v789
        %v1415 = vpop.f32.mrf.mxu0
        %v1416 = vadd.f32 %v1255, %v1415
        %v1417 = vpop.f32.mrf.mxu0
        %v1418 = vpop.f32.mrf.mxu0
        %v1419 = vadd.f32 %v1258, %v1418
        %v1420 = vpop.f32.mrf.mxu0
        %1421 = vmatprep.mubr.bf16.mxu0 %v795
        %1422 = vmatmul.mubr.bf16.gmra.mxu0 %v794
        %v1423 = vpop.f32.mrf.mxu0
        %v1424 = vadd.f32 %v1263, %v1423
        %v1425 = vpop.f32.mrf.mxu0
        %v1426 = vpop.f32.mrf.mxu0
        %v1427 = vadd.f32 %v1266, %v1426
        %v1428 = vpop.f32.mrf.mxu0
        %1429 = vmatprep.mubr.bf16.mxu0 %v800
        %1430 = vmatmul.mubr.bf16.gmra.mxu0 %v799
        %v1431 = vpop.f32.mrf.mxu0
        %v1432 = vadd.f32 %v1271, %v1431
        %v1433 = vpop.f32.mrf.mxu0
        %v1434 = vpop.f32.mrf.mxu0
        %v1435 = vadd.f32 %v1274, %v1434
        %v1436 = vpop.f32.mrf.mxu0
        %1437 = vmatprep.mubr.bf16.mxu0 %v805
        %1438 = vmatmul.mubr.bf16.gmra.mxu0 %v804
        %v1439 = vpop.f32.mrf.mxu0
        %v1440 = vadd.f32 %v1279, %v1439
        %v1441 = vpop.f32.mrf.mxu0
        %v1442 = vpop.f32.mrf.mxu0
        %v1443 = vadd.f32 %v1282, %v1442
        %v1444 = vpop.f32.mrf.mxu0
        %1445 = vmatprep.mubr.bf16.mxu0 %v810
        %1446 = vmatmul.mubr.bf16.gmra.mxu0 %v809
        %v1447 = vpop.f32.mrf.mxu0
        %v1448 = vadd.f32 %v1287, %v1447
        %v1449 = vpop.f32.mrf.mxu0
        %v1450 = vpop.f32.mrf.mxu0
        %v1451 = vadd.f32 %v1290, %v1450
        %v1452 = vpop.f32.mrf.mxu0
        %1453 = vdwg.mxu0
        %1454 = vmatprep.subr.bf16.mxu0 0
        %1455 = vmatpush1.bf16.msra.mxu0 %v1091
        %1456 = vmatprep.subr.bf16.mxu0 0
        %1457 = vmatpush1.bf16.msra.mxu0 %v1090
        %1458 = vmatprep.subr.bf16.mxu0 0
        %1459 = vmatpush1.bf16.msra.mxu0 %v1089
        %1460 = vmatprep.subr.bf16.mxu0 0
        %1461 = vmatpush1.bf16.msra.mxu0 %v1088
        %1462 = vmatprep.subr.bf16.mxu0 0
        %1463 = vmatpush1.bf16.msra.mxu0 %v1087
        %1464 = vmatprep.subr.bf16.mxu0 0
        %1465 = vmatpush1.bf16.msra.mxu0 %v1086
        %1466 = vmatprep.subr.bf16.mxu0 0
        %1467 = vmatpush1.bf16.msra.mxu0 %v1085
        %1468 = vmatprep.subr.bf16.mxu0 0
        %1469 = vmatpush1.bf16.msra.mxu0 %v1084
        %1470 = vmatprep.subr.bf16.mxu0 0
        %1471 = vmatpush2.bf16.msra.mxu0 0
        %1472 = vmatprep.subr.bf16.mxu0 0
        %1473 = vmatpush2.bf16.msra.mxu0 0
        %1474 = vmatprep.subr.bf16.mxu0 0
        %1475 = vmatpush2.bf16.msra.mxu0 0
        %1476 = vmatprep.subr.bf16.mxu0 0
        %1477 = vmatpush2.bf16.msra.mxu0 0
        %1478 = vmatprep.subr.bf16.mxu0 0
        %1479 = vmatpush2.bf16.msra.mxu0 0
        %1480 = vmatprep.subr.bf16.mxu0 0
        %1481 = vmatpush2.bf16.msra.mxu0 0
        %1482 = vmatprep.subr.bf16.mxu0 0
        %1483 = vmatpush2.bf16.msra.mxu0 0
        %1484 = vmatprep.subr.bf16.mxu0 0
        %1485 = vmatpush2.bf16.msra.mxu0 0
        %1486 = vmatprep.mubr.bf16.mxu0 0
        %1487 = vmatmul.mubr.bf16.gmra.mxu0 %v736
        %v1488 = vpop.f32.mrf.mxu0
        %v1489 = vadd.f32 %v1328, %v1488
        %v1490 = vpop.f32.mrf.mxu0
        %v1491 = vpop.f32.mrf.mxu0
        %v1492 = vadd.f32 %v1331, %v1491
        %v1493 = vpop.f32.mrf.mxu0
        %1494 = vmatprep.mubr.bf16.mxu0 0
        %1495 = vmatmul.mubr.bf16.gmra.mxu0 %v741
        %v1496 = vpop.f32.mrf.mxu0
        %v1497 = vadd.f32 %v1336, %v1496
        %v1498 = vpop.f32.mrf.mxu0
        %v1499 = vpop.f32.mrf.mxu0
        %v1500 = vadd.f32 %v1339, %v1499
        %v1501 = vpop.f32.mrf.mxu0
        %1502 = vmatprep.mubr.bf16.mxu0 0
        %1503 = vmatmul.mubr.bf16.gmra.mxu0 %v746
        %v1504 = vpop.f32.mrf.mxu0
        %v1505 = vadd.f32 %v1344, %v1504
        %v1506 = vpop.f32.mrf.mxu0
        %v1507 = vpop.f32.mrf.mxu0
        %v1508 = vadd.f32 %v1347, %v1507
        %v1509 = vpop.f32.mrf.mxu0
        %1510 = vmatprep.mubr.bf16.mxu0 0
        %1511 = vmatmul.mubr.bf16.gmra.mxu0 %v751
        %v1512 = vpop.f32.mrf.mxu0
        %v1513 = vadd.f32 %v1352, %v1512
        %v1514 = vpop.f32.mrf.mxu0
        %v1515 = vpop.f32.mrf.mxu0
        %v1516 = vadd.f32 %v1355, %v1515
        %v1517 = vpop.f32.mrf.mxu0
        %1518 = vmatprep.mubr.bf16.mxu0 0
        %1519 = vmatmul.mubr.bf16.gmra.mxu0 %v756
        %v1520 = vpop.f32.mrf.mxu0
        %v1521 = vadd.f32 %v1360, %v1520
        %v1522 = vpop.f32.mrf.mxu0
        %v1523 = vpop.f32.mrf.mxu0
        %v1524 = vadd.f32 %v1363, %v1523
        %v1525 = vpop.f32.mrf.mxu0
        %1526 = vmatprep.mubr.bf16.mxu0 0
        %1527 = vmatmul.mubr.bf16.gmra.mxu0 %v761
        %v1528 = vpop.f32.mrf.mxu0
        %v1529 = vadd.f32 %v1368, %v1528
        %v1530 = vpop.f32.mrf.mxu0
        %v1531 = vpop.f32.mrf.mxu0
        %v1532 = vadd.f32 %v1371, %v1531
        %v1533 = vpop.f32.mrf.mxu0
        %1534 = vmatprep.mubr.bf16.mxu0 0
        %1535 = vmatmul.mubr.bf16.gmra.mxu0 %v766
        %v1536 = vpop.f32.mrf.mxu0
        %v1537 = vadd.f32 %v1376, %v1536
        %v1538 = vpop.f32.mrf.mxu0
        %v1539 = vpop.f32.mrf.mxu0
        %v1540 = vadd.f32 %v1379, %v1539
        %v1541 = vpop.f32.mrf.mxu0
        %1542 = vmatprep.mubr.bf16.mxu0 0
        %1543 = vmatmul.mubr.bf16.gmra.mxu0 %v771
        %v1544 = vpop.f32.mrf.mxu0
        %v1545 = vadd.f32 %v1384, %v1544
        %v1546 = vpop.f32.mrf.mxu0
        %v1547 = vpop.f32.mrf.mxu0
        %v1548 = vadd.f32 %v1387, %v1547
        %v1549 = vpop.f32.mrf.mxu0
        %1550 = vmatprep.mubr.bf16.mxu0 0
        %1551 = vmatmul.mubr.bf16.gmra.mxu0 %v776
        %v1552 = vpop.f32.mrf.mxu0
        %v1553 = vadd.f32 %v1392, %v1552
        %v1554 = vpop.f32.mrf.mxu0
        %v1555 = vpop.f32.mrf.mxu0
        %v1556 = vadd.f32 %v1395, %v1555
        %v1557 = vpop.f32.mrf.mxu0
        %1558 = vmatprep.mubr.bf16.mxu0 0
        %1559 = vmatmul.mubr.bf16.gmra.mxu0 %v781
        %v1560 = vpop.f32.mrf.mxu0
        %v1561 = vadd.f32 %v1400, %v1560
        %v1562 = vpop.f32.mrf.mxu0
        %v1563 = vpop.f32.mrf.mxu0
        %v1564 = vadd.f32 %v1403, %v1563
        %v1565 = vpop.f32.mrf.mxu0
        %1566 = vmatprep.mubr.bf16.mxu0 0
        %1567 = vmatmul.mubr.bf16.gmra.mxu0 %v786
        %v1568 = vpop.f32.mrf.mxu0
        %v1569 = vadd.f32 %v1408, %v1568
        %v1570 = vpop.f32.mrf.mxu0
        %v1571 = vpop.f32.mrf.mxu0
        %v1572 = vadd.f32 %v1411, %v1571
        %v1573 = vpop.f32.mrf.mxu0
        %1574 = vmatprep.mubr.bf16.mxu0 0
        %1575 = vmatmul.mubr.bf16.gmra.mxu0 %v791
        %v1576 = vpop.f32.mrf.mxu0
        %v1577 = vadd.f32 %v1416, %v1576
        %v1578 = vpop.f32.mrf.mxu0
        %v1579 = vpop.f32.mrf.mxu0
        %v1580 = vadd.f32 %v1419, %v1579
        %v1581 = vpop.f32.mrf.mxu0
        %1582 = vmatprep.mubr.bf16.mxu0 0
        %1583 = vmatmul.mubr.bf16.gmra.mxu0 %v796
        %v1584 = vpop.f32.mrf.mxu0
        %v1585 = vadd.f32 %v1424, %v1584
        %v1586 = vpop.f32.mrf.mxu0
        %v1587 = vpop.f32.mrf.mxu0
        %v1588 = vadd.f32 %v1427, %v1587
        %v1589 = vpop.f32.mrf.mxu0
        %1590 = vmatprep.mubr.bf16.mxu0 0
        %1591 = vmatmul.mubr.bf16.gmra.mxu0 %v801
        %v1592 = vpop.f32.mrf.mxu0
        %v1593 = vadd.f32 %v1432, %v1592
        %v1594 = vpop.f32.mrf.mxu0
        %v1595 = vpop.f32.mrf.mxu0
        %v1596 = vadd.f32 %v1435, %v1595
        %v1597 = vpop.f32.mrf.mxu0
        %1598 = vmatprep.mubr.bf16.mxu0 0
        %1599 = vmatmul.mubr.bf16.gmra.mxu0 %v806
        %v1600 = vpop.f32.mrf.mxu0
        %v1601 = vadd.f32 %v1440, %v1600
        %v1602 = vpop.f32.mrf.mxu0
        %v1603 = vpop.f32.mrf.mxu0
        %v1604 = vadd.f32 %v1443, %v1603
        %v1605 = vpop.f32.mrf.mxu0
        %1606 = vmatprep.mubr.bf16.mxu0 0
        %1607 = vmatmul.mubr.bf16.gmra.mxu0 %v811
        %v1608 = vpop.f32.mrf.mxu0
        %v1609 = vadd.f32 %v1448, %v1608
        %v1610 = vpop.f32.mrf.mxu0
        %v1611 = vpop.f32.mrf.mxu0
        %v1612 = vadd.f32 %v1451, %v1611
        %v1613 = vpop.f32.mrf.mxu0
        %1614 = vdwg.mxu0
        %1615 = vxpose.xlu0.b32.start [1/16] %v1489, 128
        %1616 = vxpose.xlu0.b32.cont [2/16] %v1492, 128
        %1617 = vxpose.xlu0.b32.cont [3/16] %v1497, 128
        %1618 = vxpose.xlu0.b32.cont [4/16] %v1500, 128
        %1619 = vxpose.xlu0.b32.cont [5/16] %v1505, 128
        %1620 = vxpose.xlu0.b32.cont [6/16] %v1508, 128
        %1621 = vxpose.xlu0.b32.cont [7/16] %v1513, 128
        %1622 = vxpose.xlu0.b32.cont [8/16] %v1516, 128
        %1623 = vxpose.xlu0.b32.cont [9/16] %v1521, 128
        %1624 = vxpose.xlu0.b32.cont [10/16] %v1524, 128
        %1625 = vxpose.xlu0.b32.cont [11/16] %v1529, 128
        %1626 = vxpose.xlu0.b32.cont [12/16] %v1532, 128
        %1627 = vxpose.xlu0.b32.cont [13/16] %v1537, 128
        %1628 = vxpose.xlu0.b32.cont [14/16] %v1540, 128
        %1629 = vxpose.xlu0.b32.cont [15/16] %v1545, 128
        %1630 = vxpose.xlu0.b32.end [16/16] %v1548, 128
        %v1631 = vpop.trf.xlu0
        %v1632 = vpop.trf.xlu0
        %v1633 = vpop.trf.xlu0
        %v1634 = vpop.trf.xlu0
        %v1635 = vpop.trf.xlu0
        %v1636 = vpop.trf.xlu0
        %v1637 = vpop.trf.xlu0
        %v1638 = vpop.trf.xlu0
        %v1639 = vpop.trf.xlu0
        %v1640 = vpop.trf.xlu0
        %v1641 = vpop.trf.xlu0
        %v1642 = vpop.trf.xlu0
        %v1643 = vpop.trf.xlu0
        %v1644 = vpop.trf.xlu0
        %v1645 = vpop.trf.xlu0
        %v1646 = vpop.trf.xlu0
        %1647 = vxpose.xlu0.b32.start [1/16] %v1553, 128
        %1648 = vxpose.xlu0.b32.cont [2/16] %v1556, 128
        %1649 = vxpose.xlu0.b32.cont [3/16] %v1561, 128
        %1650 = vxpose.xlu0.b32.cont [4/16] %v1564, 128
        %1651 = vxpose.xlu0.b32.cont [5/16] %v1569, 128
        %1652 = vxpose.xlu0.b32.cont [6/16] %v1572, 128
        %1653 = vxpose.xlu0.b32.cont [7/16] %v1577, 128
        %1654 = vxpose.xlu0.b32.cont [8/16] %v1580, 128
        %1655 = vxpose.xlu0.b32.cont [9/16] %v1585, 128
        %1656 = vxpose.xlu0.b32.cont [10/16] %v1588, 128
        %1657 = vxpose.xlu0.b32.cont [11/16] %v1593, 128
        %1658 = vxpose.xlu0.b32.cont [12/16] %v1596, 128
        %1659 = vxpose.xlu0.b32.cont [13/16] %v1601, 128
        %1660 = vxpose.xlu0.b32.cont [14/16] %v1604, 128
        %1661 = vxpose.xlu0.b32.cont [15/16] %v1609, 128
        %1662 = vxpose.xlu0.b32.end [16/16] %v1612, 128
        %v1663 = vpop.trf.xlu0
        %v1664 = vpop.trf.xlu0
        %v1665 = vpop.trf.xlu0
        %v1666 = vpop.trf.xlu0
        %v1667 = vpop.trf.xlu0
        %v1668 = vpop.trf.xlu0
        %v1669 = vpop.trf.xlu0
        %v1670 = vpop.trf.xlu0
        %v1671 = vpop.trf.xlu0
        %v1672 = vpop.trf.xlu0
        %v1673 = vpop.trf.xlu0
        %v1674 = vpop.trf.xlu0
        %v1675 = vpop.trf.xlu0
        %v1676 = vpop.trf.xlu0
        %v1677 = vpop.trf.xlu0
        %v1678 = vpop.trf.xlu0
        %v1679 = vsub.f32 0.0, %v1631
        %v1680 = vsub.f32 0.0, %v1663
        %v1681 = vsub.f32 0.0, %v1632
        %v1682 = vsub.f32 0.0, %v1664
        %v1683 = vsub.f32 0.0, %v1633
        %v1684 = vsub.f32 0.0, %v1665
        %v1685 = vsub.f32 0.0, %v1634
        %v1686 = vsub.f32 0.0, %v1666
        %v1687 = vmul.f32 %v1679, 1.442695
        %v1688 = vpow.pop %v1687
        %v1689 = vmul.f32 %v1680, 1.442695
        %v1690 = vpow.pop %v1689
        %v1691 = vmul.f32 %v1681, 1.442695
        %v1692 = vpow.pop %v1691
        %v1693 = vmul.f32 %v1682, 1.442695
        %v1694 = vpow.pop %v1693
        %v1695 = vmul.f32 %v1683, 1.442695
        %v1696 = vpow.pop %v1695
        %v1697 = vmul.f32 %v1684, 1.442695
        %v1698 = vpow.pop %v1697
        %v1699 = vmul.f32 %v1685, 1.442695
        %v1700 = vpow.pop %v1699
        %v1701 = vmul.f32 %v1686, 1.442695
        %v1702 = vpow.pop %v1701
        %v1703 = vadd.f32 %v1688, 1.0
        %v1704 = vadd.f32 %v1690, 1.0
        %v1705 = vadd.f32 %v1692, 1.0
        %v1706 = vadd.f32 %v1694, 1.0
        %v1707 = vadd.f32 %v1696, 1.0
        %v1708 = vadd.f32 %v1698, 1.0
        %v1709 = vadd.f32 %v1700, 1.0
        %v1710 = vadd.f32 %v1702, 1.0
        %v1711 = vrcp.pop %v1703
        %v1712 = vmul.f32 1.0, %v1711
        %v1713 = vrcp.pop %v1704
        %v1714 = vmul.f32 1.0, %v1713
        %v1715 = vrcp.pop %v1705
        %v1716 = vmul.f32 1.0, %v1715
        %v1717 = vrcp.pop %v1706
        %v1718 = vmul.f32 1.0, %v1717
        %v1719 = vrcp.pop %v1707
        %v1720 = vmul.f32 1.0, %v1719
        %v1721 = vrcp.pop %v1708
        %v1722 = vmul.f32 1.0, %v1721
        %v1723 = vrcp.pop %v1709
        %v1724 = vmul.f32 1.0, %v1723
        %v1725 = vrcp.pop %v1710
        %v1726 = vmul.f32 1.0, %v1725
        %v1727 = vsub.f32 0.0, %v1635
        %v1728 = vsub.f32 0.0, %v1667
        %v1729 = vsub.f32 0.0, %v1636
        %v1730 = vsub.f32 0.0, %v1668
        %v1731 = vsub.f32 0.0, %v1637
        %v1732 = vsub.f32 0.0, %v1669
        %v1733 = vsub.f32 0.0, %v1638
        %v1734 = vsub.f32 0.0, %v1670
        %v1735 = vmul.f32 %v1727, 1.442695
        %v1736 = vpow.pop %v1735
        %v1737 = vmul.f32 %v1728, 1.442695
        %v1738 = vpow.pop %v1737
        %v1739 = vmul.f32 %v1729, 1.442695
        %v1740 = vpow.pop %v1739
        %v1741 = vmul.f32 %v1730, 1.442695
        %v1742 = vpow.pop %v1741
        %v1743 = vmul.f32 %v1731, 1.442695
        %v1744 = vpow.pop %v1743
        %v1745 = vmul.f32 %v1732, 1.442695
        %v1746 = vpow.pop %v1745
        %v1747 = vmul.f32 %v1733, 1.442695
        %v1748 = vpow.pop %v1747
        %v1749 = vmul.f32 %v1734, 1.442695
        %v1750 = vpow.pop %v1749
        %v1751 = vadd.f32 %v1736, 1.0
        %v1752 = vadd.f32 %v1738, 1.0
        %v1753 = vadd.f32 %v1740, 1.0
        %v1754 = vadd.f32 %v1742, 1.0
        %v1755 = vadd.f32 %v1744, 1.0
        %v1756 = vadd.f32 %v1746, 1.0
        %v1757 = vadd.f32 %v1748, 1.0
        %v1758 = vadd.f32 %v1750, 1.0
        %v1759 = vrcp.pop %v1751
        %v1760 = vmul.f32 1.0, %v1759
        %v1761 = vrcp.pop %v1752
        %v1762 = vmul.f32 1.0, %v1761
        %v1763 = vrcp.pop %v1753
        %v1764 = vmul.f32 1.0, %v1763
        %v1765 = vrcp.pop %v1754
        %v1766 = vmul.f32 1.0, %v1765
        %v1767 = vrcp.pop %v1755
        %v1768 = vmul.f32 1.0, %v1767
        %v1769 = vrcp.pop %v1756
        %v1770 = vmul.f32 1.0, %v1769
        %v1771 = vrcp.pop %v1757
        %v1772 = vmul.f32 1.0, %v1771
        %v1773 = vrcp.pop %v1758
        %v1774 = vmul.f32 1.0, %v1773
        %v1775 = vsub.f32 0.0, %v1639
        %v1776 = vsub.f32 0.0, %v1671
        %v1777 = vsub.f32 0.0, %v1640
        %v1778 = vsub.f32 0.0, %v1672
        %v1779 = vsub.f32 0.0, %v1641
        %v1780 = vsub.f32 0.0, %v1673
        %v1781 = vsub.f32 0.0, %v1642
        %v1782 = vsub.f32 0.0, %v1674
        %v1783 = vmul.f32 %v1775, 1.442695
        %v1784 = vpow.pop %v1783
        %v1785 = vmul.f32 %v1776, 1.442695
        %v1786 = vpow.pop %v1785
        %v1787 = vmul.f32 %v1777, 1.442695
        %v1788 = vpow.pop %v1787
        %v1789 = vmul.f32 %v1778, 1.442695
        %v1790 = vpow.pop %v1789
        %v1791 = vmul.f32 %v1779, 1.442695
        %v1792 = vpow.pop %v1791
        %v1793 = vmul.f32 %v1780, 1.442695
        %v1794 = vpow.pop %v1793
        %v1795 = vmul.f32 %v1781, 1.442695
        %v1796 = vpow.pop %v1795
        %v1797 = vmul.f32 %v1782, 1.442695
        %v1798 = vpow.pop %v1797
        %v1799 = vadd.f32 %v1784, 1.0
        %v1800 = vadd.f32 %v1786, 1.0
        %v1801 = vadd.f32 %v1788, 1.0
        %v1802 = vadd.f32 %v1790, 1.0
        %v1803 = vadd.f32 %v1792, 1.0
        %v1804 = vadd.f32 %v1794, 1.0
        %v1805 = vadd.f32 %v1796, 1.0
        %v1806 = vadd.f32 %v1798, 1.0
        %v1807 = vrcp.pop %v1799
        %v1808 = vmul.f32 1.0, %v1807
        %v1809 = vrcp.pop %v1800
        %v1810 = vmul.f32 1.0, %v1809
        %v1811 = vrcp.pop %v1801
        %v1812 = vmul.f32 1.0, %v1811
        %v1813 = vrcp.pop %v1802
        %v1814 = vmul.f32 1.0, %v1813
        %v1815 = vrcp.pop %v1803
        %v1816 = vmul.f32 1.0, %v1815
        %v1817 = vrcp.pop %v1804
        %v1818 = vmul.f32 1.0, %v1817
        %v1819 = vrcp.pop %v1805
        %v1820 = vmul.f32 1.0, %v1819
        %v1821 = vrcp.pop %v1806
        %v1822 = vmul.f32 1.0, %v1821
        %v1823 = vtanh.pop %v1643
        %v1824 = vtanh.pop %v1675
        %v1825 = vtanh.pop %v1644
        %v1826 = vtanh.pop %v1676
        %v1827 = vtanh.pop %v1645
        %v1828 = vtanh.pop %v1677
        %v1829 = vtanh.pop %v1646
        %v1830 = vtanh.pop %v1678
        %v1831 = vld [vmem:[%s247] sm:$0xff]
        %v1832 = vld [vmem:[%s247 + $0x8] sm:$0xff]
        %v1833 = vld [vmem:[%s247 + $0x10] sm:$0xff]
        %v1834 = vld [vmem:[%s247 + $0x18] sm:$0xff]
        %v1835 = vld [vmem:[%s247 + $0x20] sm:$0xff]
        %v1836 = vld [vmem:[%s247 + $0x28] sm:$0xff]
        %v1837 = vld [vmem:[%s247 + $0x30] sm:$0xff]
        %v1838 = vld [vmem:[%s247 + $0x38] sm:$0xff]
        %v1839 = vmul.f32 %v1760, %v1831
        %v1840 = vmul.f32 %v1762, %v1832
        %v1841 = vmul.f32 %v1764, %v1833
        %v1842 = vmul.f32 %v1766, %v1834
        %v1843 = vmul.f32 %v1768, %v1835
        %v1844 = vmul.f32 %v1770, %v1836
        %v1845 = vmul.f32 %v1772, %v1837
        %v1846 = vmul.f32 %v1774, %v1838
        %v1847 = vmul.f32 %v1712, %v1823
        %v1848 = vmul.f32 %v1714, %v1824
        %v1849 = vmul.f32 %v1716, %v1825
        %v1850 = vmul.f32 %v1718, %v1826
        %v1851 = vmul.f32 %v1720, %v1827
        %v1852 = vmul.f32 %v1722, %v1828
        %v1853 = vmul.f32 %v1724, %v1829
        %v1854 = vmul.f32 %v1726, %v1830
        %v1855 = vadd.f32 %v1839, %v1847
        %v1856 = vadd.f32 %v1840, %v1848
        %v1857 = vadd.f32 %v1841, %v1849
        %v1858 = vadd.f32 %v1842, %v1850
        %v1859 = vadd.f32 %v1843, %v1851
        %v1860 = vadd.f32 %v1844, %v1852
        %v1861 = vadd.f32 %v1845, %v1853
        %v1862 = vadd.f32 %v1846, %v1854
        %v1863 = vtanh.pop %v1855
        %v1864 = vtanh.pop %v1856
        %v1865 = vtanh.pop %v1857
        %v1866 = vtanh.pop %v1858
        %v1867 = vtanh.pop %v1859
        %v1868 = vtanh.pop %v1860
        %v1869 = vtanh.pop %v1861
        %v1870 = vtanh.pop %v1862
        %v1871 = vmul.f32 %v1808, %v1863
        %v1872 = vmul.f32 %v1810, %v1864
        %v1873 = vmul.f32 %v1812, %v1865
        %v1874 = vmul.f32 %v1814, %v1866
        %v1875 = vmul.f32 %v1816, %v1867
        %v1876 = vmul.f32 %v1818, %v1868
        %v1877 = vmul.f32 %v1820, %v1869
        %v1878 = vmul.f32 %v1822, %v1870
        %1879 = vst [vmem:[%s274] sm:$0xff] %v1871
        %1880 = vst [vmem:[%s274 + $0x8] sm:$0xff] %v1872
        %1881 = vst [vmem:[%s274 + $0x10] sm:$0xff] %v1873
        %1882 = vst [vmem:[%s274 + $0x18] sm:$0xff] %v1874
        %1883 = vst [vmem:[%s274 + $0x20] sm:$0xff] %v1875
        %1884 = vst [vmem:[%s274 + $0x28] sm:$0xff] %v1876
        %1885 = vst [vmem:[%s274 + $0x30] sm:$0xff] %v1877
        %1886 = vst [vmem:[%s274 + $0x38] sm:$0xff] %v1878
        %1887 = vst [vmem:[%s281] sm:$0xff] %v1855
        %1888 = vst [vmem:[%s281 + $0x8] sm:$0xff] %v1856
        %1889 = vst [vmem:[%s281 + $0x10] sm:$0xff] %v1857
        %1890 = vst [vmem:[%s281 + $0x18] sm:$0xff] %v1858
        %1891 = vst [vmem:[%s281 + $0x20] sm:$0xff] %v1859
        %1892 = vst [vmem:[%s281 + $0x28] sm:$0xff] %v1860
        %1893 = vst [vmem:[%s281 + $0x30] sm:$0xff] %v1861
        %1894 = vst [vmem:[%s281 + $0x38] sm:$0xff] %v1862
        %s1895 = sand.u32 %s122, 1
        %s1896 = sand.u32 %s122, 1
        %s1897 = smul.addr %s1896, 64
        %s1898 = scalar_lea.vmem [#allocation3], %s1897
        %s1899 = sand.u32 %s148, 1
        %s1900 = scalar_lea.sflag [#allocation5], %s1899
        %s1901 = sand.u32 %s148, 1
        %s1902 = smul.addr %s1901, 64
        %s1903 = scalar_lea.vmem [#allocation4], %s1902
        // Predicated region
        $region60: #{convlstm_forward.3} parent=54 // pred_check
          %p1904 = pneg %p132
        $region61: #{convlstm_forward.3} parent=54 // pred_check_branch
          %1906 = sbr.rel (%p1904) target = $region63
        $region62: #{convlstm_forward.3} parent=54 // pred_region
          %s1907 = smul.u32 2, %s20
          %s1908 = smul.addr %s1907, 8
          %s1909 = scalar_lea.vmem %s4, %s1908
          // Predicated region
          $region64: #{convlstm_forward.3} parent=62 // pred_check
            _
          $region65: #{convlstm_forward.3} parent=62 // pred_check_branch
            %1911 = sbr.rel (0) target = $region67
          $region66: #{convlstm_forward.3} parent=62 // pred_region
            // Predicated region
            $region68: #{convlstm_forward.3} parent=66 // pred_check
              _
            $region69: #{convlstm_forward.3} parent=66 // pred_check_branch
              %1913 = sbr.rel (0) target = $region71
            $region70: #{convlstm_forward.3} parent=66 // pred_region
              loop: start=0, step=1, limit=1
              $region72: #{convlstm_forward.3} parent=70 // loop_pre_header
                _
              $region73: #{convlstm_forward.3} parent=70 // loop_header
                %s1915 = sphi 0, %s1919
                %p1916 = scmp.ge.s32.totalorder %s1915, 1
                %s1920 = sphi %s1898, %s1898
                %s1921 = sphi %s1909, %s1909
              $region74: #{convlstm_forward.3} parent=70 // loop_header_branch
                %1918 = sbr.rel (%p1916) target = $region78
              $region75: #{convlstm_forward.3} parent=70 // loop_body
                %v1922 = vld [vmem:[%s1920] sm:$0xff]
                %1923 = vst [vmem:[%s1921] sm:$0xff] %v1922
                %v1924 = vld [vmem:[%s1920 + $0x8] sm:$0xff]
                %1925 = vst [vmem:[%s1921 + $0x8] sm:$0xff] %v1924
                %v1926 = vld [vmem:[%s1920 + $0x10] sm:$0xff]
                %1927 = vst [vmem:[%s1921 + $0x20] sm:$0xff] %v1926
                %v1928 = vld [vmem:[%s1920 + $0x18] sm:$0xff]
                %1929 = vst [vmem:[%s1921 + $0x28] sm:$0xff] %v1928
                %v1930 = vld [vmem:[%s1920 + $0x20] sm:$0xff]
                %1931 = vst [vmem:[%s1921 + $0x40] sm:$0xff] %v1930
                %v1932 = vld [vmem:[%s1920 + $0x28] sm:$0xff]
                %1933 = vst [vmem:[%s1921 + $0x48] sm:$0xff] %v1932
                %v1934 = vld [vmem:[%s1920 + $0x30] sm:$0xff]
                %1935 = vst [vmem:[%s1921 + $0x60] sm:$0xff] %v1934
                %v1936 = vld [vmem:[%s1920 + $0x38] sm:$0xff]
                %1937 = vst [vmem:[%s1921 + $0x68] sm:$0xff] %v1936
              $region76: #{convlstm_forward.3} parent=70 // loop_footer
                %s1919 = sadd.s32 1, %s1915
              $region77: #{convlstm_forward.3} parent=70 // loop_footer_branch
                %1914 = sbr.rel target = $region73
              $region78: #{convlstm_forward.3} parent=70 // loop_exit
                _
            $region71: #{convlstm_forward.3} parent=66 // pred_fallthru
              _
            // Predicated region
            $region79: #{convlstm_forward.3} parent=66 // pred_check
              _
            $region80: #{convlstm_forward.3} parent=66 // pred_check_branch
              %1939 = sbr.rel target = $region82
            $region81: #{convlstm_forward.3} parent=66 // pred_region
              _
            $region82: #{convlstm_forward.3} parent=66 // pred_fallthru
              _
          $region67: #{convlstm_forward.3} parent=62 // pred_fallthru
            _
          %1940 = vnop
        $region63: #{convlstm_forward.3} parent=54 // pred_fallthru
          _
        // Predicated region
        $region83: #{convlstm_forward.3} parent=54 // pred_check
          %p1941 = pneg %p158
        $region84: #{convlstm_forward.3} parent=54 // pred_check_branch
          %1943 = sbr.rel (%p1941) target = $region86
        $region85: #{convlstm_forward.3} parent=54 // pred_region
          %s1944 = smul.u32 2, %s20
          %s1946 = ssub.s32 1024, 1024
          %1947 = vsyncadd %s1900, %s1946
          %s1948 = smul.addr %s1944, 128
          %s1949 = scalar_lea.hbm %s5, %s1948
          %s1950 = sshll.u32 %s1903, 4
          %s1951 = int_to_ptr.vmem [resolvable:$true] %s1950
          %1956 = dma.vmem_to_hbm [thread:$0]  %s1951, 1024, %s1949, %s1900, 256, 512, 16
        $region86: #{convlstm_forward.3} parent=54 // pred_fallthru
          _
      $region55: #{convlstm_forward.3} parent=5 // pred_fallthru
        _
      %p1957 = scmp.le.s32.totalorder 2, %s15
      // Predicated region
      $region87: #{convlstm_forward.3} parent=5 // pred_check
        %p1958 = pneg %p1957
      $region88: #{convlstm_forward.3} parent=5 // pred_check_branch
        %1960 = sbr.rel (%p1958) target = $region90
      $region89: #{convlstm_forward.3} parent=5 // pred_region
        %s1961 = ssub.s32 %s15, 2
        // Predicated region
        $region91: #{convlstm_forward.3} parent=89 // pred_check
          %p1962 = pneg %p138
        $region92: #{convlstm_forward.3} parent=89 // pred_check_branch
          %1964 = sbr.rel (%p1962) target = $region94
        $region93: #{convlstm_forward.3} parent=89 // pred_region
          %s1965 = sand.u32 %s123, 1
          %s1966 = sand.u32 %s123, 1
          %s1967 = smul.addr %s1966, 64
          %s1968 = scalar_lea.vmem [#allocation3], %s1967
        $region94: #{convlstm_forward.3} parent=89 // pred_fallthru
          _
        // Predicated region
        $region95: #{convlstm_forward.3} parent=89 // pred_check
          %p1969 = pneg %p164
        $region96: #{convlstm_forward.3} parent=89 // pred_check_branch
          %1971 = sbr.rel (%p1969) target = $region98
        $region97: #{convlstm_forward.3} parent=89 // pred_region
          %s1972 = sand.u32 %s149, 1
          %s1973 = scalar_lea.sflag [#allocation5], %s1972
          %s1974 = sand.u32 %s149, 1
          %s1975 = smul.addr %s1974, 64
          %s1976 = scalar_lea.vmem [#allocation4], %s1975
          %1977 = dma.done %s1973, 1024
        $region98: #{convlstm_forward.3} parent=89 // pred_fallthru
          _
      $region90: #{convlstm_forward.3} parent=5 // pred_fallthru
        _
    $region6: #{convlstm_forward.3} parent=1 // loop_footer
      %s19 = sadd.s32 1, %s15
    $region7: #{convlstm_forward.3} parent=1 // loop_footer_branch
      %14 = sbr.rel target = $region3
    $region8: #{convlstm_forward.3} parent=1 // loop_exit
      _
    %1978 = vsyncpa [#allocation5], 1
    %s1979 = scalar_lea.sflag [#allocation5], 1
    %1980 = vsyncpa %s1979, 1

</llo_original>
